<compile_context>
chip_gen: v6e
topology: v6e:2x2x1
jax: 0.10.0
libtpu: 0.0.40
codegen_flags: <defaults>
</compile_context>

<pallas_src>
import jax
import jax.numpy as jnp
from jax.experimental import pallas as pl
from jax.experimental.pallas import tpu as pltpu


# ---------------------------------------------------------------------------
# In-kernel helpers (pure value-domain ops, all VMEM-resident)
# ---------------------------------------------------------------------------
def _zero_pad_hw1(x):
    """(H, W, C) -> (H+2, W+2, C) with a zero 1-pixel halo, built in VMEM."""
    H, W, C = x.shape
    zrow = jnp.zeros((1, W, C), x.dtype)
    x = jnp.concatenate([zrow, x, zrow], axis=0)      # pad H (untiled leading dim)
    zcol = jnp.zeros((H + 2, 1, C), x.dtype)
    return jnp.concatenate([zcol, x, zcol], axis=1)   # pad W (sublane dim)


def _conv3x3_im2col(x_hwc, w_kc, b_1c):
    """3x3 same-conv as one im2col MXU matmul.

    x_hwc: (H, W, C) f32, w_kc: (9*C, C) bf16, b_1c: (1, C) f32.
    Returns (H*W, C) f32.
    """
    H, W, C = x_hwc.shape
    xp = _zero_pad_hw1(x_hwc)
    # im2col: column order is (tap = ky*3+kx) major, input channel minor —
    # matches the (3,3,Cin,Cout) -> (9*Cin, Cout) weight reshape in the wrapper.
    cols = jnp.concatenate(
        [xp[ky:ky + H, kx:kx + W, :].reshape(H * W, C)
         for ky in range(3) for kx in range(3)],
        axis=-1)                                       # (H*W, 9C)
    y = jnp.dot(cols.astype(jnp.bfloat16), w_kc,
                preferred_element_type=jnp.float32)    # bf16 MXU, f32 accumulate
    return y + b_1c


def _prelu(y, a_1c):
    # PyTorch PReLU: y if y >= 0 else a*y (per-channel slope), f32 on the VPU.
    return jnp.where(y >= 0.0, y, a_1c * y)


# ---------------------------------------------------------------------------
# Fused kernel: conv1+PReLU1 -> conv2+PReLU2 -> conv3 + residual + PReLU3
# ---------------------------------------------------------------------------
def _resblock_kernel(x_ref, w_ref, b_ref, a_ref, out_ref):
    _, H, W, C = x_ref.shape
    x0 = x_ref[0]                                               # (H, W, C) f32

    y = _prelu(_conv3x3_im2col(x0, w_ref[0], b_ref[0]), a_ref[0])
    y = _prelu(_conv3x3_im2col(y.reshape(H, W, C), w_ref[1], b_ref[1]), a_ref[1])
    y = _conv3x3_im2col(y.reshape(H, W, C), w_ref[2], b_ref[2])
    y = _prelu(y + x0.reshape(H * W, C), a_ref[2])              # residual, PReLU

    out_ref[0] = y.reshape(H, W, C).astype(out_ref.dtype)


def resblock_fused(x_nhwc, w_stack, b_stack, a_stack):
    """x_nhwc (B,H,W,C) f32, w_stack (3,9C,C) bf16, b/a_stack (3,1,C) f32."""
    B, H, W, C = x_nhwc.shape
    return pl.pallas_call(
        _resblock_kernel,
        out_shape=jax.ShapeDtypeStruct((B, H, W, C), x_nhwc.dtype),
        grid_spec=pltpu.PrefetchScalarGridSpec(
            num_scalar_prefetch=0,
            grid=(B,),
            in_specs=[
                pl.BlockSpec((1, H, W, C), lambda i: (i, 0, 0, 0)),
                pl.BlockSpec((3, 9 * C, C), lambda i: (0, 0, 0)),
                pl.BlockSpec((3, 1, C), lambda i: (0, 0, 0)),
                pl.BlockSpec((3, 1, C), lambda i: (0, 0, 0)),
            ],
            out_specs=pl.BlockSpec((1, H, W, C), lambda i: (i, 0, 0, 0)),
        ),
        compiler_params=pltpu.CompilerParams(
            dimension_semantics=("parallel",)),  # v7x: one image per TensorCore
    )(x_nhwc, w_stack, b_stack, a_stack)


# ---------------------------------------------------------------------------
# Params / wrapper / reference
# ---------------------------------------------------------------------------
def init_resblock_params(key, in_channels, side_channels):
    """Deterministic synthetic init mirroring nn.Conv2d / nn.PReLU shapes.

    side_channels is stored by the PyTorch module but unused in this forward.
    """
    del side_channels  # unused in the provided forward()
    C = in_channels
    k = 1.0 / jnp.sqrt(jnp.asarray(C * 9, jnp.float32))  # PyTorch conv default
    keys = jax.random.split(key, 6)
    params = {}
    for n, (kw, kb) in enumerate(zip(keys[0::2], keys[1::2]), start=1):
        params[f"w{n}"] = jax.random.uniform(kw, (3, 3, C, C), jnp.float32, -k, k)
        params[f"b{n}"] = jax.random.uniform(kb, (C,), jnp.float32, -k, k)
        params[f"a{n}"] = jnp.full((C,), 0.25, jnp.float32)  # nn.PReLU default
    return params


@jax.jit
def resblock_forward(x_nchw, params):
    # External interface is NCHW (PyTorch); NHWC inside so channels map to lanes.
    x = jnp.transpose(x_nchw, (0, 2, 3, 1)).astype(jnp.float32)
    C = x.shape[-1]
    # HWIO (3,3,Cin,Cout) -> im2col (9*Cin, Cout); flatten order (ky,kx,ci)
    # matches the im2col column order built inside the kernel.
    w_stack = jnp.stack(
        [params[f"w{n}"].reshape(9 * C, C) for n in (1, 2, 3)]
    ).astype(jnp.bfloat16)                                  # MXU operands in bf16
    b_stack = jnp.stack([params[f"b{n}"].reshape(1, C) for n in (1, 2, 3)])
    a_stack = jnp.stack([params[f"a{n}"].reshape(1, C) for n in (1, 2, 3)])
    out = resblock_fused(x, w_stack, b_stack, a_stack)
    return jnp.transpose(out, (0, 3, 1, 2))


def _reference_forward(x_nchw, params):
    """Pure-JAX reference. Convs use bf16 operands / f32 accumulation to match
    the kernel's MXU precision, so a tight tolerance still applies."""
    def conv(x, w, b):  # x NCHW, w HWIO
        y = jax.lax.conv_general_dilated(
            x.astype(jnp.bfloat16), w.astype(jnp.bfloat16),
            window_strides=(1, 1), padding="SAME",
            dimension_numbers=("NCHW", "HWIO", "NCHW"),
            preferred_element_type=jnp.float32)
        return y + b[None, :, None, None]

    def prelu(y, a):
        return jnp.where(y >= 0, y, a[None, :, None, None] * y)

    x = x_nchw.astype(jnp.float32)
    out = prelu(conv(x, params["w1"], params["b1"]), params["a1"])
    out = prelu(conv(out, params["w2"], params["b2"]), params["a2"])
    out = prelu(x + conv(out, params["w3"], params["b3"]), params["a3"])
    return out


if __name__ == "__main__":
    key = jax.random.PRNGKey(0)
    k_x, k_p = jax.random.split(key)

    B, C, H, W = 2, 32, 16, 16          # in_channels=32, side_channels=8 (unused)
    x = jax.random.normal(k_x, (B, C, H, W), jnp.float32)
    params = init_resblock_params(k_p, in_channels=C, side_channels=8)

    out = jax.block_until_ready(resblock_forward(x, params))
    ref = _reference_forward(x, params)

    assert out.shape == (B, C, H, W)
    max_diff = float(jnp.max(jnp.abs(out - ref)))
    # bf16 MXU operands (f32 accumulation) in both kernel and reference; only
    # accumulation-order differences remain -> 2e-2 tolerance is comfortable.
    assert jnp.allclose(out, ref, atol=2e-2, rtol=2e-2), (
        f"mismatch vs reference, max abs diff {max_diff:.3e}")

    print("KERNEL_OK")
</pallas_src>

<mosaic_0001>
module attributes {stable_mosaic.version = 11 : i64} {
  func.func @_resblock_kernel(%arg0: i32, %arg1: memref<1x16x16x32xf32, #tpu.memory_space<vmem>>, %arg2: memref<3x288x32xbf16, #tpu.memory_space<vmem>>, %arg3: memref<3x1x32xf32, #tpu.memory_space<vmem>>, %arg4: memref<3x1x32xf32, #tpu.memory_space<vmem>>, %arg5: memref<1x16x16x32xf32, #tpu.memory_space<vmem>>) attributes {dimension_semantics = [#tpu.dimension_semantics<parallel>], iteration_bounds = array<i64: 2>, scalar_prefetch = 0 : i64, scratch_operands = 0 : i64, tpu.core_type = #tpu.core_type<tc>, window_params = [{transform_indices = @transform_0, window_bounds = array<i64: 1, 16, 16, 32>}, {pipeline_mode = #tpu.pipeline_mode<synchronous>, transform_indices = @transform_1, window_bounds = array<i64: 3, 288, 32>}, {pipeline_mode = #tpu.pipeline_mode<synchronous>, transform_indices = @transform_2, window_bounds = array<i64: 3, 1, 32>}, {pipeline_mode = #tpu.pipeline_mode<synchronous>, transform_indices = @transform_3, window_bounds = array<i64: 3, 1, 32>}, {transform_indices = @transform_4, window_bounds = array<i64: 1, 16, 16, 32>}]} {
    %c0 = arith.constant 0 : index
    %c0_0 = arith.constant 0 : index
    %c0_1 = arith.constant 0 : index
    %c0_2 = arith.constant 0 : index
    %0 = vector.load %arg1[%c0, %c0_0, %c0_1, %c0_2] : memref<1x16x16x32xf32, #tpu.memory_space<vmem>>, vector<1x16x16x32xf32>
    %1 = vector.shape_cast %0 : vector<1x16x16x32xf32> to vector<16x16x32xf32>
    %c0_3 = arith.constant 0 : index
    %c0_4 = arith.constant 0 : index
    %c0_5 = arith.constant 0 : index
    %2 = vector.load %arg2[%c0_3, %c0_4, %c0_5] : memref<3x288x32xbf16, #tpu.memory_space<vmem>>, vector<1x288x32xbf16>
    %3 = vector.shape_cast %2 : vector<1x288x32xbf16> to vector<288x32xbf16>
    %c0_6 = arith.constant 0 : index
    %c0_7 = arith.constant 0 : index
    %c0_8 = arith.constant 0 : index
    %4 = vector.load %arg3[%c0_6, %c0_7, %c0_8] : memref<3x1x32xf32, #tpu.memory_space<vmem>>, vector<1x1x32xf32>
    %5 = vector.shape_cast %4 : vector<1x1x32xf32> to vector<1x32xf32>
    %cst = arith.constant 0.000000e+00 : f32
    %6 = vector.broadcast %cst : f32 to vector<1x16x32xf32>
    %7 = tpu.concatenate %6, %1, %6 in 0 : vector<1x16x32xf32>, vector<16x16x32xf32>, vector<1x16x32xf32> -> vector<18x16x32xf32>
    %cst_9 = arith.constant 0.000000e+00 : f32
    %8 = vector.broadcast %cst_9 : f32 to vector<18x1x32xf32>
    %9 = tpu.concatenate %8, %7, %8 in 1 : vector<18x1x32xf32>, vector<18x16x32xf32>, vector<18x1x32xf32> -> vector<18x18x32xf32>
    %10 = vector.extract_strided_slice %9 {offsets = [0, 0, 0], sizes = [16, 16, 32], strides = [1, 1, 1]} : vector<18x18x32xf32> to vector<16x16x32xf32>
    %11 = vector.shape_cast %10 : vector<16x16x32xf32> to vector<256x32xf32>
    %12 = vector.extract_strided_slice %9 {offsets = [0, 1, 0], sizes = [16, 16, 32], strides = [1, 1, 1]} : vector<18x18x32xf32> to vector<16x16x32xf32>
    %13 = vector.shape_cast %12 : vector<16x16x32xf32> to vector<256x32xf32>
    %14 = vector.extract_strided_slice %9 {offsets = [0, 2, 0], sizes = [16, 16, 32], strides = [1, 1, 1]} : vector<18x18x32xf32> to vector<16x16x32xf32>
    %15 = vector.shape_cast %14 : vector<16x16x32xf32> to vector<256x32xf32>
    %16 = vector.extract_strided_slice %9 {offsets = [1, 0, 0], sizes = [16, 16, 32], strides = [1, 1, 1]} : vector<18x18x32xf32> to vector<16x16x32xf32>
    %17 = vector.shape_cast %16 : vector<16x16x32xf32> to vector<256x32xf32>
    %18 = vector.extract_strided_slice %9 {offsets = [1, 1, 0], sizes = [16, 16, 32], strides = [1, 1, 1]} : vector<18x18x32xf32> to vector<16x16x32xf32>
    %19 = vector.shape_cast %18 : vector<16x16x32xf32> to vector<256x32xf32>
    %20 = vector.extract_strided_slice %9 {offsets = [1, 2, 0], sizes = [16, 16, 32], strides = [1, 1, 1]} : vector<18x18x32xf32> to vector<16x16x32xf32>
    %21 = vector.shape_cast %20 : vector<16x16x32xf32> to vector<256x32xf32>
    %22 = vector.extract_strided_slice %9 {offsets = [2, 0, 0], sizes = [16, 16, 32], strides = [1, 1, 1]} : vector<18x18x32xf32> to vector<16x16x32xf32>
    %23 = vector.shape_cast %22 : vector<16x16x32xf32> to vector<256x32xf32>
    %24 = vector.extract_strided_slice %9 {offsets = [2, 1, 0], sizes = [16, 16, 32], strides = [1, 1, 1]} : vector<18x18x32xf32> to vector<16x16x32xf32>
    %25 = vector.shape_cast %24 : vector<16x16x32xf32> to vector<256x32xf32>
    %26 = vector.extract_strided_slice %9 {offsets = [2, 2, 0], sizes = [16, 16, 32], strides = [1, 1, 1]} : vector<18x18x32xf32> to vector<16x16x32xf32>
    %27 = vector.shape_cast %26 : vector<16x16x32xf32> to vector<256x32xf32>
    %28 = tpu.concatenate %11, %13, %15, %17, %19, %21, %23, %25, %27 in 1 : vector<256x32xf32>, vector<256x32xf32>, vector<256x32xf32>, vector<256x32xf32>, vector<256x32xf32>, vector<256x32xf32>, vector<256x32xf32>, vector<256x32xf32>, vector<256x32xf32> -> vector<256x288xf32>
    %29 = arith.truncf %28 : vector<256x288xf32> to vector<256x288xbf16>
    %cst_10 = arith.constant dense<0.000000e+00> : vector<256x32xf32>
    %30 = tpu.matmul %29, %3, %cst_10 {dimension_numbers = #tpu.dot_dimension_numbers<[1], [0], [0], [1], [0, 0, 1, 1], [], []>} : vector<256x288xbf16>, vector<288x32xbf16>, vector<256x32xf32> -> vector<256x32xf32>
    %31 = vector.broadcast %5 : vector<1x32xf32> to vector<256x32xf32>
    %32 = arith.addf %30, %31 : vector<256x32xf32>
    %c0_11 = arith.constant 0 : index
    %c0_12 = arith.constant 0 : index
    %c0_13 = arith.constant 0 : index
    %33 = vector.load %arg4[%c0_11, %c0_12, %c0_13] : memref<3x1x32xf32, #tpu.memory_space<vmem>>, vector<1x1x32xf32>
    %34 = vector.shape_cast %33 : vector<1x1x32xf32> to vector<1x32xf32>
    %cst_14 = arith.constant 0.000000e+00 : f32
    %35 = vector.broadcast %cst_14 : f32 to vector<256x32xf32>
    %36 = arith.cmpf oge, %32, %35 : vector<256x32xf32>
    %37 = vector.broadcast %34 : vector<1x32xf32> to vector<256x32xf32>
    %38 = arith.mulf %37, %32 : vector<256x32xf32>
    %39 = arith.select %36, %32, %38 : vector<256x32xi1>, vector<256x32xf32>
    %40 = vector.shape_cast %39 : vector<256x32xf32> to vector<16x16x32xf32>
    %c1 = arith.constant 1 : index
    %c0_15 = arith.constant 0 : index
    %c0_16 = arith.constant 0 : index
    %41 = vector.load %arg2[%c1, %c0_15, %c0_16] : memref<3x288x32xbf16, #tpu.memory_space<vmem>>, vector<1x288x32xbf16>
    %42 = vector.shape_cast %41 : vector<1x288x32xbf16> to vector<288x32xbf16>
    %c1_17 = arith.constant 1 : index
    %c0_18 = arith.constant 0 : index
    %c0_19 = arith.constant 0 : index
    %43 = vector.load %arg3[%c1_17, %c0_18, %c0_19] : memref<3x1x32xf32, #tpu.memory_space<vmem>>, vector<1x1x32xf32>
    %44 = vector.shape_cast %43 : vector<1x1x32xf32> to vector<1x32xf32>
    %cst_20 = arith.constant 0.000000e+00 : f32
    %45 = vector.broadcast %cst_20 : f32 to vector<1x16x32xf32>
    %46 = tpu.concatenate %45, %40, %45 in 0 : vector<1x16x32xf32>, vector<16x16x32xf32>, vector<1x16x32xf32> -> vector<18x16x32xf32>
    %cst_21 = arith.constant 0.000000e+00 : f32
    %47 = vector.broadcast %cst_21 : f32 to vector<18x1x32xf32>
    %48 = tpu.concatenate %47, %46, %47 in 1 : vector<18x1x32xf32>, vector<18x16x32xf32>, vector<18x1x32xf32> -> vector<18x18x32xf32>
    %49 = vector.extract_strided_slice %48 {offsets = [0, 0, 0], sizes = [16, 16, 32], strides = [1, 1, 1]} : vector<18x18x32xf32> to vector<16x16x32xf32>
    %50 = vector.shape_cast %49 : vector<16x16x32xf32> to vector<256x32xf32>
    %51 = vector.extract_strided_slice %48 {offsets = [0, 1, 0], sizes = [16, 16, 32], strides = [1, 1, 1]} : vector<18x18x32xf32> to vector<16x16x32xf32>
    %52 = vector.shape_cast %51 : vector<16x16x32xf32> to vector<256x32xf32>
    %53 = vector.extract_strided_slice %48 {offsets = [0, 2, 0], sizes = [16, 16, 32], strides = [1, 1, 1]} : vector<18x18x32xf32> to vector<16x16x32xf32>
    %54 = vector.shape_cast %53 : vector<16x16x32xf32> to vector<256x32xf32>
    %55 = vector.extract_strided_slice %48 {offsets = [1, 0, 0], sizes = [16, 16, 32], strides = [1, 1, 1]} : vector<18x18x32xf32> to vector<16x16x32xf32>
    %56 = vector.shape_cast %55 : vector<16x16x32xf32> to vector<256x32xf32>
    %57 = vector.extract_strided_slice %48 {offsets = [1, 1, 0], sizes = [16, 16, 32], strides = [1, 1, 1]} : vector<18x18x32xf32> to vector<16x16x32xf32>
    %58 = vector.shape_cast %57 : vector<16x16x32xf32> to vector<256x32xf32>
    %59 = vector.extract_strided_slice %48 {offsets = [1, 2, 0], sizes = [16, 16, 32], strides = [1, 1, 1]} : vector<18x18x32xf32> to vector<16x16x32xf32>
    %60 = vector.shape_cast %59 : vector<16x16x32xf32> to vector<256x32xf32>
    %61 = vector.extract_strided_slice %48 {offsets = [2, 0, 0], sizes = [16, 16, 32], strides = [1, 1, 1]} : vector<18x18x32xf32> to vector<16x16x32xf32>
    %62 = vector.shape_cast %61 : vector<16x16x32xf32> to vector<256x32xf32>
    %63 = vector.extract_strided_slice %48 {offsets = [2, 1, 0], sizes = [16, 16, 32], strides = [1, 1, 1]} : vector<18x18x32xf32> to vector<16x16x32xf32>
    %64 = vector.shape_cast %63 : vector<16x16x32xf32> to vector<256x32xf32>
    %65 = vector.extract_strided_slice %48 {offsets = [2, 2, 0], sizes = [16, 16, 32], strides = [1, 1, 1]} : vector<18x18x32xf32> to vector<16x16x32xf32>
    %66 = vector.shape_cast %65 : vector<16x16x32xf32> to vector<256x32xf32>
    %67 = tpu.concatenate %50, %52, %54, %56, %58, %60, %62, %64, %66 in 1 : vector<256x32xf32>, vector<256x32xf32>, vector<256x32xf32>, vector<256x32xf32>, vector<256x32xf32>, vector<256x32xf32>, vector<256x32xf32>, vector<256x32xf32>, vector<256x32xf32> -> vector<256x288xf32>
    %68 = arith.truncf %67 : vector<256x288xf32> to vector<256x288xbf16>
    %cst_22 = arith.constant dense<0.000000e+00> : vector<256x32xf32>
    %69 = tpu.matmul %68, %42, %cst_22 {dimension_numbers = #tpu.dot_dimension_numbers<[1], [0], [0], [1], [0, 0, 1, 1], [], []>} : vector<256x288xbf16>, vector<288x32xbf16>, vector<256x32xf32> -> vector<256x32xf32>
    %70 = vector.broadcast %44 : vector<1x32xf32> to vector<256x32xf32>
    %71 = arith.addf %69, %70 : vector<256x32xf32>
    %c1_23 = arith.constant 1 : index
    %c0_24 = arith.constant 0 : index
    %c0_25 = arith.constant 0 : index
    %72 = vector.load %arg4[%c1_23, %c0_24, %c0_25] : memref<3x1x32xf32, #tpu.memory_space<vmem>>, vector<1x1x32xf32>
    %73 = vector.shape_cast %72 : vector<1x1x32xf32> to vector<1x32xf32>
    %cst_26 = arith.constant 0.000000e+00 : f32
    %74 = vector.broadcast %cst_26 : f32 to vector<256x32xf32>
    %75 = arith.cmpf oge, %71, %74 : vector<256x32xf32>
    %76 = vector.broadcast %73 : vector<1x32xf32> to vector<256x32xf32>
    %77 = arith.mulf %76, %71 : vector<256x32xf32>
    %78 = arith.select %75, %71, %77 : vector<256x32xi1>, vector<256x32xf32>
    %79 = vector.shape_cast %78 : vector<256x32xf32> to vector<16x16x32xf32>
    %c2 = arith.constant 2 : index
    %c0_27 = arith.constant 0 : index
    %c0_28 = arith.constant 0 : index
    %80 = vector.load %arg2[%c2, %c0_27, %c0_28] : memref<3x288x32xbf16, #tpu.memory_space<vmem>>, vector<1x288x32xbf16>
    %81 = vector.shape_cast %80 : vector<1x288x32xbf16> to vector<288x32xbf16>
    %c2_29 = arith.constant 2 : index
    %c0_30 = arith.constant 0 : index
    %c0_31 = arith.constant 0 : index
    %82 = vector.load %arg3[%c2_29, %c0_30, %c0_31] : memref<3x1x32xf32, #tpu.memory_space<vmem>>, vector<1x1x32xf32>
    %83 = vector.shape_cast %82 : vector<1x1x32xf32> to vector<1x32xf32>
    %cst_32 = arith.constant 0.000000e+00 : f32
    %84 = vector.broadcast %cst_32 : f32 to vector<1x16x32xf32>
    %85 = tpu.concatenate %84, %79, %84 in 0 : vector<1x16x32xf32>, vector<16x16x32xf32>, vector<1x16x32xf32> -> vector<18x16x32xf32>
    %cst_33 = arith.constant 0.000000e+00 : f32
    %86 = vector.broadcast %cst_33 : f32 to vector<18x1x32xf32>
    %87 = tpu.concatenate %86, %85, %86 in 1 : vector<18x1x32xf32>, vector<18x16x32xf32>, vector<18x1x32xf32> -> vector<18x18x32xf32>
    %88 = vector.extract_strided_slice %87 {offsets = [0, 0, 0], sizes = [16, 16, 32], strides = [1, 1, 1]} : vector<18x18x32xf32> to vector<16x16x32xf32>
    %89 = vector.shape_cast %88 : vector<16x16x32xf32> to vector<256x32xf32>
    %90 = vector.extract_strided_slice %87 {offsets = [0, 1, 0], sizes = [16, 16, 32], strides = [1, 1, 1]} : vector<18x18x32xf32> to vector<16x16x32xf32>
    %91 = vector.shape_cast %90 : vector<16x16x32xf32> to vector<256x32xf32>
    %92 = vector.extract_strided_slice %87 {offsets = [0, 2, 0], sizes = [16, 16, 32], strides = [1, 1, 1]} : vector<18x18x32xf32> to vector<16x16x32xf32>
    %93 = vector.shape_cast %92 : vector<16x16x32xf32> to vector<256x32xf32>
    %94 = vector.extract_strided_slice %87 {offsets = [1, 0, 0], sizes = [16, 16, 32], strides = [1, 1, 1]} : vector<18x18x32xf32> to vector<16x16x32xf32>
    %95 = vector.shape_cast %94 : vector<16x16x32xf32> to vector<256x32xf32>
    %96 = vector.extract_strided_slice %87 {offsets = [1, 1, 0], sizes = [16, 16, 32], strides = [1, 1, 1]} : vector<18x18x32xf32> to vector<16x16x32xf32>
    %97 = vector.shape_cast %96 : vector<16x16x32xf32> to vector<256x32xf32>
    %98 = vector.extract_strided_slice %87 {offsets = [1, 2, 0], sizes = [16, 16, 32], strides = [1, 1, 1]} : vector<18x18x32xf32> to vector<16x16x32xf32>
    %99 = vector.shape_cast %98 : vector<16x16x32xf32> to vector<256x32xf32>
    %100 = vector.extract_strided_slice %87 {offsets = [2, 0, 0], sizes = [16, 16, 32], strides = [1, 1, 1]} : vector<18x18x32xf32> to vector<16x16x32xf32>
    %101 = vector.shape_cast %100 : vector<16x16x32xf32> to vector<256x32xf32>
    %102 = vector.extract_strided_slice %87 {offsets = [2, 1, 0], sizes = [16, 16, 32], strides = [1, 1, 1]} : vector<18x18x32xf32> to vector<16x16x32xf32>
    %103 = vector.shape_cast %102 : vector<16x16x32xf32> to vector<256x32xf32>
    %104 = vector.extract_strided_slice %87 {offsets = [2, 2, 0], sizes = [16, 16, 32], strides = [1, 1, 1]} : vector<18x18x32xf32> to vector<16x16x32xf32>
    %105 = vector.shape_cast %104 : vector<16x16x32xf32> to vector<256x32xf32>
    %106 = tpu.concatenate %89, %91, %93, %95, %97, %99, %101, %103, %105 in 1 : vector<256x32xf32>, vector<256x32xf32>, vector<256x32xf32>, vector<256x32xf32>, vector<256x32xf32>, vector<256x32xf32>, vector<256x32xf32>, vector<256x32xf32>, vector<256x32xf32> -> vector<256x288xf32>
    %107 = arith.truncf %106 : vector<256x288xf32> to vector<256x288xbf16>
    %cst_34 = arith.constant dense<0.000000e+00> : vector<256x32xf32>
    %108 = tpu.matmul %107, %81, %cst_34 {dimension_numbers = #tpu.dot_dimension_numbers<[1], [0], [0], [1], [0, 0, 1, 1], [], []>} : vector<256x288xbf16>, vector<288x32xbf16>, vector<256x32xf32> -> vector<256x32xf32>
    %109 = vector.broadcast %83 : vector<1x32xf32> to vector<256x32xf32>
    %110 = arith.addf %108, %109 : vector<256x32xf32>
    %111 = vector.shape_cast %1 : vector<16x16x32xf32> to vector<256x32xf32>
    %112 = arith.addf %110, %111 : vector<256x32xf32>
    %c2_35 = arith.constant 2 : index
    %c0_36 = arith.constant 0 : index
    %c0_37 = arith.constant 0 : index
    %113 = vector.load %arg4[%c2_35, %c0_36, %c0_37] : memref<3x1x32xf32, #tpu.memory_space<vmem>>, vector<1x1x32xf32>
    %114 = vector.shape_cast %113 : vector<1x1x32xf32> to vector<1x32xf32>
    %cst_38 = arith.constant 0.000000e+00 : f32
    %115 = vector.broadcast %cst_38 : f32 to vector<256x32xf32>
    %116 = arith.cmpf oge, %112, %115 : vector<256x32xf32>
    %117 = vector.broadcast %114 : vector<1x32xf32> to vector<256x32xf32>
    %118 = arith.mulf %117, %112 : vector<256x32xf32>
    %119 = arith.select %116, %112, %118 : vector<256x32xi1>, vector<256x32xf32>
    %120 = vector.shape_cast %119 : vector<256x32xf32> to vector<16x16x32xf32>
    %c0_39 = arith.constant 0 : index
    %c0_40 = arith.constant 0 : index
    %c0_41 = arith.constant 0 : index
    %c0_42 = arith.constant 0 : index
    %121 = vector.load %arg5[%c0_39, %c0_40, %c0_41, %c0_42] : memref<1x16x16x32xf32, #tpu.memory_space<vmem>>, vector<1x16x16x32xf32>
    %122 = vector.shape_cast %121 : vector<1x16x16x32xf32> to vector<16x16x32xf32>
    %123 = vector.shape_cast %120 : vector<16x16x32xf32> to vector<1x16x16x32xf32>
    tpu.vector_store %arg5[%c0_39, %c0_40, %c0_41, %c0_42], %123 {strides = array<i32>} : memref<1x16x16x32xf32, #tpu.memory_space<vmem>>, vector<1x16x16x32xf32>,
    return
  }
  func.func @transform_0(%arg0: i32) -> (i32, i32, i32, i32) {
    %c0_i32 = arith.constant 0 : i32
    %c0_i32_0 = arith.constant 0 : i32
    %c0_i32_1 = arith.constant 0 : i32
    %c0_i32_2 = arith.constant 0 : i32
    return %arg0, %c0_i32, %c0_i32_0, %c0_i32_1 : i32, i32, i32, i32
  }
  func.func @transform_1(%arg0: i32) -> (i32, i32, i32) {
    %c0_i32 = arith.constant 0 : i32
    %c0_i32_0 = arith.constant 0 : i32
    %c0_i32_1 = arith.constant 0 : i32
    %c0_i32_2 = arith.constant 0 : i32
    return %c0_i32, %c0_i32_0, %c0_i32_1 : i32, i32, i32
  }
  func.func @transform_2(%arg0: i32) -> (i32, i32, i32) {
    %c0_i32 = arith.constant 0 : i32
    %c0_i32_0 = arith.constant 0 : i32
    %c0_i32_1 = arith.constant 0 : i32
    %c0_i32_2 = arith.constant 0 : i32
    return %c0_i32, %c0_i32_0, %c0_i32_1 : i32, i32, i32
  }
  func.func @transform_3(%arg0: i32) -> (i32, i32, i32) {
    %c0_i32 = arith.constant 0 : i32
    %c0_i32_0 = arith.constant 0 : i32
    %c0_i32_1 = arith.constant 0 : i32
    %c0_i32_2 = arith.constant 0 : i32
    return %c0_i32, %c0_i32_0, %c0_i32_1 : i32, i32, i32
  }
  func.func @transform_4(%arg0: i32) -> (i32, i32, i32, i32) {
    %c0_i32 = arith.constant 0 : i32
    %c0_i32_0 = arith.constant 0 : i32
    %c0_i32_1 = arith.constant 0 : i32
    %c0_i32_2 = arith.constant 0 : i32
    return %arg0, %c0_i32, %c0_i32_0, %c0_i32_1 : i32, i32, i32, i32
  }
}

</mosaic_0001>

<llo_original>
// kernel: resblock_forward.1
$region0: #{resblock_forward.1}
  #allocation0 [shape = 'u32[]', space=smem, size = 0x4, offset = 0x4, fixed_abs, tag = 'smem constant byte address 0x4 - core index']
  #allocation1 [shape = 'u32[144,128]{1,0:T(1,128)}', space=vmem, size = 0x12000, scoped, tag = 'internal scratch']
  %s0 = inlined_call_operand.vmem [shape: f32[2,16,16,32], index: 0, kind: input, shape index: {}]
  %s1 = inlined_call_operand.vmem [shape: bf16[3,288,32], index: 1, kind: input, shape index: {}]
  %s2 = inlined_call_operand.vmem [shape: f32[3,1,32], index: 2, kind: input, shape index: {}]
  %s3 = inlined_call_operand.vmem [shape: f32[3,1,32], index: 3, kind: input, shape index: {}]
  %s4 = inlined_call_operand.hbm [shape: f32[2,16,16,32], index: 4, kind: output, shape index: {}]
  %s5 = sld [smem:[#allocation0]]
  $region49: #{resblock_forward.1} parent=0
    _
  %s7 = ssub.s32 1, %s5
  %s8 = scalar_select 0, %s7, %s5
  $region1: #{resblock_forward.1} parent=0
    #allocation2 [shape = 'u8[262144]{0}', space=vmem, size = 0x40000, scoped, tag = 'output window, operand 0']
    #allocation3 [shape = 's32[2]{0}', space=sflag, size = 0x8, scoped, tag = 'scoped memory for resblock_forward.1']
    %9 = vsyncpa [#allocation3], 0
    %s10 = scalar_lea.sflag [#allocation3], 1
    %11 = vsyncpa %s10, 0
    loop: start=0, step=1, limit=4
    $region2: #{resblock_forward.1} parent=1 // loop_pre_header
      _
    $region3: #{resblock_forward.1} parent=1 // loop_header
      %s13 = sphi 0, %s17
      %p14 = scmp.ge.s32.totalorder %s13, 4
      %s23 = sphi 0, %s25
      %s26 = sphi 0, %s23
      %s27 = sphi 0, %s26
      %s43 = sphi 0, %s27
      %s47 = sphi 0, %s47
      %s49 = sphi 0, %s47
      %s50 = sphi 0, %s49
      %s64 = sphi 0, %s50
      %s68 = sphi 0, %s68
      %s70 = sphi 0, %s68
      %s71 = sphi 0, %s70
      %s85 = sphi 0, %s71
      %s89 = sphi 0, %s89
      %s91 = sphi 0, %s89
      %s92 = sphi 0, %s91
      %s106 = sphi 0, %s92
      %s112 = sphi 0, %s114
      %s115 = sphi 0, %s112
      %s116 = sphi 0, %s115
      %s132 = sphi 0, %s116
    $region4: #{resblock_forward.1} parent=1 // loop_header_branch
      %16 = sbr.rel (%p14) target = $region8
    $region5: #{resblock_forward.1} parent=1 // loop_body
      %s18 = ssub.s32 %s13, 1
      %s19 = ssub.s32 %s13, 2
      %s20 = sadd.s32 %s13, 1
      %s21 = ssub.s32 %s13, %s20
      %p22 = scmp.eq.s32.totalorder %s21, 0
      %s24 = sadd.s32 %s23, 1
      %s25 = scalar_select %p22, %s23, %s24
      %p28 = pneg %p22
      %p29 = scmp.eq.s32.totalorder %s13, 1
      %p30 = por %p28, %p29
      %p31 = scmp.ne.s32.totalorder %s23, %s26
      %p32 = scmp.eq.s32.totalorder %s13, 0
      %p33 = por %p31, %p32
      %p34 = scmp.ne.s32.totalorder %s23, %s26
      %p35 = scmp.eq.s32.totalorder %s18, 1
      %p36 = por %p34, %p35
      %p37 = scmp.ne.s32.totalorder %s26, %s27
      %p38 = scmp.eq.s32.totalorder %s18, 0
      %p39 = por %p37, %p38
      %p40 = scmp.ne.s32.totalorder %s26, %s27
      %p41 = scmp.eq.s32.totalorder %s19, 1
      %p42 = por %p40, %p41
      %p44 = scmp.ne.s32.totalorder %s27, %s43
      %p45 = scmp.eq.s32.totalorder %s19, 0
      %p46 = por %p44, %p45
      %s48 = sadd.s32 %s47, 1
      %p51 = scmp.eq.s32.totalorder %s13, 1
      %p52 = scmp.ne.s32.totalorder %s47, %s49
      %p53 = scmp.eq.s32.totalorder %s13, 0
      %p54 = por %p52, %p53
      %p55 = scmp.ne.s32.totalorder %s47, %s49
      %p56 = scmp.eq.s32.totalorder %s18, 1
      %p57 = por %p55, %p56
      %p58 = scmp.ne.s32.totalorder %s49, %s50
      %p59 = scmp.eq.s32.totalorder %s18, 0
      %p60 = por %p58, %p59
      %p61 = scmp.ne.s32.totalorder %s49, %s50
      %p62 = scmp.eq.s32.totalorder %s19, 1
      %p63 = por %p61, %p62
      %p65 = scmp.ne.s32.totalorder %s50, %s64
      %p66 = scmp.eq.s32.totalorder %s19, 0
      %p67 = por %p65, %p66
      %s69 = sadd.s32 %s68, 1
      %p72 = scmp.eq.s32.totalorder %s13, 1
      %p73 = scmp.ne.s32.totalorder %s68, %s70
      %p74 = scmp.eq.s32.totalorder %s13, 0
      %p75 = por %p73, %p74
      %p76 = scmp.ne.s32.totalorder %s68, %s70
      %p77 = scmp.eq.s32.totalorder %s18, 1
      %p78 = por %p76, %p77
      %p79 = scmp.ne.s32.totalorder %s70, %s71
      %p80 = scmp.eq.s32.totalorder %s18, 0
      %p81 = por %p79, %p80
      %p82 = scmp.ne.s32.totalorder %s70, %s71
      %p83 = scmp.eq.s32.totalorder %s19, 1
      %p84 = por %p82, %p83
      %p86 = scmp.ne.s32.totalorder %s71, %s85
      %p87 = scmp.eq.s32.totalorder %s19, 0
      %p88 = por %p86, %p87
      %s90 = sadd.s32 %s89, 1
      %p93 = scmp.eq.s32.totalorder %s13, 1
      %p94 = scmp.ne.s32.totalorder %s89, %s91
      %p95 = scmp.eq.s32.totalorder %s13, 0
      %p96 = por %p94, %p95
      %p97 = scmp.ne.s32.totalorder %s89, %s91
      %p98 = scmp.eq.s32.totalorder %s18, 1
      %p99 = por %p97, %p98
      %p100 = scmp.ne.s32.totalorder %s91, %s92
      %p101 = scmp.eq.s32.totalorder %s18, 0
      %p102 = por %p100, %p101
      %p103 = scmp.ne.s32.totalorder %s91, %s92
      %p104 = scmp.eq.s32.totalorder %s19, 1
      %p105 = por %p103, %p104
      %p107 = scmp.ne.s32.totalorder %s92, %s106
      %p108 = scmp.eq.s32.totalorder %s19, 0
      %p109 = por %p107, %p108
      %s110 = ssub.s32 %s13, %s20
      %p111 = scmp.eq.s32.totalorder %s110, 0
      %s113 = sadd.s32 %s112, 1
      %s114 = scalar_select %p111, %s112, %s113
      %p117 = pneg %p111
      %p118 = scmp.eq.s32.totalorder %s13, 1
      %p119 = por %p117, %p118
      %p120 = scmp.ne.s32.totalorder %s112, %s115
      %p121 = scmp.eq.s32.totalorder %s13, 0
      %p122 = por %p120, %p121
      %p123 = scmp.ne.s32.totalorder %s112, %s115
      %p124 = scmp.eq.s32.totalorder %s18, 1
      %p125 = por %p123, %p124
      %p126 = scmp.ne.s32.totalorder %s115, %s116
      %p127 = scmp.eq.s32.totalorder %s18, 0
      %p128 = por %p126, %p127
      %p129 = scmp.ne.s32.totalorder %s115, %s116
      %p130 = scmp.eq.s32.totalorder %s19, 1
      %p131 = por %p129, %p130
      %p133 = scmp.ne.s32.totalorder %s116, %s132
      %p134 = scmp.eq.s32.totalorder %s19, 0
      %p135 = por %p133, %p134
      %p136 = scmp.le.s32.totalorder 1, %s13
      %p137 = scmp.lt.s32.totalorder %s13, 3
      %p138 = pnand %p136, %p137
      %p139 = pneg %p138
      // Predicated region
      $region9: #{resblock_forward.1} parent=5 // pred_check
        _
      $region10: #{resblock_forward.1} parent=5 // pred_check_branch
        %141 = sbr.rel (%p138) target = $region12
      $region11: #{resblock_forward.1} parent=5 // pred_region
        %s142 = ssub.s32 %s13, 1
        // Predicated region
        $region13: #{resblock_forward.1} parent=11 // pred_check
          %p143 = pneg %p60
        $region14: #{resblock_forward.1} parent=11 // pred_check_branch
          %145 = sbr.rel (%p143) target = $region16
        $region15: #{resblock_forward.1} parent=11 // pred_region
          _
        $region16: #{resblock_forward.1} parent=11 // pred_fallthru
          _
        // Predicated region
        $region17: #{resblock_forward.1} parent=11 // pred_check
          %p146 = pneg %p81
        $region18: #{resblock_forward.1} parent=11 // pred_check_branch
          %148 = sbr.rel (%p146) target = $region20
        $region19: #{resblock_forward.1} parent=11 // pred_region
          _
        $region20: #{resblock_forward.1} parent=11 // pred_fallthru
          _
        // Predicated region
        $region21: #{resblock_forward.1} parent=11 // pred_check
          %p149 = pneg %p102
        $region22: #{resblock_forward.1} parent=11 // pred_check_branch
          %151 = sbr.rel (%p149) target = $region24
        $region23: #{resblock_forward.1} parent=11 // pred_region
          _
        $region24: #{resblock_forward.1} parent=11 // pred_fallthru
          _
      $region12: #{resblock_forward.1} parent=5 // pred_fallthru
        _
      %p152 = scmp.lt.s32.totalorder %s13, 2
      // Predicated region
      $region25: #{resblock_forward.1} parent=5 // pred_check
        %p153 = pneg %p152
      $region26: #{resblock_forward.1} parent=5 // pred_check_branch
        %155 = sbr.rel (%p153) target = $region28
      $region27: #{resblock_forward.1} parent=5 // pred_region
        // Predicated region
        $region29: #{resblock_forward.1} parent=27 // pred_check
          %p156 = pneg %p33
        $region30: #{resblock_forward.1} parent=27 // pred_check_branch
          %158 = sbr.rel (%p156) target = $region32
        $region31: #{resblock_forward.1} parent=27 // pred_region
          %p159 = scmp.lt.s32.totalorder %s13, 1
          %s160 = scalar_select %p159, %s13, 1
          %s161 = smul.addr %s160, 32
          %s162 = smul.addr %s161, 8
          %s163 = scalar_lea.vmem %s0, %s162
        $region32: #{resblock_forward.1} parent=27 // pred_fallthru
          _
      $region28: #{resblock_forward.1} parent=5 // pred_fallthru
        _
      %p164 = scmp.le.s32.totalorder 1, %s13
      %p165 = scmp.lt.s32.totalorder %s13, 3
      %p166 = pnand %p164, %p165
      %p167 = pneg %p166
      // Predicated region
      $region33: #{resblock_forward.1} parent=5 // pred_check
        _
      $region34: #{resblock_forward.1} parent=5 // pred_check_branch
        %169 = sbr.rel (%p166) target = $region36
      $region35: #{resblock_forward.1} parent=5 // pred_region
        %s170 = ssub.s32 %s13, 1
        %p171 = scmp.lt.s32.totalorder %s18, 1
        %s172 = scalar_select %p171, %s18, 1
        %s173 = smul.addr %s172, 32
        %s174 = smul.addr %s173, 8
        %s175 = scalar_lea.vmem %s0, %s174
        %p176 = pneg %p39
        %p177 = pneg %p36
        %p178 = pneg %p60
        %p179 = pneg %p57
        %p180 = pneg %p81
        %p181 = pneg %p78
        %p182 = pneg %p102
        %p183 = pneg %p99
        %p184 = pneg %p128
        %p185 = pneg %p125
        %s186 = sand.u32 %s115, 1
        %s187 = scalar_lea.sflag [#allocation3], %s186
        %s188 = sand.u32 %s115, 1
        %s189 = smul.addr %s188, 256
        %s190 = scalar_lea.vmem [#allocation2], %s189
        %p191 = scmp.lt.s32.totalorder %s18, 1
        %s192 = scalar_select %p191, %s18, 1
        %s193 = smul.addr %s192, 32
        %s194 = smul.addr %s193, 8
        %s195 = scalar_lea.vmem %s0, %s194
        %v197 = vld [vmem:[%s195] sm:$0xff]
        %v198 = vld [vmem:[%s195 + $0x8] sm:$0xff]
        %v199 = vld [vmem:[%s195 + $0x10] sm:$0xff]
        %v200 = vld [vmem:[%s195 + $0x18] sm:$0xff]
        %v201 = vld [vmem:[%s195 + $0x20] sm:$0xff]
        %v202 = vld [vmem:[%s195 + $0x28] sm:$0xff]
        %v203 = vld [vmem:[%s195 + $0x30] sm:$0xff]
        %v204 = vld [vmem:[%s195 + $0x38] sm:$0xff]
        %v205 = vld [vmem:[%s195 + $0x40] sm:$0xff]
        %v206 = vld [vmem:[%s195 + $0x48] sm:$0xff]
        %v207 = vld [vmem:[%s195 + $0x50] sm:$0xff]
        %v208 = vld [vmem:[%s195 + $0x58] sm:$0xff]
        %v209 = vld [vmem:[%s195 + $0x60] sm:$0xff]
        %v210 = vld [vmem:[%s195 + $0x68] sm:$0xff]
        %v211 = vld [vmem:[%s195 + $0x70] sm:$0xff]
        %v212 = vld [vmem:[%s195 + $0x78] sm:$0xff]
        %v213 = vld [vmem:[%s195 + $0x80] sm:$0xff]
        %v214 = vld [vmem:[%s195 + $0x88] sm:$0xff]
        %v215 = vld [vmem:[%s195 + $0x90] sm:$0xff]
        %v216 = vld [vmem:[%s195 + $0x98] sm:$0xff]
        %v217 = vld [vmem:[%s195 + $0xa0] sm:$0xff]
        %v218 = vld [vmem:[%s195 + $0xa8] sm:$0xff]
        %v219 = vld [vmem:[%s195 + $0xb0] sm:$0xff]
        %v220 = vld [vmem:[%s195 + $0xb8] sm:$0xff]
        %v221 = vld [vmem:[%s195 + $0xc0] sm:$0xff]
        %v222 = vld [vmem:[%s195 + $0xc8] sm:$0xff]
        %v223 = vld [vmem:[%s195 + $0xd0] sm:$0xff]
        %v224 = vld [vmem:[%s195 + $0xd8] sm:$0xff]
        %v225 = vld [vmem:[%s195 + $0xe0] sm:$0xff]
        %v226 = vld [vmem:[%s195 + $0xe8] sm:$0xff]
        %v227 = vld [vmem:[%s195 + $0xf0] sm:$0xff]
        %v228 = vld [vmem:[%s195 + $0xf8] sm:$0xff]
        %v229 = vld [vmem:[%s1] sm:$0xf]
        %v230 = vld [vmem:[%s1 + $0x4] sm:$0xf]
        %v231 = vld [vmem:[%s1 + $0x8] sm:$0xf]
        %v232 = vld [vmem:[%s1 + $0xc] sm:$0xf]
        %v233 = vld [vmem:[%s1 + $0x10] sm:$0xf]
        %v234 = vld [vmem:[%s1 + $0x14] sm:$0xf]
        %v235 = vld [vmem:[%s1 + $0x18] sm:$0xf]
        %v236 = vld [vmem:[%s1 + $0x1c] sm:$0xf]
        %v237 = vld [vmem:[%s1 + $0x20] sm:$0xf]
        %v238 = vld [vmem:[%s1 + $0x24] sm:$0xf]
        %v239 = vld [vmem:[%s1 + $0x28] sm:$0xf]
        %v240 = vld [vmem:[%s1 + $0x2c] sm:$0xf]
        %v241 = vld [vmem:[%s1 + $0x30] sm:$0xf]
        %v242 = vld [vmem:[%s1 + $0x34] sm:$0xf]
        %v243 = vld [vmem:[%s1 + $0x38] sm:$0xf]
        %v244 = vld [vmem:[%s1 + $0x3c] sm:$0xf]
        %v245 = vld [vmem:[%s1 + $0x40] sm:$0xf]
        %v246 = vld [vmem:[%s1 + $0x44] sm:$0xf]
        %v247 = vld [vmem:[%s1 + $0x48] sm:$0xf]
        %v248 = vld [vmem:[%s1 + $0x4c] sm:$0xf]
        %v249 = vld [vmem:[%s1 + $0x50] sm:$0xf]
        %v250 = vld [vmem:[%s1 + $0x54] sm:$0xf]
        %v251 = vld [vmem:[%s1 + $0x58] sm:$0xf]
        %v252 = vld [vmem:[%s1 + $0x5c] sm:$0xf]
        %v253 = vld [vmem:[%s1 + $0x60] sm:$0xf]
        %v254 = vld [vmem:[%s1 + $0x64] sm:$0xf]
        %v255 = vld [vmem:[%s1 + $0x68] sm:$0xf]
        %v256 = vld [vmem:[%s1 + $0x6c] sm:$0xf]
        %v257 = vld [vmem:[%s1 + $0x70] sm:$0xf]
        %v258 = vld [vmem:[%s1 + $0x74] sm:$0xf]
        %v259 = vld [vmem:[%s1 + $0x78] sm:$0xf]
        %v260 = vld [vmem:[%s1 + $0x7c] sm:$0xf]
        %v261 = vld [vmem:[%s1 + $0x80] sm:$0xf]
        %v262 = vld [vmem:[%s1 + $0x84] sm:$0xf]
        %v263 = vld [vmem:[%s1 + $0x88] sm:$0xf]
        %v264 = vld [vmem:[%s1 + $0x8c] sm:$0xf]
        %v265 = vld [vmem:[%s2] sm:$0x1]
        %vm299 = vcmask 1040384
        %v300 = vrot.slane 0.0, 7
        %v301 = vsel %vm299, %v300, %v300
        %v302 = vrot.slane %v197, 7
        %v303 = vrot.slane %v198, 7
        %v304 = vsel %vm299, %v302, %v303
        %v305 = vrot.slane %v199, 7
        %v306 = vrot.slane %v200, 7
        %v307 = vsel %vm299, %v305, %v306
        %v308 = vrot.slane %v201, 7
        %v309 = vrot.slane %v202, 7
        %v310 = vsel %vm299, %v308, %v309
        %v311 = vrot.slane %v203, 7
        %v312 = vrot.slane %v204, 7
        %v313 = vsel %vm299, %v311, %v312
        %v314 = vrot.slane %v205, 7
        %v315 = vrot.slane %v206, 7
        %v316 = vsel %vm299, %v314, %v315
        %v317 = vrot.slane %v207, 7
        %v318 = vrot.slane %v208, 7
        %v319 = vsel %vm299, %v317, %v318
        %v320 = vrot.slane %v209, 7
        %v321 = vrot.slane %v210, 7
        %v322 = vsel %vm299, %v320, %v321
        %v323 = vrot.slane %v211, 7
        %v324 = vrot.slane %v212, 7
        %v325 = vsel %vm299, %v323, %v324
        %v326 = vrot.slane %v213, 7
        %v327 = vrot.slane %v214, 7
        %v328 = vsel %vm299, %v326, %v327
        %v329 = vrot.slane %v215, 7
        %v330 = vrot.slane %v216, 7
        %v331 = vsel %vm299, %v329, %v330
        %v332 = vrot.slane %v217, 7
        %v333 = vrot.slane %v218, 7
        %v334 = vsel %vm299, %v332, %v333
        %v335 = vrot.slane %v219, 7
        %v336 = vrot.slane %v220, 7
        %v337 = vsel %vm299, %v335, %v336
        %v338 = vrot.slane %v221, 7
        %v339 = vrot.slane %v222, 7
        %v340 = vsel %vm299, %v338, %v339
        %v341 = vrot.slane %v223, 7
        %v342 = vrot.slane %v224, 7
        %v343 = vsel %vm299, %v341, %v342
        %v344 = vrot.slane %v225, 7
        %v345 = vrot.slane %v226, 7
        %v346 = vsel %vm299, %v344, %v345
        %v347 = vrot.slane %v227, 7
        %v348 = vrot.slane %v228, 7
        %v349 = vsel %vm299, %v347, %v348
        %v399 = vsel %vm299, 0.0, %v300
        %v400 = vsel %vm299, 0.0, %v302
        %v401 = vsel %vm299, 0.0, %v305
        %v402 = vsel %vm299, 0.0, %v308
        %v403 = vsel %vm299, 0.0, %v311
        %v404 = vsel %vm299, 0.0, %v314
        %v405 = vsel %vm299, 0.0, %v317
        %v406 = vsel %vm299, 0.0, %v320
        %v407 = vsel %vm299, 0.0, %v323
        %v408 = vsel %vm299, 0.0, %v326
        %v409 = vsel %vm299, 0.0, %v329
        %v410 = vsel %vm299, 0.0, %v332
        %v411 = vsel %vm299, 0.0, %v335
        %v412 = vsel %vm299, 0.0, %v338
        %v413 = vsel %vm299, 0.0, %v341
        %v414 = vsel %vm299, 0.0, %v344
        %v415 = vsel %vm299, 0.0, %v347
        %v416 = vsel %vm299, %v300, 0.0
        %v417 = vsel %vm299, %v303, 0.0
        %v418 = vsel %vm299, %v306, 0.0
        %v419 = vsel %vm299, %v309, 0.0
        %v420 = vsel %vm299, %v312, 0.0
        %v421 = vsel %vm299, %v315, 0.0
        %v422 = vsel %vm299, %v318, 0.0
        %v423 = vsel %vm299, %v321, 0.0
        %v424 = vsel %vm299, %v324, 0.0
        %v425 = vsel %vm299, %v327, 0.0
        %v426 = vsel %vm299, %v330, 0.0
        %v427 = vsel %vm299, %v333, 0.0
        %v428 = vsel %vm299, %v336, 0.0
        %v429 = vsel %vm299, %v339, 0.0
        %v430 = vsel %vm299, %v342, 0.0
        %v431 = vsel %vm299, %v345, 0.0
        %v432 = vsel %vm299, %v348, 0.0
        %vm465 = vcmask 1046528
        %v466 = vrot.slane %v399, 1
        %v467 = vrot.slane %v301, 1
        %v468 = vsel %vm465, %v466, %v467
        %v469 = vrot.slane %v416, 1
        %v470 = vsel %vm465, %v467, %v469
        %v471 = vrot.slane %v400, 1
        %v472 = vrot.slane %v304, 1
        %v473 = vsel %vm465, %v471, %v472
        %v474 = vrot.slane %v417, 1
        %v475 = vsel %vm465, %v472, %v474
        %v476 = vrot.slane %v401, 1
        %v477 = vrot.slane %v307, 1
        %v478 = vsel %vm465, %v476, %v477
        %v479 = vrot.slane %v418, 1
        %v480 = vsel %vm465, %v477, %v479
        %v481 = vrot.slane %v402, 1
        %v482 = vrot.slane %v310, 1
        %v483 = vsel %vm465, %v481, %v482
        %v484 = vrot.slane %v419, 1
        %v485 = vsel %vm465, %v482, %v484
        %v486 = vrot.slane %v403, 1
        %v487 = vrot.slane %v313, 1
        %v488 = vsel %vm465, %v486, %v487
        %v489 = vrot.slane %v420, 1
        %v490 = vsel %vm465, %v487, %v489
        %v491 = vrot.slane %v404, 1
        %v492 = vrot.slane %v316, 1
        %v493 = vsel %vm465, %v491, %v492
        %v494 = vrot.slane %v421, 1
        %v495 = vsel %vm465, %v492, %v494
        %v496 = vrot.slane %v405, 1
        %v497 = vrot.slane %v319, 1
        %v498 = vsel %vm465, %v496, %v497
        %v499 = vrot.slane %v422, 1
        %v500 = vsel %vm465, %v497, %v499
        %v501 = vrot.slane %v406, 1
        %v502 = vrot.slane %v322, 1
        %v503 = vsel %vm465, %v501, %v502
        %v504 = vrot.slane %v423, 1
        %v505 = vsel %vm465, %v502, %v504
        %v506 = vrot.slane %v407, 1
        %v507 = vrot.slane %v325, 1
        %v508 = vsel %vm465, %v506, %v507
        %v509 = vrot.slane %v424, 1
        %v510 = vsel %vm465, %v507, %v509
        %v511 = vrot.slane %v408, 1
        %v512 = vrot.slane %v328, 1
        %v513 = vsel %vm465, %v511, %v512
        %v514 = vrot.slane %v425, 1
        %v515 = vsel %vm465, %v512, %v514
        %v516 = vrot.slane %v409, 1
        %v517 = vrot.slane %v331, 1
        %v518 = vsel %vm465, %v516, %v517
        %v519 = vrot.slane %v426, 1
        %v520 = vsel %vm465, %v517, %v519
        %v521 = vrot.slane %v410, 1
        %v522 = vrot.slane %v334, 1
        %v523 = vsel %vm465, %v521, %v522
        %v524 = vrot.slane %v427, 1
        %v525 = vsel %vm465, %v522, %v524
        %v526 = vrot.slane %v411, 1
        %v527 = vrot.slane %v337, 1
        %v528 = vsel %vm465, %v526, %v527
        %v529 = vrot.slane %v428, 1
        %v530 = vsel %vm465, %v527, %v529
        %v531 = vrot.slane %v412, 1
        %v532 = vrot.slane %v340, 1
        %v533 = vsel %vm465, %v531, %v532
        %v534 = vrot.slane %v429, 1
        %v535 = vsel %vm465, %v532, %v534
        %v536 = vrot.slane %v413, 1
        %v537 = vrot.slane %v343, 1
        %v538 = vsel %vm465, %v536, %v537
        %v539 = vrot.slane %v430, 1
        %v540 = vsel %vm465, %v537, %v539
        %v541 = vrot.slane %v414, 1
        %v542 = vrot.slane %v346, 1
        %v543 = vsel %vm465, %v541, %v542
        %v544 = vrot.slane %v431, 1
        %v545 = vsel %vm465, %v542, %v544
        %vm546 = vcmask 1045504
        %v547 = vrot.slane %v399, 2
        %v548 = vrot.slane %v301, 2
        %v549 = vsel %vm546, %v547, %v548
        %v550 = vrot.slane %v416, 2
        %v551 = vsel %vm546, %v548, %v550
        %v552 = vrot.slane %v400, 2
        %v553 = vrot.slane %v304, 2
        %v554 = vsel %vm546, %v552, %v553
        %v555 = vrot.slane %v417, 2
        %v556 = vsel %vm546, %v553, %v555
        %v557 = vrot.slane %v401, 2
        %v558 = vrot.slane %v307, 2
        %v559 = vsel %vm546, %v557, %v558
        %v560 = vrot.slane %v418, 2
        %v561 = vsel %vm546, %v558, %v560
        %v562 = vrot.slane %v402, 2
        %v563 = vrot.slane %v310, 2
        %v564 = vsel %vm546, %v562, %v563
        %v565 = vrot.slane %v419, 2
        %v566 = vsel %vm546, %v563, %v565
        %v567 = vrot.slane %v403, 2
        %v568 = vrot.slane %v313, 2
        %v569 = vsel %vm546, %v567, %v568
        %v570 = vrot.slane %v420, 2
        %v571 = vsel %vm546, %v568, %v570
        %v572 = vrot.slane %v404, 2
        %v573 = vrot.slane %v316, 2
        %v574 = vsel %vm546, %v572, %v573
        %v575 = vrot.slane %v421, 2
        %v576 = vsel %vm546, %v573, %v575
        %v577 = vrot.slane %v405, 2
        %v578 = vrot.slane %v319, 2
        %v579 = vsel %vm546, %v577, %v578
        %v580 = vrot.slane %v422, 2
        %v581 = vsel %vm546, %v578, %v580
        %v582 = vrot.slane %v406, 2
        %v583 = vrot.slane %v322, 2
        %v584 = vsel %vm546, %v582, %v583
        %v585 = vrot.slane %v423, 2
        %v586 = vsel %vm546, %v583, %v585
        %v587 = vrot.slane %v407, 2
        %v588 = vrot.slane %v325, 2
        %v589 = vsel %vm546, %v587, %v588
        %v590 = vrot.slane %v424, 2
        %v591 = vsel %vm546, %v588, %v590
        %v592 = vrot.slane %v408, 2
        %v593 = vrot.slane %v328, 2
        %v594 = vsel %vm546, %v592, %v593
        %v595 = vrot.slane %v425, 2
        %v596 = vsel %vm546, %v593, %v595
        %v597 = vrot.slane %v409, 2
        %v598 = vrot.slane %v331, 2
        %v599 = vsel %vm546, %v597, %v598
        %v600 = vrot.slane %v426, 2
        %v601 = vsel %vm546, %v598, %v600
        %v602 = vrot.slane %v410, 2
        %v603 = vrot.slane %v334, 2
        %v604 = vsel %vm546, %v602, %v603
        %v605 = vrot.slane %v427, 2
        %v606 = vsel %vm546, %v603, %v605
        %v607 = vrot.slane %v411, 2
        %v608 = vrot.slane %v337, 2
        %v609 = vsel %vm546, %v607, %v608
        %v610 = vrot.slane %v428, 2
        %v611 = vsel %vm546, %v608, %v610
        %v612 = vrot.slane %v412, 2
        %v613 = vrot.slane %v340, 2
        %v614 = vsel %vm546, %v612, %v613
        %v615 = vrot.slane %v429, 2
        %v616 = vsel %vm546, %v613, %v615
        %v617 = vrot.slane %v413, 2
        %v618 = vrot.slane %v343, 2
        %v619 = vsel %vm546, %v617, %v618
        %v620 = vrot.slane %v430, 2
        %v621 = vsel %vm546, %v618, %v620
        %v622 = vrot.slane %v414, 2
        %v623 = vrot.slane %v346, 2
        %v624 = vsel %vm546, %v622, %v623
        %v625 = vrot.slane %v431, 2
        %v626 = vsel %vm546, %v623, %v625
        %v629 = vrot.slane %v415, 1
        %v630 = vrot.slane %v349, 1
        %v631 = vsel %vm465, %v629, %v630
        %v632 = vrot.slane %v432, 1
        %v633 = vsel %vm465, %v630, %v632
        %v666 = vrot.slane %v415, 2
        %v667 = vrot.slane %v349, 2
        %v668 = vsel %vm546, %v666, %v667
        %v669 = vrot.slane %v432, 2
        %v670 = vsel %vm546, %v667, %v669
        %703 = vrot.lane.b32.xlu0 %v468, 32
        %v704 = vpop.permute.xlu0 %703
        %705 = vrot.lane.b32.xlu0 %v470, 32
        %v706 = vpop.permute.xlu0 %705
        %707 = vrot.lane.b32.xlu0 %v473, 32
        %v708 = vpop.permute.xlu0 %707
        %709 = vrot.lane.b32.xlu0 %v475, 32
        %v710 = vpop.permute.xlu0 %709
        %711 = vrot.lane.b32.xlu0 %v478, 32
        %v712 = vpop.permute.xlu0 %711
        %713 = vrot.lane.b32.xlu0 %v480, 32
        %v714 = vpop.permute.xlu0 %713
        %715 = vrot.lane.b32.xlu0 %v483, 32
        %v716 = vpop.permute.xlu0 %715
        %717 = vrot.lane.b32.xlu0 %v485, 32
        %v718 = vpop.permute.xlu0 %717
        %719 = vrot.lane.b32.xlu0 %v488, 32
        %v720 = vpop.permute.xlu0 %719
        %721 = vrot.lane.b32.xlu0 %v490, 32
        %v722 = vpop.permute.xlu0 %721
        %723 = vrot.lane.b32.xlu0 %v493, 32
        %v724 = vpop.permute.xlu0 %723
        %725 = vrot.lane.b32.xlu0 %v495, 32
        %v726 = vpop.permute.xlu0 %725
        %727 = vrot.lane.b32.xlu0 %v498, 32
        %v728 = vpop.permute.xlu0 %727
        %729 = vrot.lane.b32.xlu0 %v500, 32
        %v730 = vpop.permute.xlu0 %729
        %731 = vrot.lane.b32.xlu0 %v503, 32
        %v732 = vpop.permute.xlu0 %731
        %733 = vrot.lane.b32.xlu0 %v505, 32
        %v734 = vpop.permute.xlu0 %733
        %735 = vrot.lane.b32.xlu0 %v508, 32
        %v736 = vpop.permute.xlu0 %735
        %737 = vrot.lane.b32.xlu0 %v510, 32
        %v738 = vpop.permute.xlu0 %737
        %739 = vrot.lane.b32.xlu0 %v513, 32
        %v740 = vpop.permute.xlu0 %739
        %741 = vrot.lane.b32.xlu0 %v515, 32
        %v742 = vpop.permute.xlu0 %741
        %743 = vrot.lane.b32.xlu0 %v518, 32
        %v744 = vpop.permute.xlu0 %743
        %745 = vrot.lane.b32.xlu0 %v520, 32
        %v746 = vpop.permute.xlu0 %745
        %747 = vrot.lane.b32.xlu0 %v523, 32
        %v748 = vpop.permute.xlu0 %747
        %749 = vrot.lane.b32.xlu0 %v525, 32
        %v750 = vpop.permute.xlu0 %749
        %751 = vrot.lane.b32.xlu0 %v528, 32
        %v752 = vpop.permute.xlu0 %751
        %753 = vrot.lane.b32.xlu0 %v530, 32
        %v754 = vpop.permute.xlu0 %753
        %755 = vrot.lane.b32.xlu0 %v533, 32
        %v756 = vpop.permute.xlu0 %755
        %757 = vrot.lane.b32.xlu0 %v535, 32
        %v758 = vpop.permute.xlu0 %757
        %759 = vrot.lane.b32.xlu0 %v538, 32
        %v760 = vpop.permute.xlu0 %759
        %761 = vrot.lane.b32.xlu0 %v540, 32
        %v762 = vpop.permute.xlu0 %761
        %763 = vrot.lane.b32.xlu0 %v543, 32
        %v764 = vpop.permute.xlu0 %763
        %765 = vrot.lane.b32.xlu0 %v545, 32
        %v766 = vpop.permute.xlu0 %765
        %799 = vrot.lane.b32.xlu0 %v549, 64
        %v800 = vpop.permute.xlu0 %799
        %801 = vrot.lane.b32.xlu0 %v551, 64
        %v802 = vpop.permute.xlu0 %801
        %803 = vrot.lane.b32.xlu0 %v554, 64
        %v804 = vpop.permute.xlu0 %803
        %805 = vrot.lane.b32.xlu0 %v556, 64
        %v806 = vpop.permute.xlu0 %805
        %807 = vrot.lane.b32.xlu0 %v559, 64
        %v808 = vpop.permute.xlu0 %807
        %809 = vrot.lane.b32.xlu0 %v561, 64
        %v810 = vpop.permute.xlu0 %809
        %811 = vrot.lane.b32.xlu0 %v564, 64
        %v812 = vpop.permute.xlu0 %811
        %813 = vrot.lane.b32.xlu0 %v566, 64
        %v814 = vpop.permute.xlu0 %813
        %815 = vrot.lane.b32.xlu0 %v569, 64
        %v816 = vpop.permute.xlu0 %815
        %817 = vrot.lane.b32.xlu0 %v571, 64
        %v818 = vpop.permute.xlu0 %817
        %819 = vrot.lane.b32.xlu0 %v574, 64
        %v820 = vpop.permute.xlu0 %819
        %821 = vrot.lane.b32.xlu0 %v576, 64
        %v822 = vpop.permute.xlu0 %821
        %823 = vrot.lane.b32.xlu0 %v579, 64
        %v824 = vpop.permute.xlu0 %823
        %825 = vrot.lane.b32.xlu0 %v581, 64
        %v826 = vpop.permute.xlu0 %825
        %827 = vrot.lane.b32.xlu0 %v584, 64
        %v828 = vpop.permute.xlu0 %827
        %829 = vrot.lane.b32.xlu0 %v586, 64
        %v830 = vpop.permute.xlu0 %829
        %831 = vrot.lane.b32.xlu0 %v589, 64
        %v832 = vpop.permute.xlu0 %831
        %833 = vrot.lane.b32.xlu0 %v591, 64
        %v834 = vpop.permute.xlu0 %833
        %835 = vrot.lane.b32.xlu0 %v594, 64
        %v836 = vpop.permute.xlu0 %835
        %837 = vrot.lane.b32.xlu0 %v596, 64
        %v838 = vpop.permute.xlu0 %837
        %839 = vrot.lane.b32.xlu0 %v599, 64
        %v840 = vpop.permute.xlu0 %839
        %841 = vrot.lane.b32.xlu0 %v601, 64
        %v842 = vpop.permute.xlu0 %841
        %843 = vrot.lane.b32.xlu0 %v604, 64
        %v844 = vpop.permute.xlu0 %843
        %845 = vrot.lane.b32.xlu0 %v606, 64
        %v846 = vpop.permute.xlu0 %845
        %847 = vrot.lane.b32.xlu0 %v609, 64
        %v848 = vpop.permute.xlu0 %847
        %849 = vrot.lane.b32.xlu0 %v611, 64
        %v850 = vpop.permute.xlu0 %849
        %851 = vrot.lane.b32.xlu0 %v614, 64
        %v852 = vpop.permute.xlu0 %851
        %853 = vrot.lane.b32.xlu0 %v616, 64
        %v854 = vpop.permute.xlu0 %853
        %855 = vrot.lane.b32.xlu0 %v619, 64
        %v856 = vpop.permute.xlu0 %855
        %857 = vrot.lane.b32.xlu0 %v621, 64
        %v858 = vpop.permute.xlu0 %857
        %859 = vrot.lane.b32.xlu0 %v624, 64
        %v860 = vpop.permute.xlu0 %859
        %861 = vrot.lane.b32.xlu0 %v626, 64
        %v862 = vpop.permute.xlu0 %861
        %895 = vrot.lane.b32.xlu0 %v400, 96
        %v896 = vpop.permute.xlu0 %895
        %897 = vrot.lane.b32.xlu0 %v304, 96
        %v898 = vpop.permute.xlu0 %897
        %899 = vrot.lane.b32.xlu0 %v401, 96
        %v900 = vpop.permute.xlu0 %899
        %901 = vrot.lane.b32.xlu0 %v307, 96
        %v902 = vpop.permute.xlu0 %901
        %903 = vrot.lane.b32.xlu0 %v402, 96
        %v904 = vpop.permute.xlu0 %903
        %905 = vrot.lane.b32.xlu0 %v310, 96
        %v906 = vpop.permute.xlu0 %905
        %907 = vrot.lane.b32.xlu0 %v403, 96
        %v908 = vpop.permute.xlu0 %907
        %909 = vrot.lane.b32.xlu0 %v313, 96
        %v910 = vpop.permute.xlu0 %909
        %911 = vrot.lane.b32.xlu0 %v404, 96
        %v912 = vpop.permute.xlu0 %911
        %913 = vrot.lane.b32.xlu0 %v316, 96
        %v914 = vpop.permute.xlu0 %913
        %915 = vrot.lane.b32.xlu0 %v405, 96
        %v916 = vpop.permute.xlu0 %915
        %917 = vrot.lane.b32.xlu0 %v319, 96
        %v918 = vpop.permute.xlu0 %917
        %919 = vrot.lane.b32.xlu0 %v406, 96
        %v920 = vpop.permute.xlu0 %919
        %921 = vrot.lane.b32.xlu0 %v322, 96
        %v922 = vpop.permute.xlu0 %921
        %923 = vrot.lane.b32.xlu0 %v407, 96
        %v924 = vpop.permute.xlu0 %923
        %925 = vrot.lane.b32.xlu0 %v325, 96
        %v926 = vpop.permute.xlu0 %925
        %927 = vrot.lane.b32.xlu0 %v408, 96
        %v928 = vpop.permute.xlu0 %927
        %929 = vrot.lane.b32.xlu0 %v328, 96
        %v930 = vpop.permute.xlu0 %929
        %931 = vrot.lane.b32.xlu0 %v409, 96
        %v932 = vpop.permute.xlu0 %931
        %933 = vrot.lane.b32.xlu0 %v331, 96
        %v934 = vpop.permute.xlu0 %933
        %935 = vrot.lane.b32.xlu0 %v410, 96
        %v936 = vpop.permute.xlu0 %935
        %937 = vrot.lane.b32.xlu0 %v334, 96
        %v938 = vpop.permute.xlu0 %937
        %939 = vrot.lane.b32.xlu0 %v411, 96
        %v940 = vpop.permute.xlu0 %939
        %941 = vrot.lane.b32.xlu0 %v337, 96
        %v942 = vpop.permute.xlu0 %941
        %943 = vrot.lane.b32.xlu0 %v412, 96
        %v944 = vpop.permute.xlu0 %943
        %945 = vrot.lane.b32.xlu0 %v340, 96
        %v946 = vpop.permute.xlu0 %945
        %947 = vrot.lane.b32.xlu0 %v413, 96
        %v948 = vpop.permute.xlu0 %947
        %949 = vrot.lane.b32.xlu0 %v343, 96
        %v950 = vpop.permute.xlu0 %949
        %951 = vrot.lane.b32.xlu0 %v414, 96
        %v952 = vpop.permute.xlu0 %951
        %953 = vrot.lane.b32.xlu0 %v346, 96
        %v954 = vpop.permute.xlu0 %953
        %955 = vrot.lane.b32.xlu0 %v415, 96
        %v956 = vpop.permute.xlu0 %955
        %957 = vrot.lane.b32.xlu0 %v349, 96
        %v958 = vpop.permute.xlu0 %957
        %991 = vrot.lane.b32.xlu0 %v554, 32
        %v992 = vpop.permute.xlu0 %991
        %993 = vrot.lane.b32.xlu0 %v556, 32
        %v994 = vpop.permute.xlu0 %993
        %995 = vrot.lane.b32.xlu0 %v559, 32
        %v996 = vpop.permute.xlu0 %995
        %997 = vrot.lane.b32.xlu0 %v561, 32
        %v998 = vpop.permute.xlu0 %997
        %999 = vrot.lane.b32.xlu0 %v564, 32
        %v1000 = vpop.permute.xlu0 %999
        %1001 = vrot.lane.b32.xlu0 %v566, 32
        %v1002 = vpop.permute.xlu0 %1001
        %1003 = vrot.lane.b32.xlu0 %v569, 32
        %v1004 = vpop.permute.xlu0 %1003
        %1005 = vrot.lane.b32.xlu0 %v571, 32
        %v1006 = vpop.permute.xlu0 %1005
        %1007 = vrot.lane.b32.xlu0 %v574, 32
        %v1008 = vpop.permute.xlu0 %1007
        %1009 = vrot.lane.b32.xlu0 %v576, 32
        %v1010 = vpop.permute.xlu0 %1009
        %1011 = vrot.lane.b32.xlu0 %v579, 32
        %v1012 = vpop.permute.xlu0 %1011
        %1013 = vrot.lane.b32.xlu0 %v581, 32
        %v1014 = vpop.permute.xlu0 %1013
        %1015 = vrot.lane.b32.xlu0 %v584, 32
        %v1016 = vpop.permute.xlu0 %1015
        %1017 = vrot.lane.b32.xlu0 %v586, 32
        %v1018 = vpop.permute.xlu0 %1017
        %1019 = vrot.lane.b32.xlu0 %v589, 32
        %v1020 = vpop.permute.xlu0 %1019
        %1021 = vrot.lane.b32.xlu0 %v591, 32
        %v1022 = vpop.permute.xlu0 %1021
        %1023 = vrot.lane.b32.xlu0 %v594, 32
        %v1024 = vpop.permute.xlu0 %1023
        %1025 = vrot.lane.b32.xlu0 %v596, 32
        %v1026 = vpop.permute.xlu0 %1025
        %1027 = vrot.lane.b32.xlu0 %v599, 32
        %v1028 = vpop.permute.xlu0 %1027
        %1029 = vrot.lane.b32.xlu0 %v601, 32
        %v1030 = vpop.permute.xlu0 %1029
        %1031 = vrot.lane.b32.xlu0 %v604, 32
        %v1032 = vpop.permute.xlu0 %1031
        %1033 = vrot.lane.b32.xlu0 %v606, 32
        %v1034 = vpop.permute.xlu0 %1033
        %1035 = vrot.lane.b32.xlu0 %v609, 32
        %v1036 = vpop.permute.xlu0 %1035
        %1037 = vrot.lane.b32.xlu0 %v611, 32
        %v1038 = vpop.permute.xlu0 %1037
        %1039 = vrot.lane.b32.xlu0 %v614, 32
        %v1040 = vpop.permute.xlu0 %1039
        %1041 = vrot.lane.b32.xlu0 %v616, 32
        %v1042 = vpop.permute.xlu0 %1041
        %1043 = vrot.lane.b32.xlu0 %v619, 32
        %v1044 = vpop.permute.xlu0 %1043
        %1045 = vrot.lane.b32.xlu0 %v621, 32
        %v1046 = vpop.permute.xlu0 %1045
        %1047 = vrot.lane.b32.xlu0 %v624, 32
        %v1048 = vpop.permute.xlu0 %1047
        %1049 = vrot.lane.b32.xlu0 %v626, 32
        %v1050 = vpop.permute.xlu0 %1049
        %1051 = vrot.lane.b32.xlu0 %v668, 32
        %v1052 = vpop.permute.xlu0 %1051
        %1053 = vrot.lane.b32.xlu0 %v670, 32
        %v1054 = vpop.permute.xlu0 %1053
        %1087 = vrot.lane.b32.xlu0 %v401, 64
        %v1088 = vpop.permute.xlu0 %1087
        %1089 = vrot.lane.b32.xlu0 %v307, 64
        %v1090 = vpop.permute.xlu0 %1089
        %1091 = vrot.lane.b32.xlu0 %v402, 64
        %v1092 = vpop.permute.xlu0 %1091
        %1093 = vrot.lane.b32.xlu0 %v310, 64
        %v1094 = vpop.permute.xlu0 %1093
        %1095 = vrot.lane.b32.xlu0 %v403, 64
        %v1096 = vpop.permute.xlu0 %1095
        %1097 = vrot.lane.b32.xlu0 %v313, 64
        %v1098 = vpop.permute.xlu0 %1097
        %1099 = vrot.lane.b32.xlu0 %v404, 64
        %v1100 = vpop.permute.xlu0 %1099
        %1101 = vrot.lane.b32.xlu0 %v316, 64
        %v1102 = vpop.permute.xlu0 %1101
        %1103 = vrot.lane.b32.xlu0 %v405, 64
        %v1104 = vpop.permute.xlu0 %1103
        %1105 = vrot.lane.b32.xlu0 %v319, 64
        %v1106 = vpop.permute.xlu0 %1105
        %1107 = vrot.lane.b32.xlu0 %v406, 64
        %v1108 = vpop.permute.xlu0 %1107
        %1109 = vrot.lane.b32.xlu0 %v322, 64
        %v1110 = vpop.permute.xlu0 %1109
        %1111 = vrot.lane.b32.xlu0 %v407, 64
        %v1112 = vpop.permute.xlu0 %1111
        %1113 = vrot.lane.b32.xlu0 %v325, 64
        %v1114 = vpop.permute.xlu0 %1113
        %1115 = vrot.lane.b32.xlu0 %v408, 64
        %v1116 = vpop.permute.xlu0 %1115
        %1117 = vrot.lane.b32.xlu0 %v328, 64
        %v1118 = vpop.permute.xlu0 %1117
        %1119 = vrot.lane.b32.xlu0 %v409, 64
        %v1120 = vpop.permute.xlu0 %1119
        %1121 = vrot.lane.b32.xlu0 %v331, 64
        %v1122 = vpop.permute.xlu0 %1121
        %1123 = vrot.lane.b32.xlu0 %v410, 64
        %v1124 = vpop.permute.xlu0 %1123
        %1125 = vrot.lane.b32.xlu0 %v334, 64
        %v1126 = vpop.permute.xlu0 %1125
        %1127 = vrot.lane.b32.xlu0 %v411, 64
        %v1128 = vpop.permute.xlu0 %1127
        %1129 = vrot.lane.b32.xlu0 %v337, 64
        %v1130 = vpop.permute.xlu0 %1129
        %1131 = vrot.lane.b32.xlu0 %v412, 64
        %v1132 = vpop.permute.xlu0 %1131
        %1133 = vrot.lane.b32.xlu0 %v340, 64
        %v1134 = vpop.permute.xlu0 %1133
        %1135 = vrot.lane.b32.xlu0 %v413, 64
        %v1136 = vpop.permute.xlu0 %1135
        %1137 = vrot.lane.b32.xlu0 %v343, 64
        %v1138 = vpop.permute.xlu0 %1137
        %1139 = vrot.lane.b32.xlu0 %v414, 64
        %v1140 = vpop.permute.xlu0 %1139
        %1141 = vrot.lane.b32.xlu0 %v346, 64
        %v1142 = vpop.permute.xlu0 %1141
        %1143 = vrot.lane.b32.xlu0 %v415, 64
        %v1144 = vpop.permute.xlu0 %1143
        %1145 = vrot.lane.b32.xlu0 %v349, 64
        %v1146 = vpop.permute.xlu0 %1145
        %1147 = vrot.lane.b32.xlu0 %v399, 64
        %v1148 = vpop.permute.xlu0 %1147
        %1149 = vrot.lane.b32.xlu0 %v301, 64
        %v1150 = vpop.permute.xlu0 %1149
        %1183 = vrot.lane.b32.xlu0 %v478, 96
        %v1184 = vpop.permute.xlu0 %1183
        %1185 = vrot.lane.b32.xlu0 %v480, 96
        %v1186 = vpop.permute.xlu0 %1185
        %1187 = vrot.lane.b32.xlu0 %v483, 96
        %v1188 = vpop.permute.xlu0 %1187
        %1189 = vrot.lane.b32.xlu0 %v485, 96
        %v1190 = vpop.permute.xlu0 %1189
        %1191 = vrot.lane.b32.xlu0 %v488, 96
        %v1192 = vpop.permute.xlu0 %1191
        %1193 = vrot.lane.b32.xlu0 %v490, 96
        %v1194 = vpop.permute.xlu0 %1193
        %1195 = vrot.lane.b32.xlu0 %v493, 96
        %v1196 = vpop.permute.xlu0 %1195
        %1197 = vrot.lane.b32.xlu0 %v495, 96
        %v1198 = vpop.permute.xlu0 %1197
        %1199 = vrot.lane.b32.xlu0 %v498, 96
        %v1200 = vpop.permute.xlu0 %1199
        %1201 = vrot.lane.b32.xlu0 %v500, 96
        %v1202 = vpop.permute.xlu0 %1201
        %1203 = vrot.lane.b32.xlu0 %v503, 96
        %v1204 = vpop.permute.xlu0 %1203
        %1205 = vrot.lane.b32.xlu0 %v505, 96
        %v1206 = vpop.permute.xlu0 %1205
        %1207 = vrot.lane.b32.xlu0 %v508, 96
        %v1208 = vpop.permute.xlu0 %1207
        %1209 = vrot.lane.b32.xlu0 %v510, 96
        %v1210 = vpop.permute.xlu0 %1209
        %1211 = vrot.lane.b32.xlu0 %v513, 96
        %v1212 = vpop.permute.xlu0 %1211
        %1213 = vrot.lane.b32.xlu0 %v515, 96
        %v1214 = vpop.permute.xlu0 %1213
        %1215 = vrot.lane.b32.xlu0 %v518, 96
        %v1216 = vpop.permute.xlu0 %1215
        %1217 = vrot.lane.b32.xlu0 %v520, 96
        %v1218 = vpop.permute.xlu0 %1217
        %1219 = vrot.lane.b32.xlu0 %v523, 96
        %v1220 = vpop.permute.xlu0 %1219
        %1221 = vrot.lane.b32.xlu0 %v525, 96
        %v1222 = vpop.permute.xlu0 %1221
        %1223 = vrot.lane.b32.xlu0 %v528, 96
        %v1224 = vpop.permute.xlu0 %1223
        %1225 = vrot.lane.b32.xlu0 %v530, 96
        %v1226 = vpop.permute.xlu0 %1225
        %1227 = vrot.lane.b32.xlu0 %v533, 96
        %v1228 = vpop.permute.xlu0 %1227
        %1229 = vrot.lane.b32.xlu0 %v535, 96
        %v1230 = vpop.permute.xlu0 %1229
        %1231 = vrot.lane.b32.xlu0 %v538, 96
        %v1232 = vpop.permute.xlu0 %1231
        %1233 = vrot.lane.b32.xlu0 %v540, 96
        %v1234 = vpop.permute.xlu0 %1233
        %1235 = vrot.lane.b32.xlu0 %v543, 96
        %v1236 = vpop.permute.xlu0 %1235
        %1237 = vrot.lane.b32.xlu0 %v545, 96
        %v1238 = vpop.permute.xlu0 %1237
        %1239 = vrot.lane.b32.xlu0 %v631, 96
        %v1240 = vpop.permute.xlu0 %1239
        %1241 = vrot.lane.b32.xlu0 %v633, 96
        %v1242 = vpop.permute.xlu0 %1241
        %1243 = vrot.lane.b32.xlu0 %v468, 96
        %v1244 = vpop.permute.xlu0 %1243
        %1245 = vrot.lane.b32.xlu0 %v470, 96
        %v1246 = vpop.permute.xlu0 %1245
        %vm1279 = vcmask 261120
        %v1280 = vsel %vm1279, %v399, %v704
        %v1281 = vsel %vm1279, %v301, %v706
        %v1282 = vsel %vm1279, %v400, %v708
        %v1283 = vsel %vm1279, %v304, %v710
        %v1284 = vsel %vm1279, %v401, %v712
        %v1285 = vsel %vm1279, %v307, %v714
        %v1286 = vsel %vm1279, %v402, %v716
        %v1287 = vsel %vm1279, %v310, %v718
        %v1288 = vsel %vm1279, %v403, %v720
        %v1289 = vsel %vm1279, %v313, %v722
        %v1290 = vsel %vm1279, %v404, %v724
        %v1291 = vsel %vm1279, %v316, %v726
        %v1292 = vsel %vm1279, %v405, %v728
        %v1293 = vsel %vm1279, %v319, %v730
        %v1294 = vsel %vm1279, %v406, %v732
        %v1295 = vsel %vm1279, %v322, %v734
        %v1296 = vsel %vm1279, %v407, %v736
        %v1297 = vsel %vm1279, %v325, %v738
        %v1298 = vsel %vm1279, %v408, %v740
        %v1299 = vsel %vm1279, %v328, %v742
        %v1300 = vsel %vm1279, %v409, %v744
        %v1301 = vsel %vm1279, %v331, %v746
        %v1302 = vsel %vm1279, %v410, %v748
        %v1303 = vsel %vm1279, %v334, %v750
        %v1304 = vsel %vm1279, %v411, %v752
        %v1305 = vsel %vm1279, %v337, %v754
        %v1306 = vsel %vm1279, %v412, %v756
        %v1307 = vsel %vm1279, %v340, %v758
        %v1308 = vsel %vm1279, %v413, %v760
        %v1309 = vsel %vm1279, %v343, %v762
        %v1310 = vsel %vm1279, %v414, %v764
        %v1311 = vsel %vm1279, %v346, %v766
        %vm1312 = vcmask 523264
        %v1313 = vsel %vm1312, %v1280, %v800
        %v1314 = vsel %vm1312, %v1281, %v802
        %v1315 = vsel %vm1312, %v1282, %v804
        %v1316 = vsel %vm1312, %v1283, %v806
        %v1317 = vsel %vm1312, %v1284, %v808
        %v1318 = vsel %vm1312, %v1285, %v810
        %v1319 = vsel %vm1312, %v1286, %v812
        %v1320 = vsel %vm1312, %v1287, %v814
        %v1321 = vsel %vm1312, %v1288, %v816
        %v1322 = vsel %vm1312, %v1289, %v818
        %v1323 = vsel %vm1312, %v1290, %v820
        %v1324 = vsel %vm1312, %v1291, %v822
        %v1325 = vsel %vm1312, %v1292, %v824
        %v1326 = vsel %vm1312, %v1293, %v826
        %v1327 = vsel %vm1312, %v1294, %v828
        %v1328 = vsel %vm1312, %v1295, %v830
        %v1329 = vsel %vm1312, %v1296, %v832
        %v1330 = vsel %vm1312, %v1297, %v834
        %v1331 = vsel %vm1312, %v1298, %v836
        %v1332 = vsel %vm1312, %v1299, %v838
        %v1333 = vsel %vm1312, %v1300, %v840
        %v1334 = vsel %vm1312, %v1301, %v842
        %v1335 = vsel %vm1312, %v1302, %v844
        %v1336 = vsel %vm1312, %v1303, %v846
        %v1337 = vsel %vm1312, %v1304, %v848
        %v1338 = vsel %vm1312, %v1305, %v850
        %v1339 = vsel %vm1312, %v1306, %v852
        %v1340 = vsel %vm1312, %v1307, %v854
        %v1341 = vsel %vm1312, %v1308, %v856
        %v1342 = vsel %vm1312, %v1309, %v858
        %v1343 = vsel %vm1312, %v1310, %v860
        %v1344 = vsel %vm1312, %v1311, %v862
        %vm1345 = vcmask 785408
        %v1346 = vsel %vm1345, %v1313, %v896
        %v1347 = vsel %vm1345, %v1314, %v898
        %v1348 = vsel %vm1345, %v1315, %v900
        %v1349 = vsel %vm1345, %v1316, %v902
        %v1350 = vsel %vm1345, %v1317, %v904
        %v1351 = vsel %vm1345, %v1318, %v906
        %v1352 = vsel %vm1345, %v1319, %v908
        %v1353 = vsel %vm1345, %v1320, %v910
        %v1354 = vsel %vm1345, %v1321, %v912
        %v1355 = vsel %vm1345, %v1322, %v914
        %v1356 = vsel %vm1345, %v1323, %v916
        %v1357 = vsel %vm1345, %v1324, %v918
        %v1358 = vsel %vm1345, %v1325, %v920
        %v1359 = vsel %vm1345, %v1326, %v922
        %v1360 = vsel %vm1345, %v1327, %v924
        %v1361 = vsel %vm1345, %v1328, %v926
        %v1362 = vsel %vm1345, %v1329, %v928
        %v1363 = vsel %vm1345, %v1330, %v930
        %v1364 = vsel %vm1345, %v1331, %v932
        %v1365 = vsel %vm1345, %v1332, %v934
        %v1366 = vsel %vm1345, %v1333, %v936
        %v1367 = vsel %vm1345, %v1334, %v938
        %v1368 = vsel %vm1345, %v1335, %v940
        %v1369 = vsel %vm1345, %v1336, %v942
        %v1370 = vsel %vm1345, %v1337, %v944
        %v1371 = vsel %vm1345, %v1338, %v946
        %v1372 = vsel %vm1345, %v1339, %v948
        %v1373 = vsel %vm1345, %v1340, %v950
        %v1374 = vsel %vm1345, %v1341, %v952
        %v1375 = vsel %vm1345, %v1342, %v954
        %v1376 = vsel %vm1345, %v1343, %v956
        %v1377 = vsel %vm1345, %v1344, %v958
        %v1378 = vsel %vm1279, %v473, %v992
        %v1379 = vsel %vm1279, %v475, %v994
        %v1380 = vsel %vm1279, %v478, %v996
        %v1381 = vsel %vm1279, %v480, %v998
        %v1382 = vsel %vm1279, %v483, %v1000
        %v1383 = vsel %vm1279, %v485, %v1002
        %v1384 = vsel %vm1279, %v488, %v1004
        %v1385 = vsel %vm1279, %v490, %v1006
        %v1386 = vsel %vm1279, %v493, %v1008
        %v1387 = vsel %vm1279, %v495, %v1010
        %v1388 = vsel %vm1279, %v498, %v1012
        %v1389 = vsel %vm1279, %v500, %v1014
        %v1390 = vsel %vm1279, %v503, %v1016
        %v1391 = vsel %vm1279, %v505, %v1018
        %v1392 = vsel %vm1279, %v508, %v1020
        %v1393 = vsel %vm1279, %v510, %v1022
        %v1394 = vsel %vm1279, %v513, %v1024
        %v1395 = vsel %vm1279, %v515, %v1026
        %v1396 = vsel %vm1279, %v518, %v1028
        %v1397 = vsel %vm1279, %v520, %v1030
        %v1398 = vsel %vm1279, %v523, %v1032
        %v1399 = vsel %vm1279, %v525, %v1034
        %v1400 = vsel %vm1279, %v528, %v1036
        %v1401 = vsel %vm1279, %v530, %v1038
        %v1402 = vsel %vm1279, %v533, %v1040
        %v1403 = vsel %vm1279, %v535, %v1042
        %v1404 = vsel %vm1279, %v538, %v1044
        %v1405 = vsel %vm1279, %v540, %v1046
        %v1406 = vsel %vm1279, %v543, %v1048
        %v1407 = vsel %vm1279, %v545, %v1050
        %v1408 = vsel %vm1279, %v631, %v1052
        %v1409 = vsel %vm1279, %v633, %v1054
        %v1410 = vsel %vm1312, %v1378, %v1088
        %v1411 = vsel %vm1312, %v1379, %v1090
        %v1412 = vsel %vm1312, %v1380, %v1092
        %v1413 = vsel %vm1312, %v1381, %v1094
        %v1414 = vsel %vm1312, %v1382, %v1096
        %v1415 = vsel %vm1312, %v1383, %v1098
        %v1416 = vsel %vm1312, %v1384, %v1100
        %v1417 = vsel %vm1312, %v1385, %v1102
        %v1418 = vsel %vm1312, %v1386, %v1104
        %v1419 = vsel %vm1312, %v1387, %v1106
        %v1420 = vsel %vm1312, %v1388, %v1108
        %v1421 = vsel %vm1312, %v1389, %v1110
        %v1422 = vsel %vm1312, %v1390, %v1112
        %v1423 = vsel %vm1312, %v1391, %v1114
        %v1424 = vsel %vm1312, %v1392, %v1116
        %v1425 = vsel %vm1312, %v1393, %v1118
        %v1426 = vsel %vm1312, %v1394, %v1120
        %v1427 = vsel %vm1312, %v1395, %v1122
        %v1428 = vsel %vm1312, %v1396, %v1124
        %v1429 = vsel %vm1312, %v1397, %v1126
        %v1430 = vsel %vm1312, %v1398, %v1128
        %v1431 = vsel %vm1312, %v1399, %v1130
        %v1432 = vsel %vm1312, %v1400, %v1132
        %v1433 = vsel %vm1312, %v1401, %v1134
        %v1434 = vsel %vm1312, %v1402, %v1136
        %v1435 = vsel %vm1312, %v1403, %v1138
        %v1436 = vsel %vm1312, %v1404, %v1140
        %v1437 = vsel %vm1312, %v1405, %v1142
        %v1438 = vsel %vm1312, %v1406, %v1144
        %v1439 = vsel %vm1312, %v1407, %v1146
        %v1440 = vsel %vm1312, %v1408, %v1148
        %v1441 = vsel %vm1312, %v1409, %v1150
        %v1442 = vsel %vm1345, %v1410, %v1184
        %v1443 = vsel %vm1345, %v1411, %v1186
        %v1444 = vsel %vm1345, %v1412, %v1188
        %v1445 = vsel %vm1345, %v1413, %v1190
        %v1446 = vsel %vm1345, %v1414, %v1192
        %v1447 = vsel %vm1345, %v1415, %v1194
        %v1448 = vsel %vm1345, %v1416, %v1196
        %v1449 = vsel %vm1345, %v1417, %v1198
        %v1450 = vsel %vm1345, %v1418, %v1200
        %v1451 = vsel %vm1345, %v1419, %v1202
        %v1452 = vsel %vm1345, %v1420, %v1204
        %v1453 = vsel %vm1345, %v1421, %v1206
        %v1454 = vsel %vm1345, %v1422, %v1208
        %v1455 = vsel %vm1345, %v1423, %v1210
        %v1456 = vsel %vm1345, %v1424, %v1212
        %v1457 = vsel %vm1345, %v1425, %v1214
        %v1458 = vsel %vm1345, %v1426, %v1216
        %v1459 = vsel %vm1345, %v1427, %v1218
        %v1460 = vsel %vm1345, %v1428, %v1220
        %v1461 = vsel %vm1345, %v1429, %v1222
        %v1462 = vsel %vm1345, %v1430, %v1224
        %v1463 = vsel %vm1345, %v1431, %v1226
        %v1464 = vsel %vm1345, %v1432, %v1228
        %v1465 = vsel %vm1345, %v1433, %v1230
        %v1466 = vsel %vm1345, %v1434, %v1232
        %v1467 = vsel %vm1345, %v1435, %v1234
        %v1468 = vsel %vm1345, %v1436, %v1236
        %v1469 = vsel %vm1345, %v1437, %v1238
        %v1470 = vsel %vm1345, %v1438, %v1240
        %v1471 = vsel %vm1345, %v1439, %v1242
        %v1472 = vsel %vm1345, %v1440, %v1244
        %v1473 = vsel %vm1345, %v1441, %v1246
        %v1474 = vpack.c.bf16 %v1347, %v1346
        %v1475 = vpack.c.bf16 %v1443, %v1442
        %v1476 = vpack.c.bf16 %v561, %v559
        %v1477 = vpack.c.bf16 %v1349, %v1348
        %v1478 = vpack.c.bf16 %v1445, %v1444
        %v1479 = vpack.c.bf16 %v566, %v564
        %v1480 = vpack.c.bf16 %v1351, %v1350
        %v1481 = vpack.c.bf16 %v1447, %v1446
        %v1482 = vpack.c.bf16 %v571, %v569
        %v1483 = vpack.c.bf16 %v1353, %v1352
        %v1484 = vpack.c.bf16 %v1449, %v1448
        %v1485 = vpack.c.bf16 %v576, %v574
        %v1486 = vpack.c.bf16 %v1355, %v1354
        %v1487 = vpack.c.bf16 %v1451, %v1450
        %v1488 = vpack.c.bf16 %v581, %v579
        %v1489 = vpack.c.bf16 %v1357, %v1356
        %v1490 = vpack.c.bf16 %v1453, %v1452
        %v1491 = vpack.c.bf16 %v586, %v584
        %v1492 = vpack.c.bf16 %v1359, %v1358
        %v1493 = vpack.c.bf16 %v1455, %v1454
        %v1494 = vpack.c.bf16 %v591, %v589
        %v1495 = vpack.c.bf16 %v1361, %v1360
        %v1496 = vpack.c.bf16 %v1457, %v1456
        %v1497 = vpack.c.bf16 %v596, %v594
        %v1498 = vpack.c.bf16 %v1363, %v1362
        %v1499 = vpack.c.bf16 %v1459, %v1458
        %v1500 = vpack.c.bf16 %v601, %v599
        %v1501 = vpack.c.bf16 %v1365, %v1364
        %v1502 = vpack.c.bf16 %v1461, %v1460
        %v1503 = vpack.c.bf16 %v606, %v604
        %v1504 = vpack.c.bf16 %v1367, %v1366
        %v1505 = vpack.c.bf16 %v1463, %v1462
        %v1506 = vpack.c.bf16 %v611, %v609
        %v1507 = vpack.c.bf16 %v1369, %v1368
        %v1508 = vpack.c.bf16 %v1465, %v1464
        %v1509 = vpack.c.bf16 %v616, %v614
        %v1510 = vpack.c.bf16 %v1371, %v1370
        %v1511 = vpack.c.bf16 %v1467, %v1466
        %v1512 = vpack.c.bf16 %v621, %v619
        %v1513 = vpack.c.bf16 %v1373, %v1372
        %v1514 = vpack.c.bf16 %v1469, %v1468
        %v1515 = vpack.c.bf16 %v626, %v624
        %v1516 = vpack.c.bf16 %v1375, %v1374
        %v1517 = vpack.c.bf16 %v1471, %v1470
        %v1518 = vpack.c.bf16 %v670, %v668
        %v1519 = vpack.c.bf16 %v1377, %v1376
        %v1520 = vpack.c.bf16 %v1473, %v1472
        %v1521 = vpack.c.bf16 %v551, %v549
        %v1523 = vlaneseq
        %v1524 = vshrl.u32 %v1523, 7
        %v1525 = vsub.s32 0, %v1524
        %v1526 = vrot.slane %v265, %v1525
        %v1564 = vunpack.c.l.b16 %v229
        %v1565 = vunpack.c.l.b16 %v230
        %v1566 = vunpack.c.l.b16 %v231
        %v1567 = vunpack.c.l.b16 %v232
        %v1568 = vunpack.c.l.b16 %v233
        %v1569 = vunpack.c.l.b16 %v234
        %v1570 = vunpack.c.l.b16 %v235
        %v1571 = vunpack.c.l.b16 %v236
        %v1572 = vunpack.c.l.b16 %v237
        %v1573 = vunpack.c.l.b16 %v238
        %v1574 = vunpack.c.l.b16 %v239
        %v1575 = vunpack.c.l.b16 %v240
        %v1576 = vunpack.c.l.b16 %v241
        %v1577 = vunpack.c.l.b16 %v242
        %v1578 = vunpack.c.l.b16 %v243
        %v1579 = vunpack.c.l.b16 %v244
        %v1580 = vunpack.c.l.b16 %v245
        %v1581 = vunpack.c.l.b16 %v246
        %v1582 = vunpack.c.l.b16 %v247
        %v1583 = vunpack.c.l.b16 %v248
        %v1584 = vunpack.c.l.b16 %v249
        %v1585 = vunpack.c.l.b16 %v250
        %v1586 = vunpack.c.l.b16 %v251
        %v1587 = vunpack.c.l.b16 %v252
        %v1588 = vunpack.c.l.b16 %v253
        %v1589 = vunpack.c.l.b16 %v254
        %v1590 = vunpack.c.l.b16 %v255
        %v1591 = vunpack.c.l.b16 %v256
        %v1592 = vunpack.c.l.b16 %v257
        %v1593 = vunpack.c.l.b16 %v258
        %v1594 = vunpack.c.l.b16 %v259
        %v1595 = vunpack.c.l.b16 %v260
        %v1596 = vunpack.c.l.b16 %v261
        %v1597 = vunpack.c.l.b16 %v262
        %v1598 = vunpack.c.l.b16 %v263
        %v1599 = vunpack.c.l.b16 %v264
        %v1600 = vpack.c.b16 %v1565, %v1564
        %v1601 = vpack.c.b16 %v1567, %v1566
        %v1602 = vpack.c.b16 %v1569, %v1568
        %v1603 = vpack.c.b16 %v1571, %v1570
        %v1604 = vpack.c.b16 %v1573, %v1572
        %v1605 = vpack.c.b16 %v1575, %v1574
        %v1606 = vpack.c.b16 %v1577, %v1576
        %v1607 = vpack.c.b16 %v1579, %v1578
        %v1608 = vpack.c.b16 %v1581, %v1580
        %v1609 = vpack.c.b16 %v1583, %v1582
        %v1610 = vpack.c.b16 %v1585, %v1584
        %v1611 = vpack.c.b16 %v1587, %v1586
        %v1612 = vpack.c.b16 %v1589, %v1588
        %v1613 = vpack.c.b16 %v1591, %v1590
        %v1614 = vpack.c.b16 %v1593, %v1592
        %v1615 = vpack.c.b16 %v1595, %v1594
        %v1616 = vpack.c.b16 %v1597, %v1596
        %v1617 = vpack.c.b16 %v1599, %v1598
        %v1637 = vsel %vm1279, %v1476, 0
        %v1640 = vsel %vm1279, %v1479, 0
        %v1643 = vsel %vm1279, %v1482, 0
        %v1646 = vsel %vm1279, %v1485, 0
        %v1649 = vsel %vm1279, %v1488, 0
        %v1652 = vsel %vm1279, %v1491, 0
        %v1655 = vsel %vm1279, %v1494, 0
        %v1658 = vsel %vm1279, %v1497, 0
        %v1661 = vsel %vm1279, %v1500, 0
        %v1664 = vsel %vm1279, %v1503, 0
        %v1667 = vsel %vm1279, %v1506, 0
        %v1670 = vsel %vm1279, %v1509, 0
        %v1673 = vsel %vm1279, %v1512, 0
        %v1676 = vsel %vm1279, %v1515, 0
        %v1679 = vsel %vm1279, %v1518, 0
        %v1682 = vsel %vm1279, %v1521, 0
        %1684 = vmatprep.subr.bf16.mxu0 0
        %1685 = vmatpush1.bf16.msra.mxu0 %v1607
        %1686 = vmatprep.subr.bf16.mxu0 0
        %1687 = vmatpush1.bf16.msra.mxu0 %v1606
        %1688 = vmatprep.subr.bf16.mxu0 0
        %1689 = vmatpush1.bf16.msra.mxu0 %v1605
        %1690 = vmatprep.subr.bf16.mxu0 0
        %1691 = vmatpush1.bf16.msra.mxu0 %v1604
        %1692 = vmatprep.subr.bf16.mxu0 0
        %1693 = vmatpush1.bf16.msra.mxu0 %v1603
        %1694 = vmatprep.subr.bf16.mxu0 0
        %1695 = vmatpush1.bf16.msra.mxu0 %v1602
        %1696 = vmatprep.subr.bf16.mxu0 0
        %1697 = vmatpush1.bf16.msra.mxu0 %v1601
        %1698 = vmatprep.subr.bf16.mxu0 0
        %1699 = vmatpush1.bf16.msra.mxu0 %v1600
        %1700 = vmatprep.subr.bf16.mxu0 0
        %1701 = vmatpush2.bf16.msra.mxu0 %v1615
        %1702 = vmatprep.subr.bf16.mxu0 0
        %1703 = vmatpush2.bf16.msra.mxu0 %v1614
        %1704 = vmatprep.subr.bf16.mxu0 0
        %1705 = vmatpush2.bf16.msra.mxu0 %v1613
        %1706 = vmatprep.subr.bf16.mxu0 0
        %1707 = vmatpush2.bf16.msra.mxu0 %v1612
        %1708 = vmatprep.subr.bf16.mxu0 0
        %1709 = vmatpush2.bf16.msra.mxu0 %v1611
        %1710 = vmatprep.subr.bf16.mxu0 0
        %1711 = vmatpush2.bf16.msra.mxu0 %v1610
        %1712 = vmatprep.subr.bf16.mxu0 0
        %1713 = vmatpush2.bf16.msra.mxu0 %v1609
        %1714 = vmatprep.subr.bf16.mxu0 0
        %1715 = vmatpush2.bf16.msra.mxu0 %v1608
        %1716 = vmatprep.mubr.bf16.mxu0 %v1475
        %1717 = vmatmul.mubr.bf16.gmra.mxu0 %v1474
        %v1718 = vpop.f32.mrf.mxu0
        %v1719 = vadd.f32 %v1526, %v1718
        %v1720 = vpop.f32.mrf.mxu0
        %v1721 = vpop.f32.mrf.mxu0
        %v1722 = vadd.f32 %v1526, %v1721
        %v1723 = vpop.f32.mrf.mxu0
        %1724 = vmatprep.mubr.bf16.mxu0 %v1478
        %1725 = vmatmul.mubr.bf16.gmra.mxu0 %v1477
        %v1726 = vpop.f32.mrf.mxu0
        %v1727 = vadd.f32 %v1526, %v1726
        %v1728 = vpop.f32.mrf.mxu0
        %v1729 = vpop.f32.mrf.mxu0
        %v1730 = vadd.f32 %v1526, %v1729
        %v1731 = vpop.f32.mrf.mxu0
        %1732 = vmatprep.mubr.bf16.mxu0 %v1481
        %1733 = vmatmul.mubr.bf16.gmra.mxu0 %v1480
        %v1734 = vpop.f32.mrf.mxu0
        %v1735 = vadd.f32 %v1526, %v1734
        %v1736 = vpop.f32.mrf.mxu0
        %v1737 = vpop.f32.mrf.mxu0
        %v1738 = vadd.f32 %v1526, %v1737
        %v1739 = vpop.f32.mrf.mxu0
        %1740 = vmatprep.mubr.bf16.mxu0 %v1484
        %1741 = vmatmul.mubr.bf16.gmra.mxu0 %v1483
        %v1742 = vpop.f32.mrf.mxu0
        %v1743 = vadd.f32 %v1526, %v1742
        %v1744 = vpop.f32.mrf.mxu0
        %v1745 = vpop.f32.mrf.mxu0
        %v1746 = vadd.f32 %v1526, %v1745
        %v1747 = vpop.f32.mrf.mxu0
        %1748 = vmatprep.mubr.bf16.mxu0 %v1487
        %1749 = vmatmul.mubr.bf16.gmra.mxu0 %v1486
        %v1750 = vpop.f32.mrf.mxu0
        %v1751 = vadd.f32 %v1526, %v1750
        %v1752 = vpop.f32.mrf.mxu0
        %v1753 = vpop.f32.mrf.mxu0
        %v1754 = vadd.f32 %v1526, %v1753
        %v1755 = vpop.f32.mrf.mxu0
        %1756 = vmatprep.mubr.bf16.mxu0 %v1490
        %1757 = vmatmul.mubr.bf16.gmra.mxu0 %v1489
        %v1758 = vpop.f32.mrf.mxu0
        %v1759 = vadd.f32 %v1526, %v1758
        %v1760 = vpop.f32.mrf.mxu0
        %v1761 = vpop.f32.mrf.mxu0
        %v1762 = vadd.f32 %v1526, %v1761
        %v1763 = vpop.f32.mrf.mxu0
        %1764 = vmatprep.mubr.bf16.mxu0 %v1493
        %1765 = vmatmul.mubr.bf16.gmra.mxu0 %v1492
        %v1766 = vpop.f32.mrf.mxu0
        %v1767 = vadd.f32 %v1526, %v1766
        %v1768 = vpop.f32.mrf.mxu0
        %v1769 = vpop.f32.mrf.mxu0
        %v1770 = vadd.f32 %v1526, %v1769
        %v1771 = vpop.f32.mrf.mxu0
        %1772 = vmatprep.mubr.bf16.mxu0 %v1496
        %1773 = vmatmul.mubr.bf16.gmra.mxu0 %v1495
        %v1774 = vpop.f32.mrf.mxu0
        %v1775 = vadd.f32 %v1526, %v1774
        %v1776 = vpop.f32.mrf.mxu0
        %v1777 = vpop.f32.mrf.mxu0
        %v1778 = vadd.f32 %v1526, %v1777
        %v1779 = vpop.f32.mrf.mxu0
        %1780 = vmatprep.mubr.bf16.mxu0 %v1499
        %1781 = vmatmul.mubr.bf16.gmra.mxu0 %v1498
        %v1782 = vpop.f32.mrf.mxu0
        %v1783 = vadd.f32 %v1526, %v1782
        %v1784 = vpop.f32.mrf.mxu0
        %v1785 = vpop.f32.mrf.mxu0
        %v1786 = vadd.f32 %v1526, %v1785
        %v1787 = vpop.f32.mrf.mxu0
        %1788 = vmatprep.mubr.bf16.mxu0 %v1502
        %1789 = vmatmul.mubr.bf16.gmra.mxu0 %v1501
        %v1790 = vpop.f32.mrf.mxu0
        %v1791 = vadd.f32 %v1526, %v1790
        %v1792 = vpop.f32.mrf.mxu0
        %v1793 = vpop.f32.mrf.mxu0
        %v1794 = vadd.f32 %v1526, %v1793
        %v1795 = vpop.f32.mrf.mxu0
        %1796 = vmatprep.mubr.bf16.mxu0 %v1505
        %1797 = vmatmul.mubr.bf16.gmra.mxu0 %v1504
        %v1798 = vpop.f32.mrf.mxu0
        %v1799 = vadd.f32 %v1526, %v1798
        %v1800 = vpop.f32.mrf.mxu0
        %v1801 = vpop.f32.mrf.mxu0
        %v1802 = vadd.f32 %v1526, %v1801
        %v1803 = vpop.f32.mrf.mxu0
        %1804 = vmatprep.mubr.bf16.mxu0 %v1508
        %1805 = vmatmul.mubr.bf16.gmra.mxu0 %v1507
        %v1806 = vpop.f32.mrf.mxu0
        %v1807 = vadd.f32 %v1526, %v1806
        %v1808 = vpop.f32.mrf.mxu0
        %v1809 = vpop.f32.mrf.mxu0
        %v1810 = vadd.f32 %v1526, %v1809
        %v1811 = vpop.f32.mrf.mxu0
        %1812 = vmatprep.mubr.bf16.mxu0 %v1511
        %1813 = vmatmul.mubr.bf16.gmra.mxu0 %v1510
        %v1814 = vpop.f32.mrf.mxu0
        %v1815 = vadd.f32 %v1526, %v1814
        %v1816 = vpop.f32.mrf.mxu0
        %v1817 = vpop.f32.mrf.mxu0
        %v1818 = vadd.f32 %v1526, %v1817
        %v1819 = vpop.f32.mrf.mxu0
        %1820 = vmatprep.mubr.bf16.mxu0 %v1514
        %1821 = vmatmul.mubr.bf16.gmra.mxu0 %v1513
        %v1822 = vpop.f32.mrf.mxu0
        %v1823 = vadd.f32 %v1526, %v1822
        %v1824 = vpop.f32.mrf.mxu0
        %v1825 = vpop.f32.mrf.mxu0
        %v1826 = vadd.f32 %v1526, %v1825
        %v1827 = vpop.f32.mrf.mxu0
        %1828 = vmatprep.mubr.bf16.mxu0 %v1517
        %1829 = vmatmul.mubr.bf16.gmra.mxu0 %v1516
        %v1830 = vpop.f32.mrf.mxu0
        %v1831 = vadd.f32 %v1526, %v1830
        %v1832 = vpop.f32.mrf.mxu0
        %v1833 = vpop.f32.mrf.mxu0
        %v1834 = vadd.f32 %v1526, %v1833
        %v1835 = vpop.f32.mrf.mxu0
        %1836 = vmatprep.mubr.bf16.mxu0 %v1520
        %1837 = vmatmul.mubr.bf16.gmra.mxu0 %v1519
        %v1838 = vpop.f32.mrf.mxu0
        %v1839 = vadd.f32 %v1526, %v1838
        %v1840 = vpop.f32.mrf.mxu0
        %v1841 = vpop.f32.mrf.mxu0
        %v1842 = vadd.f32 %v1526, %v1841
        %v1843 = vpop.f32.mrf.mxu0
        %1844 = vdwg.mxu0
        %1845 = vmatprep.subr.bf16.mxu0 0
        %1846 = vmatpush1.bf16.msra.mxu0 0
        %1847 = vmatprep.subr.bf16.mxu0 0
        %1848 = vmatpush1.bf16.msra.mxu0 0
        %1849 = vmatprep.subr.bf16.mxu0 0
        %1850 = vmatpush1.bf16.msra.mxu0 0
        %1851 = vmatprep.subr.bf16.mxu0 0
        %1852 = vmatpush1.bf16.msra.mxu0 0
        %1853 = vmatprep.subr.bf16.mxu0 0
        %1854 = vmatpush1.bf16.msra.mxu0 0
        %1855 = vmatprep.subr.bf16.mxu0 0
        %1856 = vmatpush1.bf16.msra.mxu0 0
        %1857 = vmatprep.subr.bf16.mxu0 0
        %1858 = vmatpush1.bf16.msra.mxu0 %v1617
        %1859 = vmatprep.subr.bf16.mxu0 0
        %1860 = vmatpush1.bf16.msra.mxu0 %v1616
        %1861 = vmatprep.subr.bf16.mxu0 0
        %1862 = vmatpush2.bf16.msra.mxu0 0
        %1863 = vmatprep.subr.bf16.mxu0 0
        %1864 = vmatpush2.bf16.msra.mxu0 0
        %1865 = vmatprep.subr.bf16.mxu0 0
        %1866 = vmatpush2.bf16.msra.mxu0 0
        %1867 = vmatprep.subr.bf16.mxu0 0
        %1868 = vmatpush2.bf16.msra.mxu0 0
        %1869 = vmatprep.subr.bf16.mxu0 0
        %1870 = vmatpush2.bf16.msra.mxu0 0
        %1871 = vmatprep.subr.bf16.mxu0 0
        %1872 = vmatpush2.bf16.msra.mxu0 0
        %1873 = vmatprep.subr.bf16.mxu0 0
        %1874 = vmatpush2.bf16.msra.mxu0 0
        %1875 = vmatprep.subr.bf16.mxu0 0
        %1876 = vmatpush2.bf16.msra.mxu0 0
        %1877 = vmatprep.mubr.bf16.mxu0 0
        %1878 = vmatmul.mubr.bf16.gmra.mxu0 %v1637
        %v1879 = vpop.f32.mrf.mxu0
        %v1880 = vadd.f32 %v1719, %v1879
        %v1881 = vpop.f32.mrf.mxu0
        %v1882 = vpop.f32.mrf.mxu0
        %v1883 = vadd.f32 %v1722, %v1882
        %v1884 = vpop.f32.mrf.mxu0
        %1885 = vmatprep.mubr.bf16.mxu0 0
        %1886 = vmatmul.mubr.bf16.gmra.mxu0 %v1640
        %v1887 = vpop.f32.mrf.mxu0
        %v1888 = vadd.f32 %v1727, %v1887
        %v1889 = vpop.f32.mrf.mxu0
        %v1890 = vpop.f32.mrf.mxu0
        %v1891 = vadd.f32 %v1730, %v1890
        %v1892 = vpop.f32.mrf.mxu0
        %1893 = vmatprep.mubr.bf16.mxu0 0
        %1894 = vmatmul.mubr.bf16.gmra.mxu0 %v1643
        %v1895 = vpop.f32.mrf.mxu0
        %v1896 = vadd.f32 %v1735, %v1895
        %v1897 = vpop.f32.mrf.mxu0
        %v1898 = vpop.f32.mrf.mxu0
        %v1899 = vadd.f32 %v1738, %v1898
        %v1900 = vpop.f32.mrf.mxu0
        %1901 = vmatprep.mubr.bf16.mxu0 0
        %1902 = vmatmul.mubr.bf16.gmra.mxu0 %v1646
        %v1903 = vpop.f32.mrf.mxu0
        %v1904 = vadd.f32 %v1743, %v1903
        %v1905 = vpop.f32.mrf.mxu0
        %v1906 = vpop.f32.mrf.mxu0
        %v1907 = vadd.f32 %v1746, %v1906
        %v1908 = vpop.f32.mrf.mxu0
        %1909 = vmatprep.mubr.bf16.mxu0 0
        %1910 = vmatmul.mubr.bf16.gmra.mxu0 %v1649
        %v1911 = vpop.f32.mrf.mxu0
        %v1912 = vadd.f32 %v1751, %v1911
        %v1913 = vpop.f32.mrf.mxu0
        %v1914 = vpop.f32.mrf.mxu0
        %v1915 = vadd.f32 %v1754, %v1914
        %v1916 = vpop.f32.mrf.mxu0
        %1917 = vmatprep.mubr.bf16.mxu0 0
        %1918 = vmatmul.mubr.bf16.gmra.mxu0 %v1652
        %v1919 = vpop.f32.mrf.mxu0
        %v1920 = vadd.f32 %v1759, %v1919
        %v1921 = vpop.f32.mrf.mxu0
        %v1922 = vpop.f32.mrf.mxu0
        %v1923 = vadd.f32 %v1762, %v1922
        %v1924 = vpop.f32.mrf.mxu0
        %1925 = vmatprep.mubr.bf16.mxu0 0
        %1926 = vmatmul.mubr.bf16.gmra.mxu0 %v1655
        %v1927 = vpop.f32.mrf.mxu0
        %v1928 = vadd.f32 %v1767, %v1927
        %v1929 = vpop.f32.mrf.mxu0
        %v1930 = vpop.f32.mrf.mxu0
        %v1931 = vadd.f32 %v1770, %v1930
        %v1932 = vpop.f32.mrf.mxu0
        %1933 = vmatprep.mubr.bf16.mxu0 0
        %1934 = vmatmul.mubr.bf16.gmra.mxu0 %v1658
        %v1935 = vpop.f32.mrf.mxu0
        %v1936 = vadd.f32 %v1775, %v1935
        %v1937 = vpop.f32.mrf.mxu0
        %v1938 = vpop.f32.mrf.mxu0
        %v1939 = vadd.f32 %v1778, %v1938
        %v1940 = vpop.f32.mrf.mxu0
        %1941 = vmatprep.mubr.bf16.mxu0 0
        %1942 = vmatmul.mubr.bf16.gmra.mxu0 %v1661
        %v1943 = vpop.f32.mrf.mxu0
        %v1944 = vadd.f32 %v1783, %v1943
        %v1945 = vpop.f32.mrf.mxu0
        %v1946 = vpop.f32.mrf.mxu0
        %v1947 = vadd.f32 %v1786, %v1946
        %v1948 = vpop.f32.mrf.mxu0
        %1949 = vmatprep.mubr.bf16.mxu0 0
        %1950 = vmatmul.mubr.bf16.gmra.mxu0 %v1664
        %v1951 = vpop.f32.mrf.mxu0
        %v1952 = vadd.f32 %v1791, %v1951
        %v1953 = vpop.f32.mrf.mxu0
        %v1954 = vpop.f32.mrf.mxu0
        %v1955 = vadd.f32 %v1794, %v1954
        %v1956 = vpop.f32.mrf.mxu0
        %1957 = vmatprep.mubr.bf16.mxu0 0
        %1958 = vmatmul.mubr.bf16.gmra.mxu0 %v1667
        %v1959 = vpop.f32.mrf.mxu0
        %v1960 = vadd.f32 %v1799, %v1959
        %v1961 = vpop.f32.mrf.mxu0
        %v1962 = vpop.f32.mrf.mxu0
        %v1963 = vadd.f32 %v1802, %v1962
        %v1964 = vpop.f32.mrf.mxu0
        %1965 = vmatprep.mubr.bf16.mxu0 0
        %1966 = vmatmul.mubr.bf16.gmra.mxu0 %v1670
        %v1967 = vpop.f32.mrf.mxu0
        %v1968 = vadd.f32 %v1807, %v1967
        %v1969 = vpop.f32.mrf.mxu0
        %v1970 = vpop.f32.mrf.mxu0
        %v1971 = vadd.f32 %v1810, %v1970
        %v1972 = vpop.f32.mrf.mxu0
        %1973 = vmatprep.mubr.bf16.mxu0 0
        %1974 = vmatmul.mubr.bf16.gmra.mxu0 %v1673
        %v1975 = vpop.f32.mrf.mxu0
        %v1976 = vadd.f32 %v1815, %v1975
        %v1977 = vpop.f32.mrf.mxu0
        %v1978 = vpop.f32.mrf.mxu0
        %v1979 = vadd.f32 %v1818, %v1978
        %v1980 = vpop.f32.mrf.mxu0
        %1981 = vmatprep.mubr.bf16.mxu0 0
        %1982 = vmatmul.mubr.bf16.gmra.mxu0 %v1676
        %v1983 = vpop.f32.mrf.mxu0
        %v1984 = vadd.f32 %v1823, %v1983
        %v1985 = vpop.f32.mrf.mxu0
        %v1986 = vpop.f32.mrf.mxu0
        %v1987 = vadd.f32 %v1826, %v1986
        %v1988 = vpop.f32.mrf.mxu0
        %1989 = vmatprep.mubr.bf16.mxu0 0
        %1990 = vmatmul.mubr.bf16.gmra.mxu0 %v1679
        %v1991 = vpop.f32.mrf.mxu0
        %v1992 = vadd.f32 %v1831, %v1991
        %v1993 = vpop.f32.mrf.mxu0
        %v1994 = vpop.f32.mrf.mxu0
        %v1995 = vadd.f32 %v1834, %v1994
        %v1996 = vpop.f32.mrf.mxu0
        %1997 = vmatprep.mubr.bf16.mxu0 0
        %1998 = vmatmul.mubr.bf16.gmra.mxu0 %v1682
        %v1999 = vpop.f32.mrf.mxu0
        %v2000 = vadd.f32 %v1839, %v1999
        %v2001 = vpop.f32.mrf.mxu0
        %v2002 = vpop.f32.mrf.mxu0
        %v2003 = vadd.f32 %v1842, %v2002
        %v2004 = vpop.f32.mrf.mxu0
        %2005 = vdwg.mxu0
        %v2006 = vld [vmem:[%s3] sm:$0x1]
        %vm2007 = vcmp.ge.f32.partialorder %v1880, 0.0
        %vm2008 = vcmp.ge.f32.partialorder %v1883, 0.0
        %vm2009 = vcmp.ge.f32.partialorder %v1888, 0.0
        %vm2010 = vcmp.ge.f32.partialorder %v1891, 0.0
        %vm2011 = vcmp.ge.f32.partialorder %v1896, 0.0
        %vm2012 = vcmp.ge.f32.partialorder %v1899, 0.0
        %vm2013 = vcmp.ge.f32.partialorder %v1904, 0.0
        %vm2014 = vcmp.ge.f32.partialorder %v1907, 0.0
        %vm2015 = vcmp.ge.f32.partialorder %v1912, 0.0
        %vm2016 = vcmp.ge.f32.partialorder %v1915, 0.0
        %vm2017 = vcmp.ge.f32.partialorder %v1920, 0.0
        %vm2018 = vcmp.ge.f32.partialorder %v1923, 0.0
        %vm2019 = vcmp.ge.f32.partialorder %v1928, 0.0
        %vm2020 = vcmp.ge.f32.partialorder %v1931, 0.0
        %vm2021 = vcmp.ge.f32.partialorder %v1936, 0.0
        %vm2022 = vcmp.ge.f32.partialorder %v1939, 0.0
        %vm2023 = vcmp.ge.f32.partialorder %v1944, 0.0
        %vm2024 = vcmp.ge.f32.partialorder %v1947, 0.0
        %vm2025 = vcmp.ge.f32.partialorder %v1952, 0.0
        %vm2026 = vcmp.ge.f32.partialorder %v1955, 0.0
        %vm2027 = vcmp.ge.f32.partialorder %v1960, 0.0
        %vm2028 = vcmp.ge.f32.partialorder %v1963, 0.0
        %vm2029 = vcmp.ge.f32.partialorder %v1968, 0.0
        %vm2030 = vcmp.ge.f32.partialorder %v1971, 0.0
        %vm2031 = vcmp.ge.f32.partialorder %v1976, 0.0
        %vm2032 = vcmp.ge.f32.partialorder %v1979, 0.0
        %vm2033 = vcmp.ge.f32.partialorder %v1984, 0.0
        %vm2034 = vcmp.ge.f32.partialorder %v1987, 0.0
        %vm2035 = vcmp.ge.f32.partialorder %v1992, 0.0
        %vm2036 = vcmp.ge.f32.partialorder %v1995, 0.0
        %vm2037 = vcmp.ge.f32.partialorder %v2000, 0.0
        %vm2038 = vcmp.ge.f32.partialorder %v2003, 0.0
        %v2040 = vlaneseq
        %v2041 = vshrl.u32 %v2040, 7
        %v2042 = vsub.s32 0, %v2041
        %v2043 = vrot.slane %v2006, %v2042
        %v2045 = vmul.f32 %v2043, %v1880
        %v2046 = vmul.f32 %v2043, %v1883
        %v2047 = vmul.f32 %v2043, %v1888
        %v2048 = vmul.f32 %v2043, %v1891
        %v2049 = vmul.f32 %v2043, %v1896
        %v2050 = vmul.f32 %v2043, %v1899
        %v2051 = vmul.f32 %v2043, %v1904
        %v2052 = vmul.f32 %v2043, %v1907
        %v2053 = vmul.f32 %v2043, %v1912
        %v2054 = vmul.f32 %v2043, %v1915
        %v2055 = vmul.f32 %v2043, %v1920
        %v2056 = vmul.f32 %v2043, %v1923
        %v2057 = vmul.f32 %v2043, %v1928
        %v2058 = vmul.f32 %v2043, %v1931
        %v2059 = vmul.f32 %v2043, %v1936
        %v2060 = vmul.f32 %v2043, %v1939
        %v2061 = vmul.f32 %v2043, %v1944
        %v2062 = vmul.f32 %v2043, %v1947
        %v2063 = vmul.f32 %v2043, %v1952
        %v2064 = vmul.f32 %v2043, %v1955
        %v2065 = vmul.f32 %v2043, %v1960
        %v2066 = vmul.f32 %v2043, %v1963
        %v2067 = vmul.f32 %v2043, %v1968
        %v2068 = vmul.f32 %v2043, %v1971
        %v2069 = vmul.f32 %v2043, %v1976
        %v2070 = vmul.f32 %v2043, %v1979
        %v2071 = vmul.f32 %v2043, %v1984
        %v2072 = vmul.f32 %v2043, %v1987
        %v2073 = vmul.f32 %v2043, %v1992
        %v2074 = vmul.f32 %v2043, %v1995
        %v2075 = vmul.f32 %v2043, %v2000
        %v2076 = vmul.f32 %v2043, %v2003
        %v2077 = vsel %vm2007, %v1880, %v2045
        %v2078 = vsel %vm2008, %v1883, %v2046
        %v2079 = vsel %vm2009, %v1888, %v2047
        %v2080 = vsel %vm2010, %v1891, %v2048
        %v2081 = vsel %vm2011, %v1896, %v2049
        %v2082 = vsel %vm2012, %v1899, %v2050
        %v2083 = vsel %vm2013, %v1904, %v2051
        %v2084 = vsel %vm2014, %v1907, %v2052
        %v2085 = vsel %vm2015, %v1912, %v2053
        %v2086 = vsel %vm2016, %v1915, %v2054
        %v2087 = vsel %vm2017, %v1920, %v2055
        %v2088 = vsel %vm2018, %v1923, %v2056
        %v2089 = vsel %vm2019, %v1928, %v2057
        %v2090 = vsel %vm2020, %v1931, %v2058
        %v2091 = vsel %vm2021, %v1936, %v2059
        %v2092 = vsel %vm2022, %v1939, %v2060
        %v2093 = vsel %vm2023, %v1944, %v2061
        %v2094 = vsel %vm2024, %v1947, %v2062
        %v2095 = vsel %vm2025, %v1952, %v2063
        %v2096 = vsel %vm2026, %v1955, %v2064
        %v2097 = vsel %vm2027, %v1960, %v2065
        %v2098 = vsel %vm2028, %v1963, %v2066
        %v2099 = vsel %vm2029, %v1968, %v2067
        %v2100 = vsel %vm2030, %v1971, %v2068
        %v2101 = vsel %vm2031, %v1976, %v2069
        %v2102 = vsel %vm2032, %v1979, %v2070
        %v2103 = vsel %vm2033, %v1984, %v2071
        %v2104 = vsel %vm2034, %v1987, %v2072
        %v2105 = vsel %vm2035, %v1992, %v2073
        %v2106 = vsel %vm2036, %v1995, %v2074
        %v2107 = vsel %vm2037, %v2000, %v2075
        %v2108 = vsel %vm2038, %v2003, %v2076
        %s2109 = scalar_lea.vmem %s1, 144
        %v2110 = vld [vmem:[%s2109] sm:$0xf]
        %v2111 = vld [vmem:[%s2109 + $0x4] sm:$0xf]
        %v2112 = vld [vmem:[%s2109 + $0x8] sm:$0xf]
        %v2113 = vld [vmem:[%s2109 + $0xc] sm:$0xf]
        %v2114 = vld [vmem:[%s2109 + $0x10] sm:$0xf]
        %v2115 = vld [vmem:[%s2109 + $0x14] sm:$0xf]
        %v2116 = vld [vmem:[%s2109 + $0x18] sm:$0xf]
        %v2117 = vld [vmem:[%s2109 + $0x1c] sm:$0xf]
        %v2118 = vld [vmem:[%s2109 + $0x20] sm:$0xf]
        %v2119 = vld [vmem:[%s2109 + $0x24] sm:$0xf]
        %v2120 = vld [vmem:[%s2109 + $0x28] sm:$0xf]
        %v2121 = vld [vmem:[%s2109 + $0x2c] sm:$0xf]
        %v2122 = vld [vmem:[%s2109 + $0x30] sm:$0xf]
        %v2123 = vld [vmem:[%s2109 + $0x34] sm:$0xf]
        %v2124 = vld [vmem:[%s2109 + $0x38] sm:$0xf]
        %v2125 = vld [vmem:[%s2109 + $0x3c] sm:$0xf]
        %v2126 = vld [vmem:[%s2109 + $0x40] sm:$0xf]
        %v2127 = vld [vmem:[%s2109 + $0x44] sm:$0xf]
        %v2128 = vld [vmem:[%s2109 + $0x48] sm:$0xf]
        %v2129 = vld [vmem:[%s2109 + $0x4c] sm:$0xf]
        %v2130 = vld [vmem:[%s2109 + $0x50] sm:$0xf]
        %v2131 = vld [vmem:[%s2109 + $0x54] sm:$0xf]
        %v2132 = vld [vmem:[%s2109 + $0x58] sm:$0xf]
        %v2133 = vld [vmem:[%s2109 + $0x5c] sm:$0xf]
        %v2134 = vld [vmem:[%s2109 + $0x60] sm:$0xf]
        %v2135 = vld [vmem:[%s2109 + $0x64] sm:$0xf]
        %v2136 = vld [vmem:[%s2109 + $0x68] sm:$0xf]
        %v2137 = vld [vmem:[%s2109 + $0x6c] sm:$0xf]
        %v2138 = vld [vmem:[%s2109 + $0x70] sm:$0xf]
        %v2139 = vld [vmem:[%s2109 + $0x74] sm:$0xf]
        %v2140 = vld [vmem:[%s2109 + $0x78] sm:$0xf]
        %v2141 = vld [vmem:[%s2109 + $0x7c] sm:$0xf]
        %v2142 = vld [vmem:[%s2109 + $0x80] sm:$0xf]
        %v2143 = vld [vmem:[%s2109 + $0x84] sm:$0xf]
        %v2144 = vld [vmem:[%s2109 + $0x88] sm:$0xf]
        %v2145 = vld [vmem:[%s2109 + $0x8c] sm:$0xf]
        %s2146 = scalar_lea.vmem %s2, 1
        %v2147 = vld [vmem:[%s2146] sm:$0x1]
        %v2180 = vrot.slane %v2077, 7
        %v2181 = vrot.slane %v2078, 7
        %v2182 = vsel %vm299, %v2180, %v2181
        %v2183 = vrot.slane %v2079, 7
        %v2184 = vrot.slane %v2080, 7
        %v2185 = vsel %vm299, %v2183, %v2184
        %v2186 = vrot.slane %v2081, 7
        %v2187 = vrot.slane %v2082, 7
        %v2188 = vsel %vm299, %v2186, %v2187
        %v2189 = vrot.slane %v2083, 7
        %v2190 = vrot.slane %v2084, 7
        %v2191 = vsel %vm299, %v2189, %v2190
        %v2192 = vrot.slane %v2085, 7
        %v2193 = vrot.slane %v2086, 7
        %v2194 = vsel %vm299, %v2192, %v2193
        %v2195 = vrot.slane %v2087, 7
        %v2196 = vrot.slane %v2088, 7
        %v2197 = vsel %vm299, %v2195, %v2196
        %v2198 = vrot.slane %v2089, 7
        %v2199 = vrot.slane %v2090, 7
        %v2200 = vsel %vm299, %v2198, %v2199
        %v2201 = vrot.slane %v2091, 7
        %v2202 = vrot.slane %v2092, 7
        %v2203 = vsel %vm299, %v2201, %v2202
        %v2204 = vrot.slane %v2093, 7
        %v2205 = vrot.slane %v2094, 7
        %v2206 = vsel %vm299, %v2204, %v2205
        %v2207 = vrot.slane %v2095, 7
        %v2208 = vrot.slane %v2096, 7
        %v2209 = vsel %vm299, %v2207, %v2208
        %v2210 = vrot.slane %v2097, 7
        %v2211 = vrot.slane %v2098, 7
        %v2212 = vsel %vm299, %v2210, %v2211
        %v2213 = vrot.slane %v2099, 7
        %v2214 = vrot.slane %v2100, 7
        %v2215 = vsel %vm299, %v2213, %v2214
        %v2216 = vrot.slane %v2101, 7
        %v2217 = vrot.slane %v2102, 7
        %v2218 = vsel %vm299, %v2216, %v2217
        %v2219 = vrot.slane %v2103, 7
        %v2220 = vrot.slane %v2104, 7
        %v2221 = vsel %vm299, %v2219, %v2220
        %v2222 = vrot.slane %v2105, 7
        %v2223 = vrot.slane %v2106, 7
        %v2224 = vsel %vm299, %v2222, %v2223
        %v2225 = vrot.slane %v2107, 7
        %v2226 = vrot.slane %v2108, 7
        %v2227 = vsel %vm299, %v2225, %v2226
        %v2275 = vsel %vm299, 0.0, %v2180
        %v2276 = vsel %vm299, 0.0, %v2183
        %v2277 = vsel %vm299, 0.0, %v2186
        %v2278 = vsel %vm299, 0.0, %v2189
        %v2279 = vsel %vm299, 0.0, %v2192
        %v2280 = vsel %vm299, 0.0, %v2195
        %v2281 = vsel %vm299, 0.0, %v2198
        %v2282 = vsel %vm299, 0.0, %v2201
        %v2283 = vsel %vm299, 0.0, %v2204
        %v2284 = vsel %vm299, 0.0, %v2207
        %v2285 = vsel %vm299, 0.0, %v2210
        %v2286 = vsel %vm299, 0.0, %v2213
        %v2287 = vsel %vm299, 0.0, %v2216
        %v2288 = vsel %vm299, 0.0, %v2219
        %v2289 = vsel %vm299, 0.0, %v2222
        %v2290 = vsel %vm299, 0.0, %v2225
        %v2291 = vsel %vm299, %v2181, 0.0
        %v2292 = vsel %vm299, %v2184, 0.0
        %v2293 = vsel %vm299, %v2187, 0.0
        %v2294 = vsel %vm299, %v2190, 0.0
        %v2295 = vsel %vm299, %v2193, 0.0
        %v2296 = vsel %vm299, %v2196, 0.0
        %v2297 = vsel %vm299, %v2199, 0.0
        %v2298 = vsel %vm299, %v2202, 0.0
        %v2299 = vsel %vm299, %v2205, 0.0
        %v2300 = vsel %vm299, %v2208, 0.0
        %v2301 = vsel %vm299, %v2211, 0.0
        %v2302 = vsel %vm299, %v2214, 0.0
        %v2303 = vsel %vm299, %v2217, 0.0
        %v2304 = vsel %vm299, %v2220, 0.0
        %v2305 = vsel %vm299, %v2223, 0.0
        %v2306 = vsel %vm299, %v2226, 0.0
        %v2337 = vrot.slane %v2275, 1
        %v2338 = vrot.slane %v2182, 1
        %v2339 = vsel %vm465, %v2337, %v2338
        %v2340 = vrot.slane %v2291, 1
        %v2341 = vsel %vm465, %v2338, %v2340
        %v2342 = vrot.slane %v2276, 1
        %v2343 = vrot.slane %v2185, 1
        %v2344 = vsel %vm465, %v2342, %v2343
        %v2345 = vrot.slane %v2292, 1
        %v2346 = vsel %vm465, %v2343, %v2345
        %v2347 = vrot.slane %v2277, 1
        %v2348 = vrot.slane %v2188, 1
        %v2349 = vsel %vm465, %v2347, %v2348
        %v2350 = vrot.slane %v2293, 1
        %v2351 = vsel %vm465, %v2348, %v2350
        %v2352 = vrot.slane %v2278, 1
        %v2353 = vrot.slane %v2191, 1
        %v2354 = vsel %vm465, %v2352, %v2353
        %v2355 = vrot.slane %v2294, 1
        %v2356 = vsel %vm465, %v2353, %v2355
        %v2357 = vrot.slane %v2279, 1
        %v2358 = vrot.slane %v2194, 1
        %v2359 = vsel %vm465, %v2357, %v2358
        %v2360 = vrot.slane %v2295, 1
        %v2361 = vsel %vm465, %v2358, %v2360
        %v2362 = vrot.slane %v2280, 1
        %v2363 = vrot.slane %v2197, 1
        %v2364 = vsel %vm465, %v2362, %v2363
        %v2365 = vrot.slane %v2296, 1
        %v2366 = vsel %vm465, %v2363, %v2365
        %v2367 = vrot.slane %v2281, 1
        %v2368 = vrot.slane %v2200, 1
        %v2369 = vsel %vm465, %v2367, %v2368
        %v2370 = vrot.slane %v2297, 1
        %v2371 = vsel %vm465, %v2368, %v2370
        %v2372 = vrot.slane %v2282, 1
        %v2373 = vrot.slane %v2203, 1
        %v2374 = vsel %vm465, %v2372, %v2373
        %v2375 = vrot.slane %v2298, 1
        %v2376 = vsel %vm465, %v2373, %v2375
        %v2377 = vrot.slane %v2283, 1
        %v2378 = vrot.slane %v2206, 1
        %v2379 = vsel %vm465, %v2377, %v2378
        %v2380 = vrot.slane %v2299, 1
        %v2381 = vsel %vm465, %v2378, %v2380
        %v2382 = vrot.slane %v2284, 1
        %v2383 = vrot.slane %v2209, 1
        %v2384 = vsel %vm465, %v2382, %v2383
        %v2385 = vrot.slane %v2300, 1
        %v2386 = vsel %vm465, %v2383, %v2385
        %v2387 = vrot.slane %v2285, 1
        %v2388 = vrot.slane %v2212, 1
        %v2389 = vsel %vm465, %v2387, %v2388
        %v2390 = vrot.slane %v2301, 1
        %v2391 = vsel %vm465, %v2388, %v2390
        %v2392 = vrot.slane %v2286, 1
        %v2393 = vrot.slane %v2215, 1
        %v2394 = vsel %vm465, %v2392, %v2393
        %v2395 = vrot.slane %v2302, 1
        %v2396 = vsel %vm465, %v2393, %v2395
        %v2397 = vrot.slane %v2287, 1
        %v2398 = vrot.slane %v2218, 1
        %v2399 = vsel %vm465, %v2397, %v2398
        %v2400 = vrot.slane %v2303, 1
        %v2401 = vsel %vm465, %v2398, %v2400
        %v2402 = vrot.slane %v2288, 1
        %v2403 = vrot.slane %v2221, 1
        %v2404 = vsel %vm465, %v2402, %v2403
        %v2405 = vrot.slane %v2304, 1
        %v2406 = vsel %vm465, %v2403, %v2405
        %v2407 = vrot.slane %v2289, 1
        %v2408 = vrot.slane %v2224, 1
        %v2409 = vsel %vm465, %v2407, %v2408
        %v2410 = vrot.slane %v2305, 1
        %v2411 = vsel %vm465, %v2408, %v2410
        %v2412 = vrot.slane %v2275, 2
        %v2413 = vrot.slane %v2182, 2
        %v2414 = vsel %vm546, %v2412, %v2413
        %v2415 = vrot.slane %v2291, 2
        %v2416 = vsel %vm546, %v2413, %v2415
        %v2417 = vrot.slane %v2276, 2
        %v2418 = vrot.slane %v2185, 2
        %v2419 = vsel %vm546, %v2417, %v2418
        %v2420 = vrot.slane %v2292, 2
        %v2421 = vsel %vm546, %v2418, %v2420
        %v2422 = vrot.slane %v2277, 2
        %v2423 = vrot.slane %v2188, 2
        %v2424 = vsel %vm546, %v2422, %v2423
        %v2425 = vrot.slane %v2293, 2
        %v2426 = vsel %vm546, %v2423, %v2425
        %v2427 = vrot.slane %v2278, 2
        %v2428 = vrot.slane %v2191, 2
        %v2429 = vsel %vm546, %v2427, %v2428
        %v2430 = vrot.slane %v2294, 2
        %v2431 = vsel %vm546, %v2428, %v2430
        %v2432 = vrot.slane %v2279, 2
        %v2433 = vrot.slane %v2194, 2
        %v2434 = vsel %vm546, %v2432, %v2433
        %v2435 = vrot.slane %v2295, 2
        %v2436 = vsel %vm546, %v2433, %v2435
        %v2437 = vrot.slane %v2280, 2
        %v2438 = vrot.slane %v2197, 2
        %v2439 = vsel %vm546, %v2437, %v2438
        %v2440 = vrot.slane %v2296, 2
        %v2441 = vsel %vm546, %v2438, %v2440
        %v2442 = vrot.slane %v2281, 2
        %v2443 = vrot.slane %v2200, 2
        %v2444 = vsel %vm546, %v2442, %v2443
        %v2445 = vrot.slane %v2297, 2
        %v2446 = vsel %vm546, %v2443, %v2445
        %v2447 = vrot.slane %v2282, 2
        %v2448 = vrot.slane %v2203, 2
        %v2449 = vsel %vm546, %v2447, %v2448
        %v2450 = vrot.slane %v2298, 2
        %v2451 = vsel %vm546, %v2448, %v2450
        %v2452 = vrot.slane %v2283, 2
        %v2453 = vrot.slane %v2206, 2
        %v2454 = vsel %vm546, %v2452, %v2453
        %v2455 = vrot.slane %v2299, 2
        %v2456 = vsel %vm546, %v2453, %v2455
        %v2457 = vrot.slane %v2284, 2
        %v2458 = vrot.slane %v2209, 2
        %v2459 = vsel %vm546, %v2457, %v2458
        %v2460 = vrot.slane %v2300, 2
        %v2461 = vsel %vm546, %v2458, %v2460
        %v2462 = vrot.slane %v2285, 2
        %v2463 = vrot.slane %v2212, 2
        %v2464 = vsel %vm546, %v2462, %v2463
        %v2465 = vrot.slane %v2301, 2
        %v2466 = vsel %vm546, %v2463, %v2465
        %v2467 = vrot.slane %v2286, 2
        %v2468 = vrot.slane %v2215, 2
        %v2469 = vsel %vm546, %v2467, %v2468
        %v2470 = vrot.slane %v2302, 2
        %v2471 = vsel %vm546, %v2468, %v2470
        %v2472 = vrot.slane %v2287, 2
        %v2473 = vrot.slane %v2218, 2
        %v2474 = vsel %vm546, %v2472, %v2473
        %v2475 = vrot.slane %v2303, 2
        %v2476 = vsel %vm546, %v2473, %v2475
        %v2477 = vrot.slane %v2288, 2
        %v2478 = vrot.slane %v2221, 2
        %v2479 = vsel %vm546, %v2477, %v2478
        %v2480 = vrot.slane %v2304, 2
        %v2481 = vsel %vm546, %v2478, %v2480
        %v2482 = vrot.slane %v2289, 2
        %v2483 = vrot.slane %v2224, 2
        %v2484 = vsel %vm546, %v2482, %v2483
        %v2485 = vrot.slane %v2305, 2
        %v2486 = vsel %vm546, %v2483, %v2485
        %v2489 = vrot.slane %v2290, 1
        %v2490 = vrot.slane %v2227, 1
        %v2491 = vsel %vm465, %v2489, %v2490
        %v2492 = vrot.slane %v2306, 1
        %v2493 = vsel %vm465, %v2490, %v2492
        %v2526 = vrot.slane %v2290, 2
        %v2527 = vrot.slane %v2227, 2
        %v2528 = vsel %vm546, %v2526, %v2527
        %v2529 = vrot.slane %v2306, 2
        %v2530 = vsel %vm546, %v2527, %v2529
        %2561 = vrot.lane.b32.xlu0 %v2339, 32
        %v2562 = vpop.permute.xlu0 %2561
        %2563 = vrot.lane.b32.xlu0 %v2341, 32
        %v2564 = vpop.permute.xlu0 %2563
        %2565 = vrot.lane.b32.xlu0 %v2344, 32
        %v2566 = vpop.permute.xlu0 %2565
        %2567 = vrot.lane.b32.xlu0 %v2346, 32
        %v2568 = vpop.permute.xlu0 %2567
        %2569 = vrot.lane.b32.xlu0 %v2349, 32
        %v2570 = vpop.permute.xlu0 %2569
        %2571 = vrot.lane.b32.xlu0 %v2351, 32
        %v2572 = vpop.permute.xlu0 %2571
        %2573 = vrot.lane.b32.xlu0 %v2354, 32
        %v2574 = vpop.permute.xlu0 %2573
        %2575 = vrot.lane.b32.xlu0 %v2356, 32
        %v2576 = vpop.permute.xlu0 %2575
        %2577 = vrot.lane.b32.xlu0 %v2359, 32
        %v2578 = vpop.permute.xlu0 %2577
        %2579 = vrot.lane.b32.xlu0 %v2361, 32
        %v2580 = vpop.permute.xlu0 %2579
        %2581 = vrot.lane.b32.xlu0 %v2364, 32
        %v2582 = vpop.permute.xlu0 %2581
        %2583 = vrot.lane.b32.xlu0 %v2366, 32
        %v2584 = vpop.permute.xlu0 %2583
        %2585 = vrot.lane.b32.xlu0 %v2369, 32
        %v2586 = vpop.permute.xlu0 %2585
        %2587 = vrot.lane.b32.xlu0 %v2371, 32
        %v2588 = vpop.permute.xlu0 %2587
        %2589 = vrot.lane.b32.xlu0 %v2374, 32
        %v2590 = vpop.permute.xlu0 %2589
        %2591 = vrot.lane.b32.xlu0 %v2376, 32
        %v2592 = vpop.permute.xlu0 %2591
        %2593 = vrot.lane.b32.xlu0 %v2379, 32
        %v2594 = vpop.permute.xlu0 %2593
        %2595 = vrot.lane.b32.xlu0 %v2381, 32
        %v2596 = vpop.permute.xlu0 %2595
        %2597 = vrot.lane.b32.xlu0 %v2384, 32
        %v2598 = vpop.permute.xlu0 %2597
        %2599 = vrot.lane.b32.xlu0 %v2386, 32
        %v2600 = vpop.permute.xlu0 %2599
        %2601 = vrot.lane.b32.xlu0 %v2389, 32
        %v2602 = vpop.permute.xlu0 %2601
        %2603 = vrot.lane.b32.xlu0 %v2391, 32
        %v2604 = vpop.permute.xlu0 %2603
        %2605 = vrot.lane.b32.xlu0 %v2394, 32
        %v2606 = vpop.permute.xlu0 %2605
        %2607 = vrot.lane.b32.xlu0 %v2396, 32
        %v2608 = vpop.permute.xlu0 %2607
        %2609 = vrot.lane.b32.xlu0 %v2399, 32
        %v2610 = vpop.permute.xlu0 %2609
        %2611 = vrot.lane.b32.xlu0 %v2401, 32
        %v2612 = vpop.permute.xlu0 %2611
        %2613 = vrot.lane.b32.xlu0 %v2404, 32
        %v2614 = vpop.permute.xlu0 %2613
        %2615 = vrot.lane.b32.xlu0 %v2406, 32
        %v2616 = vpop.permute.xlu0 %2615
        %2617 = vrot.lane.b32.xlu0 %v2409, 32
        %v2618 = vpop.permute.xlu0 %2617
        %2619 = vrot.lane.b32.xlu0 %v2411, 32
        %v2620 = vpop.permute.xlu0 %2619
        %2651 = vrot.lane.b32.xlu0 %v2414, 64
        %v2652 = vpop.permute.xlu0 %2651
        %2653 = vrot.lane.b32.xlu0 %v2416, 64
        %v2654 = vpop.permute.xlu0 %2653
        %2655 = vrot.lane.b32.xlu0 %v2419, 64
        %v2656 = vpop.permute.xlu0 %2655
        %2657 = vrot.lane.b32.xlu0 %v2421, 64
        %v2658 = vpop.permute.xlu0 %2657
        %2659 = vrot.lane.b32.xlu0 %v2424, 64
        %v2660 = vpop.permute.xlu0 %2659
        %2661 = vrot.lane.b32.xlu0 %v2426, 64
        %v2662 = vpop.permute.xlu0 %2661
        %2663 = vrot.lane.b32.xlu0 %v2429, 64
        %v2664 = vpop.permute.xlu0 %2663
        %2665 = vrot.lane.b32.xlu0 %v2431, 64
        %v2666 = vpop.permute.xlu0 %2665
        %2667 = vrot.lane.b32.xlu0 %v2434, 64
        %v2668 = vpop.permute.xlu0 %2667
        %2669 = vrot.lane.b32.xlu0 %v2436, 64
        %v2670 = vpop.permute.xlu0 %2669
        %2671 = vrot.lane.b32.xlu0 %v2439, 64
        %v2672 = vpop.permute.xlu0 %2671
        %2673 = vrot.lane.b32.xlu0 %v2441, 64
        %v2674 = vpop.permute.xlu0 %2673
        %2675 = vrot.lane.b32.xlu0 %v2444, 64
        %v2676 = vpop.permute.xlu0 %2675
        %2677 = vrot.lane.b32.xlu0 %v2446, 64
        %v2678 = vpop.permute.xlu0 %2677
        %2679 = vrot.lane.b32.xlu0 %v2449, 64
        %v2680 = vpop.permute.xlu0 %2679
        %2681 = vrot.lane.b32.xlu0 %v2451, 64
        %v2682 = vpop.permute.xlu0 %2681
        %2683 = vrot.lane.b32.xlu0 %v2454, 64
        %v2684 = vpop.permute.xlu0 %2683
        %2685 = vrot.lane.b32.xlu0 %v2456, 64
        %v2686 = vpop.permute.xlu0 %2685
        %2687 = vrot.lane.b32.xlu0 %v2459, 64
        %v2688 = vpop.permute.xlu0 %2687
        %2689 = vrot.lane.b32.xlu0 %v2461, 64
        %v2690 = vpop.permute.xlu0 %2689
        %2691 = vrot.lane.b32.xlu0 %v2464, 64
        %v2692 = vpop.permute.xlu0 %2691
        %2693 = vrot.lane.b32.xlu0 %v2466, 64
        %v2694 = vpop.permute.xlu0 %2693
        %2695 = vrot.lane.b32.xlu0 %v2469, 64
        %v2696 = vpop.permute.xlu0 %2695
        %2697 = vrot.lane.b32.xlu0 %v2471, 64
        %v2698 = vpop.permute.xlu0 %2697
        %2699 = vrot.lane.b32.xlu0 %v2474, 64
        %v2700 = vpop.permute.xlu0 %2699
        %2701 = vrot.lane.b32.xlu0 %v2476, 64
        %v2702 = vpop.permute.xlu0 %2701
        %2703 = vrot.lane.b32.xlu0 %v2479, 64
        %v2704 = vpop.permute.xlu0 %2703
        %2705 = vrot.lane.b32.xlu0 %v2481, 64
        %v2706 = vpop.permute.xlu0 %2705
        %2707 = vrot.lane.b32.xlu0 %v2484, 64
        %v2708 = vpop.permute.xlu0 %2707
        %2709 = vrot.lane.b32.xlu0 %v2486, 64
        %v2710 = vpop.permute.xlu0 %2709
        %2741 = vrot.lane.b32.xlu0 %v2275, 96
        %v2742 = vpop.permute.xlu0 %2741
        %2743 = vrot.lane.b32.xlu0 %v2182, 96
        %v2744 = vpop.permute.xlu0 %2743
        %2745 = vrot.lane.b32.xlu0 %v2276, 96
        %v2746 = vpop.permute.xlu0 %2745
        %2747 = vrot.lane.b32.xlu0 %v2185, 96
        %v2748 = vpop.permute.xlu0 %2747
        %2749 = vrot.lane.b32.xlu0 %v2277, 96
        %v2750 = vpop.permute.xlu0 %2749
        %2751 = vrot.lane.b32.xlu0 %v2188, 96
        %v2752 = vpop.permute.xlu0 %2751
        %2753 = vrot.lane.b32.xlu0 %v2278, 96
        %v2754 = vpop.permute.xlu0 %2753
        %2755 = vrot.lane.b32.xlu0 %v2191, 96
        %v2756 = vpop.permute.xlu0 %2755
        %2757 = vrot.lane.b32.xlu0 %v2279, 96
        %v2758 = vpop.permute.xlu0 %2757
        %2759 = vrot.lane.b32.xlu0 %v2194, 96
        %v2760 = vpop.permute.xlu0 %2759
        %2761 = vrot.lane.b32.xlu0 %v2280, 96
        %v2762 = vpop.permute.xlu0 %2761
        %2763 = vrot.lane.b32.xlu0 %v2197, 96
        %v2764 = vpop.permute.xlu0 %2763
        %2765 = vrot.lane.b32.xlu0 %v2281, 96
        %v2766 = vpop.permute.xlu0 %2765
        %2767 = vrot.lane.b32.xlu0 %v2200, 96
        %v2768 = vpop.permute.xlu0 %2767
        %2769 = vrot.lane.b32.xlu0 %v2282, 96
        %v2770 = vpop.permute.xlu0 %2769
        %2771 = vrot.lane.b32.xlu0 %v2203, 96
        %v2772 = vpop.permute.xlu0 %2771
        %2773 = vrot.lane.b32.xlu0 %v2283, 96
        %v2774 = vpop.permute.xlu0 %2773
        %2775 = vrot.lane.b32.xlu0 %v2206, 96
        %v2776 = vpop.permute.xlu0 %2775
        %2777 = vrot.lane.b32.xlu0 %v2284, 96
        %v2778 = vpop.permute.xlu0 %2777
        %2779 = vrot.lane.b32.xlu0 %v2209, 96
        %v2780 = vpop.permute.xlu0 %2779
        %2781 = vrot.lane.b32.xlu0 %v2285, 96
        %v2782 = vpop.permute.xlu0 %2781
        %2783 = vrot.lane.b32.xlu0 %v2212, 96
        %v2784 = vpop.permute.xlu0 %2783
        %2785 = vrot.lane.b32.xlu0 %v2286, 96
        %v2786 = vpop.permute.xlu0 %2785
        %2787 = vrot.lane.b32.xlu0 %v2215, 96
        %v2788 = vpop.permute.xlu0 %2787
        %2789 = vrot.lane.b32.xlu0 %v2287, 96
        %v2790 = vpop.permute.xlu0 %2789
        %2791 = vrot.lane.b32.xlu0 %v2218, 96
        %v2792 = vpop.permute.xlu0 %2791
        %2793 = vrot.lane.b32.xlu0 %v2288, 96
        %v2794 = vpop.permute.xlu0 %2793
        %2795 = vrot.lane.b32.xlu0 %v2221, 96
        %v2796 = vpop.permute.xlu0 %2795
        %2797 = vrot.lane.b32.xlu0 %v2289, 96
        %v2798 = vpop.permute.xlu0 %2797
        %2799 = vrot.lane.b32.xlu0 %v2224, 96
        %v2800 = vpop.permute.xlu0 %2799
        %2801 = vrot.lane.b32.xlu0 %v2290, 96
        %v2802 = vpop.permute.xlu0 %2801
        %2803 = vrot.lane.b32.xlu0 %v2227, 96
        %v2804 = vpop.permute.xlu0 %2803
        %2837 = vrot.lane.b32.xlu0 %v2414, 32
        %v2838 = vpop.permute.xlu0 %2837
        %2839 = vrot.lane.b32.xlu0 %v2416, 32
        %v2840 = vpop.permute.xlu0 %2839
        %2841 = vrot.lane.b32.xlu0 %v2419, 32
        %v2842 = vpop.permute.xlu0 %2841
        %2843 = vrot.lane.b32.xlu0 %v2421, 32
        %v2844 = vpop.permute.xlu0 %2843
        %2845 = vrot.lane.b32.xlu0 %v2424, 32
        %v2846 = vpop.permute.xlu0 %2845
        %2847 = vrot.lane.b32.xlu0 %v2426, 32
        %v2848 = vpop.permute.xlu0 %2847
        %2849 = vrot.lane.b32.xlu0 %v2429, 32
        %v2850 = vpop.permute.xlu0 %2849
        %2851 = vrot.lane.b32.xlu0 %v2431, 32
        %v2852 = vpop.permute.xlu0 %2851
        %2853 = vrot.lane.b32.xlu0 %v2434, 32
        %v2854 = vpop.permute.xlu0 %2853
        %2855 = vrot.lane.b32.xlu0 %v2436, 32
        %v2856 = vpop.permute.xlu0 %2855
        %2857 = vrot.lane.b32.xlu0 %v2439, 32
        %v2858 = vpop.permute.xlu0 %2857
        %2859 = vrot.lane.b32.xlu0 %v2441, 32
        %v2860 = vpop.permute.xlu0 %2859
        %2861 = vrot.lane.b32.xlu0 %v2444, 32
        %v2862 = vpop.permute.xlu0 %2861
        %2863 = vrot.lane.b32.xlu0 %v2446, 32
        %v2864 = vpop.permute.xlu0 %2863
        %2865 = vrot.lane.b32.xlu0 %v2449, 32
        %v2866 = vpop.permute.xlu0 %2865
        %2867 = vrot.lane.b32.xlu0 %v2451, 32
        %v2868 = vpop.permute.xlu0 %2867
        %2869 = vrot.lane.b32.xlu0 %v2454, 32
        %v2870 = vpop.permute.xlu0 %2869
        %2871 = vrot.lane.b32.xlu0 %v2456, 32
        %v2872 = vpop.permute.xlu0 %2871
        %2873 = vrot.lane.b32.xlu0 %v2459, 32
        %v2874 = vpop.permute.xlu0 %2873
        %2875 = vrot.lane.b32.xlu0 %v2461, 32
        %v2876 = vpop.permute.xlu0 %2875
        %2877 = vrot.lane.b32.xlu0 %v2464, 32
        %v2878 = vpop.permute.xlu0 %2877
        %2879 = vrot.lane.b32.xlu0 %v2466, 32
        %v2880 = vpop.permute.xlu0 %2879
        %2881 = vrot.lane.b32.xlu0 %v2469, 32
        %v2882 = vpop.permute.xlu0 %2881
        %2883 = vrot.lane.b32.xlu0 %v2471, 32
        %v2884 = vpop.permute.xlu0 %2883
        %2885 = vrot.lane.b32.xlu0 %v2474, 32
        %v2886 = vpop.permute.xlu0 %2885
        %2887 = vrot.lane.b32.xlu0 %v2476, 32
        %v2888 = vpop.permute.xlu0 %2887
        %2889 = vrot.lane.b32.xlu0 %v2479, 32
        %v2890 = vpop.permute.xlu0 %2889
        %2891 = vrot.lane.b32.xlu0 %v2481, 32
        %v2892 = vpop.permute.xlu0 %2891
        %2893 = vrot.lane.b32.xlu0 %v2484, 32
        %v2894 = vpop.permute.xlu0 %2893
        %2895 = vrot.lane.b32.xlu0 %v2486, 32
        %v2896 = vpop.permute.xlu0 %2895
        %2897 = vrot.lane.b32.xlu0 %v2528, 32
        %v2898 = vpop.permute.xlu0 %2897
        %2899 = vrot.lane.b32.xlu0 %v2530, 32
        %v2900 = vpop.permute.xlu0 %2899
        %2933 = vrot.lane.b32.xlu0 %v2276, 64
        %v2934 = vpop.permute.xlu0 %2933
        %2935 = vrot.lane.b32.xlu0 %v2185, 64
        %v2936 = vpop.permute.xlu0 %2935
        %2937 = vrot.lane.b32.xlu0 %v2277, 64
        %v2938 = vpop.permute.xlu0 %2937
        %2939 = vrot.lane.b32.xlu0 %v2188, 64
        %v2940 = vpop.permute.xlu0 %2939
        %2941 = vrot.lane.b32.xlu0 %v2278, 64
        %v2942 = vpop.permute.xlu0 %2941
        %2943 = vrot.lane.b32.xlu0 %v2191, 64
        %v2944 = vpop.permute.xlu0 %2943
        %2945 = vrot.lane.b32.xlu0 %v2279, 64
        %v2946 = vpop.permute.xlu0 %2945
        %2947 = vrot.lane.b32.xlu0 %v2194, 64
        %v2948 = vpop.permute.xlu0 %2947
        %2949 = vrot.lane.b32.xlu0 %v2280, 64
        %v2950 = vpop.permute.xlu0 %2949
        %2951 = vrot.lane.b32.xlu0 %v2197, 64
        %v2952 = vpop.permute.xlu0 %2951
        %2953 = vrot.lane.b32.xlu0 %v2281, 64
        %v2954 = vpop.permute.xlu0 %2953
        %2955 = vrot.lane.b32.xlu0 %v2200, 64
        %v2956 = vpop.permute.xlu0 %2955
        %2957 = vrot.lane.b32.xlu0 %v2282, 64
        %v2958 = vpop.permute.xlu0 %2957
        %2959 = vrot.lane.b32.xlu0 %v2203, 64
        %v2960 = vpop.permute.xlu0 %2959
        %2961 = vrot.lane.b32.xlu0 %v2283, 64
        %v2962 = vpop.permute.xlu0 %2961
        %2963 = vrot.lane.b32.xlu0 %v2206, 64
        %v2964 = vpop.permute.xlu0 %2963
        %2965 = vrot.lane.b32.xlu0 %v2284, 64
        %v2966 = vpop.permute.xlu0 %2965
        %2967 = vrot.lane.b32.xlu0 %v2209, 64
        %v2968 = vpop.permute.xlu0 %2967
        %2969 = vrot.lane.b32.xlu0 %v2285, 64
        %v2970 = vpop.permute.xlu0 %2969
        %2971 = vrot.lane.b32.xlu0 %v2212, 64
        %v2972 = vpop.permute.xlu0 %2971
        %2973 = vrot.lane.b32.xlu0 %v2286, 64
        %v2974 = vpop.permute.xlu0 %2973
        %2975 = vrot.lane.b32.xlu0 %v2215, 64
        %v2976 = vpop.permute.xlu0 %2975
        %2977 = vrot.lane.b32.xlu0 %v2287, 64
        %v2978 = vpop.permute.xlu0 %2977
        %2979 = vrot.lane.b32.xlu0 %v2218, 64
        %v2980 = vpop.permute.xlu0 %2979
        %2981 = vrot.lane.b32.xlu0 %v2288, 64
        %v2982 = vpop.permute.xlu0 %2981
        %2983 = vrot.lane.b32.xlu0 %v2221, 64
        %v2984 = vpop.permute.xlu0 %2983
        %2985 = vrot.lane.b32.xlu0 %v2289, 64
        %v2986 = vpop.permute.xlu0 %2985
        %2987 = vrot.lane.b32.xlu0 %v2224, 64
        %v2988 = vpop.permute.xlu0 %2987
        %2989 = vrot.lane.b32.xlu0 %v2290, 64
        %v2990 = vpop.permute.xlu0 %2989
        %2991 = vrot.lane.b32.xlu0 %v2227, 64
        %v2992 = vpop.permute.xlu0 %2991
        %3023 = vrot.lane.b32.xlu0 %v2344, 96
        %v3024 = vpop.permute.xlu0 %3023
        %3025 = vrot.lane.b32.xlu0 %v2346, 96
        %v3026 = vpop.permute.xlu0 %3025
        %3027 = vrot.lane.b32.xlu0 %v2349, 96
        %v3028 = vpop.permute.xlu0 %3027
        %3029 = vrot.lane.b32.xlu0 %v2351, 96
        %v3030 = vpop.permute.xlu0 %3029
        %3031 = vrot.lane.b32.xlu0 %v2354, 96
        %v3032 = vpop.permute.xlu0 %3031
        %3033 = vrot.lane.b32.xlu0 %v2356, 96
        %v3034 = vpop.permute.xlu0 %3033
        %3035 = vrot.lane.b32.xlu0 %v2359, 96
        %v3036 = vpop.permute.xlu0 %3035
        %3037 = vrot.lane.b32.xlu0 %v2361, 96
        %v3038 = vpop.permute.xlu0 %3037
        %3039 = vrot.lane.b32.xlu0 %v2364, 96
        %v3040 = vpop.permute.xlu0 %3039
        %3041 = vrot.lane.b32.xlu0 %v2366, 96
        %v3042 = vpop.permute.xlu0 %3041
        %3043 = vrot.lane.b32.xlu0 %v2369, 96
        %v3044 = vpop.permute.xlu0 %3043
        %3045 = vrot.lane.b32.xlu0 %v2371, 96
        %v3046 = vpop.permute.xlu0 %3045
        %3047 = vrot.lane.b32.xlu0 %v2374, 96
        %v3048 = vpop.permute.xlu0 %3047
        %3049 = vrot.lane.b32.xlu0 %v2376, 96
        %v3050 = vpop.permute.xlu0 %3049
        %3051 = vrot.lane.b32.xlu0 %v2379, 96
        %v3052 = vpop.permute.xlu0 %3051
        %3053 = vrot.lane.b32.xlu0 %v2381, 96
        %v3054 = vpop.permute.xlu0 %3053
        %3055 = vrot.lane.b32.xlu0 %v2384, 96
        %v3056 = vpop.permute.xlu0 %3055
        %3057 = vrot.lane.b32.xlu0 %v2386, 96
        %v3058 = vpop.permute.xlu0 %3057
        %3059 = vrot.lane.b32.xlu0 %v2389, 96
        %v3060 = vpop.permute.xlu0 %3059
        %3061 = vrot.lane.b32.xlu0 %v2391, 96
        %v3062 = vpop.permute.xlu0 %3061
        %3063 = vrot.lane.b32.xlu0 %v2394, 96
        %v3064 = vpop.permute.xlu0 %3063
        %3065 = vrot.lane.b32.xlu0 %v2396, 96
        %v3066 = vpop.permute.xlu0 %3065
        %3067 = vrot.lane.b32.xlu0 %v2399, 96
        %v3068 = vpop.permute.xlu0 %3067
        %3069 = vrot.lane.b32.xlu0 %v2401, 96
        %v3070 = vpop.permute.xlu0 %3069
        %3071 = vrot.lane.b32.xlu0 %v2404, 96
        %v3072 = vpop.permute.xlu0 %3071
        %3073 = vrot.lane.b32.xlu0 %v2406, 96
        %v3074 = vpop.permute.xlu0 %3073
        %3075 = vrot.lane.b32.xlu0 %v2409, 96
        %v3076 = vpop.permute.xlu0 %3075
        %3077 = vrot.lane.b32.xlu0 %v2411, 96
        %v3078 = vpop.permute.xlu0 %3077
        %3079 = vrot.lane.b32.xlu0 %v2491, 96
        %v3080 = vpop.permute.xlu0 %3079
        %3081 = vrot.lane.b32.xlu0 %v2493, 96
        %v3082 = vpop.permute.xlu0 %3081
        %v3113 = vsel %vm1279, %v2275, %v2562
        %v3114 = vsel %vm1279, %v2182, %v2564
        %v3115 = vsel %vm1279, %v2276, %v2566
        %v3116 = vsel %vm1279, %v2185, %v2568
        %v3117 = vsel %vm1279, %v2277, %v2570
        %v3118 = vsel %vm1279, %v2188, %v2572
        %v3119 = vsel %vm1279, %v2278, %v2574
        %v3120 = vsel %vm1279, %v2191, %v2576
        %v3121 = vsel %vm1279, %v2279, %v2578
        %v3122 = vsel %vm1279, %v2194, %v2580
        %v3123 = vsel %vm1279, %v2280, %v2582
        %v3124 = vsel %vm1279, %v2197, %v2584
        %v3125 = vsel %vm1279, %v2281, %v2586
        %v3126 = vsel %vm1279, %v2200, %v2588
        %v3127 = vsel %vm1279, %v2282, %v2590
        %v3128 = vsel %vm1279, %v2203, %v2592
        %v3129 = vsel %vm1279, %v2283, %v2594
        %v3130 = vsel %vm1279, %v2206, %v2596
        %v3131 = vsel %vm1279, %v2284, %v2598
        %v3132 = vsel %vm1279, %v2209, %v2600
        %v3133 = vsel %vm1279, %v2285, %v2602
        %v3134 = vsel %vm1279, %v2212, %v2604
        %v3135 = vsel %vm1279, %v2286, %v2606
        %v3136 = vsel %vm1279, %v2215, %v2608
        %v3137 = vsel %vm1279, %v2287, %v2610
        %v3138 = vsel %vm1279, %v2218, %v2612
        %v3139 = vsel %vm1279, %v2288, %v2614
        %v3140 = vsel %vm1279, %v2221, %v2616
        %v3141 = vsel %vm1279, %v2289, %v2618
        %v3142 = vsel %vm1279, %v2224, %v2620
        %v3143 = vsel %vm1312, %v3113, %v2652
        %v3144 = vsel %vm1312, %v3114, %v2654
        %v3145 = vsel %vm1312, %v3115, %v2656
        %v3146 = vsel %vm1312, %v3116, %v2658
        %v3147 = vsel %vm1312, %v3117, %v2660
        %v3148 = vsel %vm1312, %v3118, %v2662
        %v3149 = vsel %vm1312, %v3119, %v2664
        %v3150 = vsel %vm1312, %v3120, %v2666
        %v3151 = vsel %vm1312, %v3121, %v2668
        %v3152 = vsel %vm1312, %v3122, %v2670
        %v3153 = vsel %vm1312, %v3123, %v2672
        %v3154 = vsel %vm1312, %v3124, %v2674
        %v3155 = vsel %vm1312, %v3125, %v2676
        %v3156 = vsel %vm1312, %v3126, %v2678
        %v3157 = vsel %vm1312, %v3127, %v2680
        %v3158 = vsel %vm1312, %v3128, %v2682
        %v3159 = vsel %vm1312, %v3129, %v2684
        %v3160 = vsel %vm1312, %v3130, %v2686
        %v3161 = vsel %vm1312, %v3131, %v2688
        %v3162 = vsel %vm1312, %v3132, %v2690
        %v3163 = vsel %vm1312, %v3133, %v2692
        %v3164 = vsel %vm1312, %v3134, %v2694
        %v3165 = vsel %vm1312, %v3135, %v2696
        %v3166 = vsel %vm1312, %v3136, %v2698
        %v3167 = vsel %vm1312, %v3137, %v2700
        %v3168 = vsel %vm1312, %v3138, %v2702
        %v3169 = vsel %vm1312, %v3139, %v2704
        %v3170 = vsel %vm1312, %v3140, %v2706
        %v3171 = vsel %vm1312, %v3141, %v2708
        %v3172 = vsel %vm1312, %v3142, %v2710
        %v3173 = vsel %vm1345, %v1313, %v2742
        %v3174 = vsel %vm1345, %v1314, %v2744
        %v3175 = vsel %vm1345, %v3143, %v2746
        %v3176 = vsel %vm1345, %v3144, %v2748
        %v3177 = vsel %vm1345, %v3145, %v2750
        %v3178 = vsel %vm1345, %v3146, %v2752
        %v3179 = vsel %vm1345, %v3147, %v2754
        %v3180 = vsel %vm1345, %v3148, %v2756
        %v3181 = vsel %vm1345, %v3149, %v2758
        %v3182 = vsel %vm1345, %v3150, %v2760
        %v3183 = vsel %vm1345, %v3151, %v2762
        %v3184 = vsel %vm1345, %v3152, %v2764
        %v3185 = vsel %vm1345, %v3153, %v2766
        %v3186 = vsel %vm1345, %v3154, %v2768
        %v3187 = vsel %vm1345, %v3155, %v2770
        %v3188 = vsel %vm1345, %v3156, %v2772
        %v3189 = vsel %vm1345, %v3157, %v2774
        %v3190 = vsel %vm1345, %v3158, %v2776
        %v3191 = vsel %vm1345, %v3159, %v2778
        %v3192 = vsel %vm1345, %v3160, %v2780
        %v3193 = vsel %vm1345, %v3161, %v2782
        %v3194 = vsel %vm1345, %v3162, %v2784
        %v3195 = vsel %vm1345, %v3163, %v2786
        %v3196 = vsel %vm1345, %v3164, %v2788
        %v3197 = vsel %vm1345, %v3165, %v2790
        %v3198 = vsel %vm1345, %v3166, %v2792
        %v3199 = vsel %vm1345, %v3167, %v2794
        %v3200 = vsel %vm1345, %v3168, %v2796
        %v3201 = vsel %vm1345, %v3169, %v2798
        %v3202 = vsel %vm1345, %v3170, %v2800
        %v3203 = vsel %vm1345, %v3171, %v2802
        %v3204 = vsel %vm1345, %v3172, %v2804
        %v3205 = vsel %vm1279, %v2339, %v2838
        %v3206 = vsel %vm1279, %v2341, %v2840
        %v3207 = vsel %vm1279, %v2344, %v2842
        %v3208 = vsel %vm1279, %v2346, %v2844
        %v3209 = vsel %vm1279, %v2349, %v2846
        %v3210 = vsel %vm1279, %v2351, %v2848
        %v3211 = vsel %vm1279, %v2354, %v2850
        %v3212 = vsel %vm1279, %v2356, %v2852
        %v3213 = vsel %vm1279, %v2359, %v2854
        %v3214 = vsel %vm1279, %v2361, %v2856
        %v3215 = vsel %vm1279, %v2364, %v2858
        %v3216 = vsel %vm1279, %v2366, %v2860
        %v3217 = vsel %vm1279, %v2369, %v2862
        %v3218 = vsel %vm1279, %v2371, %v2864
        %v3219 = vsel %vm1279, %v2374, %v2866
        %v3220 = vsel %vm1279, %v2376, %v2868
        %v3221 = vsel %vm1279, %v2379, %v2870
        %v3222 = vsel %vm1279, %v2381, %v2872
        %v3223 = vsel %vm1279, %v2384, %v2874
        %v3224 = vsel %vm1279, %v2386, %v2876
        %v3225 = vsel %vm1279, %v2389, %v2878
        %v3226 = vsel %vm1279, %v2391, %v2880
        %v3227 = vsel %vm1279, %v2394, %v2882
        %v3228 = vsel %vm1279, %v2396, %v2884
        %v3229 = vsel %vm1279, %v2399, %v2886
        %v3230 = vsel %vm1279, %v2401, %v2888
        %v3231 = vsel %vm1279, %v2404, %v2890
        %v3232 = vsel %vm1279, %v2406, %v2892
        %v3233 = vsel %vm1279, %v2409, %v2894
        %v3234 = vsel %vm1279, %v2411, %v2896
        %v3235 = vsel %vm1279, %v2491, %v2898
        %v3236 = vsel %vm1279, %v2493, %v2900
        %v3237 = vsel %vm1312, %v3205, %v2934
        %v3238 = vsel %vm1312, %v3206, %v2936
        %v3239 = vsel %vm1312, %v3207, %v2938
        %v3240 = vsel %vm1312, %v3208, %v2940
        %v3241 = vsel %vm1312, %v3209, %v2942
        %v3242 = vsel %vm1312, %v3210, %v2944
        %v3243 = vsel %vm1312, %v3211, %v2946
        %v3244 = vsel %vm1312, %v3212, %v2948
        %v3245 = vsel %vm1312, %v3213, %v2950
        %v3246 = vsel %vm1312, %v3214, %v2952
        %v3247 = vsel %vm1312, %v3215, %v2954
        %v3248 = vsel %vm1312, %v3216, %v2956
        %v3249 = vsel %vm1312, %v3217, %v2958
        %v3250 = vsel %vm1312, %v3218, %v2960
        %v3251 = vsel %vm1312, %v3219, %v2962
        %v3252 = vsel %vm1312, %v3220, %v2964
        %v3253 = vsel %vm1312, %v3221, %v2966
        %v3254 = vsel %vm1312, %v3222, %v2968
        %v3255 = vsel %vm1312, %v3223, %v2970
        %v3256 = vsel %vm1312, %v3224, %v2972
        %v3257 = vsel %vm1312, %v3225, %v2974
        %v3258 = vsel %vm1312, %v3226, %v2976
        %v3259 = vsel %vm1312, %v3227, %v2978
        %v3260 = vsel %vm1312, %v3228, %v2980
        %v3261 = vsel %vm1312, %v3229, %v2982
        %v3262 = vsel %vm1312, %v3230, %v2984
        %v3263 = vsel %vm1312, %v3231, %v2986
        %v3264 = vsel %vm1312, %v3232, %v2988
        %v3265 = vsel %vm1312, %v3233, %v2990
        %v3266 = vsel %vm1312, %v3234, %v2992
        %v3267 = vsel %vm1312, %v3235, %v1148
        %v3268 = vsel %vm1312, %v3236, %v1150
        %v3269 = vsel %vm1345, %v3237, %v3024
        %v3270 = vsel %vm1345, %v3238, %v3026
        %v3271 = vsel %vm1345, %v3239, %v3028
        %v3272 = vsel %vm1345, %v3240, %v3030
        %v3273 = vsel %vm1345, %v3241, %v3032
        %v3274 = vsel %vm1345, %v3242, %v3034
        %v3275 = vsel %vm1345, %v3243, %v3036
        %v3276 = vsel %vm1345, %v3244, %v3038
        %v3277 = vsel %vm1345, %v3245, %v3040
        %v3278 = vsel %vm1345, %v3246, %v3042
        %v3279 = vsel %vm1345, %v3247, %v3044
        %v3280 = vsel %vm1345, %v3248, %v3046
        %v3281 = vsel %vm1345, %v3249, %v3048
        %v3282 = vsel %vm1345, %v3250, %v3050
        %v3283 = vsel %vm1345, %v3251, %v3052
        %v3284 = vsel %vm1345, %v3252, %v3054
        %v3285 = vsel %vm1345, %v3253, %v3056
        %v3286 = vsel %vm1345, %v3254, %v3058
        %v3287 = vsel %vm1345, %v3255, %v3060
        %v3288 = vsel %vm1345, %v3256, %v3062
        %v3289 = vsel %vm1345, %v3257, %v3064
        %v3290 = vsel %vm1345, %v3258, %v3066
        %v3291 = vsel %vm1345, %v3259, %v3068
        %v3292 = vsel %vm1345, %v3260, %v3070
        %v3293 = vsel %vm1345, %v3261, %v3072
        %v3294 = vsel %vm1345, %v3262, %v3074
        %v3295 = vsel %vm1345, %v3263, %v3076
        %v3296 = vsel %vm1345, %v3264, %v3078
        %v3297 = vsel %vm1345, %v3265, %v3080
        %v3298 = vsel %vm1345, %v3266, %v3082
        %v3299 = vsel %vm1345, %v3267, %v1244
        %v3300 = vsel %vm1345, %v3268, %v1246
        %v3301 = vpack.c.bf16 %v3174, %v3173
        %v3302 = vpack.c.bf16 %v3270, %v3269
        %v3303 = vpack.c.bf16 %v2421, %v2419
        %v3304 = vpack.c.bf16 %v3176, %v3175
        %v3305 = vpack.c.bf16 %v3272, %v3271
        %v3306 = vpack.c.bf16 %v2426, %v2424
        %v3307 = vpack.c.bf16 %v3178, %v3177
        %v3308 = vpack.c.bf16 %v3274, %v3273
        %v3309 = vpack.c.bf16 %v2431, %v2429
        %v3310 = vpack.c.bf16 %v3180, %v3179
        %v3311 = vpack.c.bf16 %v3276, %v3275
        %v3312 = vpack.c.bf16 %v2436, %v2434
        %v3313 = vpack.c.bf16 %v3182, %v3181
        %v3314 = vpack.c.bf16 %v3278, %v3277
        %v3315 = vpack.c.bf16 %v2441, %v2439
        %v3316 = vpack.c.bf16 %v3184, %v3183
        %v3317 = vpack.c.bf16 %v3280, %v3279
        %v3318 = vpack.c.bf16 %v2446, %v2444
        %v3319 = vpack.c.bf16 %v3186, %v3185
        %v3320 = vpack.c.bf16 %v3282, %v3281
        %v3321 = vpack.c.bf16 %v2451, %v2449
        %v3322 = vpack.c.bf16 %v3188, %v3187
        %v3323 = vpack.c.bf16 %v3284, %v3283
        %v3324 = vpack.c.bf16 %v2456, %v2454
        %v3325 = vpack.c.bf16 %v3190, %v3189
        %v3326 = vpack.c.bf16 %v3286, %v3285
        %v3327 = vpack.c.bf16 %v2461, %v2459
        %v3328 = vpack.c.bf16 %v3192, %v3191
        %v3329 = vpack.c.bf16 %v3288, %v3287
        %v3330 = vpack.c.bf16 %v2466, %v2464
        %v3331 = vpack.c.bf16 %v3194, %v3193
        %v3332 = vpack.c.bf16 %v3290, %v3289
        %v3333 = vpack.c.bf16 %v2471, %v2469
        %v3334 = vpack.c.bf16 %v3196, %v3195
        %v3335 = vpack.c.bf16 %v3292, %v3291
        %v3336 = vpack.c.bf16 %v2476, %v2474
        %v3337 = vpack.c.bf16 %v3198, %v3197
        %v3338 = vpack.c.bf16 %v3294, %v3293
        %v3339 = vpack.c.bf16 %v2481, %v2479
        %v3340 = vpack.c.bf16 %v3200, %v3199
        %v3341 = vpack.c.bf16 %v3296, %v3295
        %v3342 = vpack.c.bf16 %v2486, %v2484
        %v3343 = vpack.c.bf16 %v3202, %v3201
        %v3344 = vpack.c.bf16 %v3298, %v3297
        %v3345 = vpack.c.bf16 %v2530, %v2528
        %v3346 = vpack.c.bf16 %v3204, %v3203
        %v3347 = vpack.c.bf16 %v3300, %v3299
        %v3349 = vlaneseq
        %v3350 = vshrl.u32 %v3349, 7
        %v3351 = vsub.s32 0, %v3350
        %v3352 = vrot.slane %v2147, %v3351
        %v3390 = vunpack.c.l.b16 %v2110
        %v3391 = vunpack.c.l.b16 %v2111
        %v3392 = vunpack.c.l.b16 %v2112
        %v3393 = vunpack.c.l.b16 %v2113
        %v3394 = vunpack.c.l.b16 %v2114
        %v3395 = vunpack.c.l.b16 %v2115
        %v3396 = vunpack.c.l.b16 %v2116
        %v3397 = vunpack.c.l.b16 %v2117
        %v3398 = vunpack.c.l.b16 %v2118
        %v3399 = vunpack.c.l.b16 %v2119
        %v3400 = vunpack.c.l.b16 %v2120
        %v3401 = vunpack.c.l.b16 %v2121
        %v3402 = vunpack.c.l.b16 %v2122
        %v3403 = vunpack.c.l.b16 %v2123
        %v3404 = vunpack.c.l.b16 %v2124
        %v3405 = vunpack.c.l.b16 %v2125
        %v3406 = vunpack.c.l.b16 %v2126
        %v3407 = vunpack.c.l.b16 %v2127
        %v3408 = vunpack.c.l.b16 %v2128
        %v3409 = vunpack.c.l.b16 %v2129
        %v3410 = vunpack.c.l.b16 %v2130
        %v3411 = vunpack.c.l.b16 %v2131
        %v3412 = vunpack.c.l.b16 %v2132
        %v3413 = vunpack.c.l.b16 %v2133
        %v3414 = vunpack.c.l.b16 %v2134
        %v3415 = vunpack.c.l.b16 %v2135
        %v3416 = vunpack.c.l.b16 %v2136
        %v3417 = vunpack.c.l.b16 %v2137
        %v3418 = vunpack.c.l.b16 %v2138
        %v3419 = vunpack.c.l.b16 %v2139
        %v3420 = vunpack.c.l.b16 %v2140
        %v3421 = vunpack.c.l.b16 %v2141
        %v3422 = vunpack.c.l.b16 %v2142
        %v3423 = vunpack.c.l.b16 %v2143
        %v3424 = vunpack.c.l.b16 %v2144
        %v3425 = vunpack.c.l.b16 %v2145
        %v3426 = vpack.c.b16 %v3391, %v3390
        %v3427 = vpack.c.b16 %v3393, %v3392
        %v3428 = vpack.c.b16 %v3395, %v3394
        %v3429 = vpack.c.b16 %v3397, %v3396
        %v3430 = vpack.c.b16 %v3399, %v3398
        %v3431 = vpack.c.b16 %v3401, %v3400
        %v3432 = vpack.c.b16 %v3403, %v3402
        %v3433 = vpack.c.b16 %v3405, %v3404
        %v3434 = vpack.c.b16 %v3407, %v3406
        %v3435 = vpack.c.b16 %v3409, %v3408
        %v3436 = vpack.c.b16 %v3411, %v3410
        %v3437 = vpack.c.b16 %v3413, %v3412
        %v3438 = vpack.c.b16 %v3415, %v3414
        %v3439 = vpack.c.b16 %v3417, %v3416
        %v3440 = vpack.c.b16 %v3419, %v3418
        %v3441 = vpack.c.b16 %v3421, %v3420
        %v3442 = vpack.c.b16 %v3423, %v3422
        %v3443 = vpack.c.b16 %v3425, %v3424
        %v3463 = vsel %vm1279, %v3303, 0
        %v3466 = vsel %vm1279, %v3306, 0
        %v3469 = vsel %vm1279, %v3309, 0
        %v3472 = vsel %vm1279, %v3312, 0
        %v3475 = vsel %vm1279, %v3315, 0
        %v3478 = vsel %vm1279, %v3318, 0
        %v3481 = vsel %vm1279, %v3321, 0
        %v3484 = vsel %vm1279, %v3324, 0
        %v3487 = vsel %vm1279, %v3327, 0
        %v3490 = vsel %vm1279, %v3330, 0
        %v3493 = vsel %vm1279, %v3333, 0
        %v3496 = vsel %vm1279, %v3336, 0
        %v3499 = vsel %vm1279, %v3339, 0
        %v3502 = vsel %vm1279, %v3342, 0
        %v3505 = vsel %vm1279, %v3345, 0
        %3507 = vmatprep.subr.bf16.mxu0 0
        %3508 = vmatpush1.bf16.msra.mxu0 %v3433
        %3509 = vmatprep.subr.bf16.mxu0 0
        %3510 = vmatpush1.bf16.msra.mxu0 %v3432
        %3511 = vmatprep.subr.bf16.mxu0 0
        %3512 = vmatpush1.bf16.msra.mxu0 %v3431
        %3513 = vmatprep.subr.bf16.mxu0 0
        %3514 = vmatpush1.bf16.msra.mxu0 %v3430
        %3515 = vmatprep.subr.bf16.mxu0 0
        %3516 = vmatpush1.bf16.msra.mxu0 %v3429
        %3517 = vmatprep.subr.bf16.mxu0 0
        %3518 = vmatpush1.bf16.msra.mxu0 %v3428
        %3519 = vmatprep.subr.bf16.mxu0 0
        %3520 = vmatpush1.bf16.msra.mxu0 %v3427
        %3521 = vmatprep.subr.bf16.mxu0 0
        %3522 = vmatpush1.bf16.msra.mxu0 %v3426
        %3523 = vmatprep.subr.bf16.mxu0 0
        %3524 = vmatpush2.bf16.msra.mxu0 %v3441
        %3525 = vmatprep.subr.bf16.mxu0 0
        %3526 = vmatpush2.bf16.msra.mxu0 %v3440
        %3527 = vmatprep.subr.bf16.mxu0 0
        %3528 = vmatpush2.bf16.msra.mxu0 %v3439
        %3529 = vmatprep.subr.bf16.mxu0 0
        %3530 = vmatpush2.bf16.msra.mxu0 %v3438
        %3531 = vmatprep.subr.bf16.mxu0 0
        %3532 = vmatpush2.bf16.msra.mxu0 %v3437
        %3533 = vmatprep.subr.bf16.mxu0 0
        %3534 = vmatpush2.bf16.msra.mxu0 %v3436
        %3535 = vmatprep.subr.bf16.mxu0 0
        %3536 = vmatpush2.bf16.msra.mxu0 %v3435
        %3537 = vmatprep.subr.bf16.mxu0 0
        %3538 = vmatpush2.bf16.msra.mxu0 %v3434
        %3539 = vmatprep.mubr.bf16.mxu0 %v3302
        %3540 = vmatmul.mubr.bf16.gmra.mxu0 %v3301
        %v3541 = vpop.f32.mrf.mxu0
        %v3542 = vadd.f32 %v3352, %v3541
        %v3543 = vpop.f32.mrf.mxu0
        %v3544 = vpop.f32.mrf.mxu0
        %v3545 = vadd.f32 %v3352, %v3544
        %v3546 = vpop.f32.mrf.mxu0
        %3547 = vmatprep.mubr.bf16.mxu0 %v3305
        %3548 = vmatmul.mubr.bf16.gmra.mxu0 %v3304
        %v3549 = vpop.f32.mrf.mxu0
        %v3550 = vadd.f32 %v3352, %v3549
        %v3551 = vpop.f32.mrf.mxu0
        %v3552 = vpop.f32.mrf.mxu0
        %v3553 = vadd.f32 %v3352, %v3552
        %v3554 = vpop.f32.mrf.mxu0
        %3555 = vmatprep.mubr.bf16.mxu0 %v3308
        %3556 = vmatmul.mubr.bf16.gmra.mxu0 %v3307
        %v3557 = vpop.f32.mrf.mxu0
        %v3558 = vadd.f32 %v3352, %v3557
        %v3559 = vpop.f32.mrf.mxu0
        %v3560 = vpop.f32.mrf.mxu0
        %v3561 = vadd.f32 %v3352, %v3560
        %v3562 = vpop.f32.mrf.mxu0
        %3563 = vmatprep.mubr.bf16.mxu0 %v3311
        %3564 = vmatmul.mubr.bf16.gmra.mxu0 %v3310
        %v3565 = vpop.f32.mrf.mxu0
        %v3566 = vadd.f32 %v3352, %v3565
        %v3567 = vpop.f32.mrf.mxu0
        %v3568 = vpop.f32.mrf.mxu0
        %v3569 = vadd.f32 %v3352, %v3568
        %v3570 = vpop.f32.mrf.mxu0
        %3571 = vmatprep.mubr.bf16.mxu0 %v3314
        %3572 = vmatmul.mubr.bf16.gmra.mxu0 %v3313
        %v3573 = vpop.f32.mrf.mxu0
        %v3574 = vadd.f32 %v3352, %v3573
        %v3575 = vpop.f32.mrf.mxu0
        %v3576 = vpop.f32.mrf.mxu0
        %v3577 = vadd.f32 %v3352, %v3576
        %v3578 = vpop.f32.mrf.mxu0
        %3579 = vmatprep.mubr.bf16.mxu0 %v3317
        %3580 = vmatmul.mubr.bf16.gmra.mxu0 %v3316
        %v3581 = vpop.f32.mrf.mxu0
        %v3582 = vadd.f32 %v3352, %v3581
        %v3583 = vpop.f32.mrf.mxu0
        %v3584 = vpop.f32.mrf.mxu0
        %v3585 = vadd.f32 %v3352, %v3584
        %v3586 = vpop.f32.mrf.mxu0
        %3587 = vmatprep.mubr.bf16.mxu0 %v3320
        %3588 = vmatmul.mubr.bf16.gmra.mxu0 %v3319
        %v3589 = vpop.f32.mrf.mxu0
        %v3590 = vadd.f32 %v3352, %v3589
        %v3591 = vpop.f32.mrf.mxu0
        %v3592 = vpop.f32.mrf.mxu0
        %v3593 = vadd.f32 %v3352, %v3592
        %v3594 = vpop.f32.mrf.mxu0
        %3595 = vmatprep.mubr.bf16.mxu0 %v3323
        %3596 = vmatmul.mubr.bf16.gmra.mxu0 %v3322
        %v3597 = vpop.f32.mrf.mxu0
        %v3598 = vadd.f32 %v3352, %v3597
        %v3599 = vpop.f32.mrf.mxu0
        %v3600 = vpop.f32.mrf.mxu0
        %v3601 = vadd.f32 %v3352, %v3600
        %v3602 = vpop.f32.mrf.mxu0
        %3603 = vmatprep.mubr.bf16.mxu0 %v3326
        %3604 = vmatmul.mubr.bf16.gmra.mxu0 %v3325
        %v3605 = vpop.f32.mrf.mxu0
        %v3606 = vadd.f32 %v3352, %v3605
        %v3607 = vpop.f32.mrf.mxu0
        %v3608 = vpop.f32.mrf.mxu0
        %v3609 = vadd.f32 %v3352, %v3608
        %v3610 = vpop.f32.mrf.mxu0
        %3611 = vmatprep.mubr.bf16.mxu0 %v3329
        %3612 = vmatmul.mubr.bf16.gmra.mxu0 %v3328
        %v3613 = vpop.f32.mrf.mxu0
        %v3614 = vadd.f32 %v3352, %v3613
        %v3615 = vpop.f32.mrf.mxu0
        %v3616 = vpop.f32.mrf.mxu0
        %v3617 = vadd.f32 %v3352, %v3616
        %v3618 = vpop.f32.mrf.mxu0
        %3619 = vmatprep.mubr.bf16.mxu0 %v3332
        %3620 = vmatmul.mubr.bf16.gmra.mxu0 %v3331
        %v3621 = vpop.f32.mrf.mxu0
        %v3622 = vadd.f32 %v3352, %v3621
        %v3623 = vpop.f32.mrf.mxu0
        %v3624 = vpop.f32.mrf.mxu0
        %v3625 = vadd.f32 %v3352, %v3624
        %v3626 = vpop.f32.mrf.mxu0
        %3627 = vmatprep.mubr.bf16.mxu0 %v3335
        %3628 = vmatmul.mubr.bf16.gmra.mxu0 %v3334
        %v3629 = vpop.f32.mrf.mxu0
        %v3630 = vadd.f32 %v3352, %v3629
        %v3631 = vpop.f32.mrf.mxu0
        %v3632 = vpop.f32.mrf.mxu0
        %v3633 = vadd.f32 %v3352, %v3632
        %v3634 = vpop.f32.mrf.mxu0
        %3635 = vmatprep.mubr.bf16.mxu0 %v3338
        %3636 = vmatmul.mubr.bf16.gmra.mxu0 %v3337
        %v3637 = vpop.f32.mrf.mxu0
        %v3638 = vadd.f32 %v3352, %v3637
        %v3639 = vpop.f32.mrf.mxu0
        %v3640 = vpop.f32.mrf.mxu0
        %v3641 = vadd.f32 %v3352, %v3640
        %v3642 = vpop.f32.mrf.mxu0
        %3643 = vmatprep.mubr.bf16.mxu0 %v3341
        %3644 = vmatmul.mubr.bf16.gmra.mxu0 %v3340
        %v3645 = vpop.f32.mrf.mxu0
        %v3646 = vadd.f32 %v3352, %v3645
        %v3647 = vpop.f32.mrf.mxu0
        %v3648 = vpop.f32.mrf.mxu0
        %v3649 = vadd.f32 %v3352, %v3648
        %v3650 = vpop.f32.mrf.mxu0
        %3651 = vmatprep.mubr.bf16.mxu0 %v3344
        %3652 = vmatmul.mubr.bf16.gmra.mxu0 %v3343
        %v3653 = vpop.f32.mrf.mxu0
        %v3654 = vadd.f32 %v3352, %v3653
        %v3655 = vpop.f32.mrf.mxu0
        %v3656 = vpop.f32.mrf.mxu0
        %v3657 = vadd.f32 %v3352, %v3656
        %v3658 = vpop.f32.mrf.mxu0
        %3659 = vmatprep.mubr.bf16.mxu0 %v3347
        %3660 = vmatmul.mubr.bf16.gmra.mxu0 %v3346
        %v3661 = vpop.f32.mrf.mxu0
        %v3662 = vadd.f32 %v3352, %v3661
        %v3663 = vpop.f32.mrf.mxu0
        %v3664 = vpop.f32.mrf.mxu0
        %v3665 = vadd.f32 %v3352, %v3664
        %v3666 = vpop.f32.mrf.mxu0
        %3667 = vdwg.mxu0
        %3668 = vmatprep.subr.bf16.mxu0 0
        %3669 = vmatpush1.bf16.msra.mxu0 0
        %3670 = vmatprep.subr.bf16.mxu0 0
        %3671 = vmatpush1.bf16.msra.mxu0 0
        %3672 = vmatprep.subr.bf16.mxu0 0
        %3673 = vmatpush1.bf16.msra.mxu0 0
        %3674 = vmatprep.subr.bf16.mxu0 0
        %3675 = vmatpush1.bf16.msra.mxu0 0
        %3676 = vmatprep.subr.bf16.mxu0 0
        %3677 = vmatpush1.bf16.msra.mxu0 0
        %3678 = vmatprep.subr.bf16.mxu0 0
        %3679 = vmatpush1.bf16.msra.mxu0 0
        %3680 = vmatprep.subr.bf16.mxu0 0
        %3681 = vmatpush1.bf16.msra.mxu0 %v3443
        %3682 = vmatprep.subr.bf16.mxu0 0
        %3683 = vmatpush1.bf16.msra.mxu0 %v3442
        %3684 = vmatprep.subr.bf16.mxu0 0
        %3685 = vmatpush2.bf16.msra.mxu0 0
        %3686 = vmatprep.subr.bf16.mxu0 0
        %3687 = vmatpush2.bf16.msra.mxu0 0
        %3688 = vmatprep.subr.bf16.mxu0 0
        %3689 = vmatpush2.bf16.msra.mxu0 0
        %3690 = vmatprep.subr.bf16.mxu0 0
        %3691 = vmatpush2.bf16.msra.mxu0 0
        %3692 = vmatprep.subr.bf16.mxu0 0
        %3693 = vmatpush2.bf16.msra.mxu0 0
        %3694 = vmatprep.subr.bf16.mxu0 0
        %3695 = vmatpush2.bf16.msra.mxu0 0
        %3696 = vmatprep.subr.bf16.mxu0 0
        %3697 = vmatpush2.bf16.msra.mxu0 0
        %3698 = vmatprep.subr.bf16.mxu0 0
        %3699 = vmatpush2.bf16.msra.mxu0 0
        %3700 = vmatprep.mubr.bf16.mxu0 0
        %3701 = vmatmul.mubr.bf16.gmra.mxu0 %v3463
        %v3702 = vpop.f32.mrf.mxu0
        %v3703 = vadd.f32 %v3542, %v3702
        %v3704 = vpop.f32.mrf.mxu0
        %v3705 = vpop.f32.mrf.mxu0
        %v3706 = vadd.f32 %v3545, %v3705
        %v3707 = vpop.f32.mrf.mxu0
        %3708 = vmatprep.mubr.bf16.mxu0 0
        %3709 = vmatmul.mubr.bf16.gmra.mxu0 %v3466
        %v3710 = vpop.f32.mrf.mxu0
        %v3711 = vadd.f32 %v3550, %v3710
        %v3712 = vpop.f32.mrf.mxu0
        %v3713 = vpop.f32.mrf.mxu0
        %v3714 = vadd.f32 %v3553, %v3713
        %v3715 = vpop.f32.mrf.mxu0
        %3716 = vmatprep.mubr.bf16.mxu0 0
        %3717 = vmatmul.mubr.bf16.gmra.mxu0 %v3469
        %v3718 = vpop.f32.mrf.mxu0
        %v3719 = vadd.f32 %v3558, %v3718
        %v3720 = vpop.f32.mrf.mxu0
        %v3721 = vpop.f32.mrf.mxu0
        %v3722 = vadd.f32 %v3561, %v3721
        %v3723 = vpop.f32.mrf.mxu0
        %3724 = vmatprep.mubr.bf16.mxu0 0
        %3725 = vmatmul.mubr.bf16.gmra.mxu0 %v3472
        %v3726 = vpop.f32.mrf.mxu0
        %v3727 = vadd.f32 %v3566, %v3726
        %v3728 = vpop.f32.mrf.mxu0
        %v3729 = vpop.f32.mrf.mxu0
        %v3730 = vadd.f32 %v3569, %v3729
        %v3731 = vpop.f32.mrf.mxu0
        %3732 = vmatprep.mubr.bf16.mxu0 0
        %3733 = vmatmul.mubr.bf16.gmra.mxu0 %v3475
        %v3734 = vpop.f32.mrf.mxu0
        %v3735 = vadd.f32 %v3574, %v3734
        %v3736 = vpop.f32.mrf.mxu0
        %v3737 = vpop.f32.mrf.mxu0
        %v3738 = vadd.f32 %v3577, %v3737
        %v3739 = vpop.f32.mrf.mxu0
        %3740 = vmatprep.mubr.bf16.mxu0 0
        %3741 = vmatmul.mubr.bf16.gmra.mxu0 %v3478
        %v3742 = vpop.f32.mrf.mxu0
        %v3743 = vadd.f32 %v3582, %v3742
        %v3744 = vpop.f32.mrf.mxu0
        %v3745 = vpop.f32.mrf.mxu0
        %v3746 = vadd.f32 %v3585, %v3745
        %v3747 = vpop.f32.mrf.mxu0
        %3748 = vmatprep.mubr.bf16.mxu0 0
        %3749 = vmatmul.mubr.bf16.gmra.mxu0 %v3481
        %v3750 = vpop.f32.mrf.mxu0
        %v3751 = vadd.f32 %v3590, %v3750
        %v3752 = vpop.f32.mrf.mxu0
        %v3753 = vpop.f32.mrf.mxu0
        %v3754 = vadd.f32 %v3593, %v3753
        %v3755 = vpop.f32.mrf.mxu0
        %3756 = vmatprep.mubr.bf16.mxu0 0
        %3757 = vmatmul.mubr.bf16.gmra.mxu0 %v3484
        %v3758 = vpop.f32.mrf.mxu0
        %v3759 = vadd.f32 %v3598, %v3758
        %v3760 = vpop.f32.mrf.mxu0
        %v3761 = vpop.f32.mrf.mxu0
        %v3762 = vadd.f32 %v3601, %v3761
        %v3763 = vpop.f32.mrf.mxu0
        %3764 = vmatprep.mubr.bf16.mxu0 0
        %3765 = vmatmul.mubr.bf16.gmra.mxu0 %v3487
        %v3766 = vpop.f32.mrf.mxu0
        %v3767 = vadd.f32 %v3606, %v3766
        %v3768 = vpop.f32.mrf.mxu0
        %v3769 = vpop.f32.mrf.mxu0
        %v3770 = vadd.f32 %v3609, %v3769
        %v3771 = vpop.f32.mrf.mxu0
        %3772 = vmatprep.mubr.bf16.mxu0 0
        %3773 = vmatmul.mubr.bf16.gmra.mxu0 %v3490
        %v3774 = vpop.f32.mrf.mxu0
        %v3775 = vadd.f32 %v3614, %v3774
        %v3776 = vpop.f32.mrf.mxu0
        %v3777 = vpop.f32.mrf.mxu0
        %v3778 = vadd.f32 %v3617, %v3777
        %v3779 = vpop.f32.mrf.mxu0
        %3780 = vmatprep.mubr.bf16.mxu0 0
        %3781 = vmatmul.mubr.bf16.gmra.mxu0 %v3493
        %v3782 = vpop.f32.mrf.mxu0
        %v3783 = vadd.f32 %v3622, %v3782
        %v3784 = vpop.f32.mrf.mxu0
        %v3785 = vpop.f32.mrf.mxu0
        %v3786 = vadd.f32 %v3625, %v3785
        %v3787 = vpop.f32.mrf.mxu0
        %3788 = vmatprep.mubr.bf16.mxu0 0
        %3789 = vmatmul.mubr.bf16.gmra.mxu0 %v3496
        %v3790 = vpop.f32.mrf.mxu0
        %v3791 = vadd.f32 %v3630, %v3790
        %v3792 = vpop.f32.mrf.mxu0
        %v3793 = vpop.f32.mrf.mxu0
        %v3794 = vadd.f32 %v3633, %v3793
        %v3795 = vpop.f32.mrf.mxu0
        %3796 = vmatprep.mubr.bf16.mxu0 0
        %3797 = vmatmul.mubr.bf16.gmra.mxu0 %v3499
        %v3798 = vpop.f32.mrf.mxu0
        %v3799 = vadd.f32 %v3638, %v3798
        %v3800 = vpop.f32.mrf.mxu0
        %v3801 = vpop.f32.mrf.mxu0
        %v3802 = vadd.f32 %v3641, %v3801
        %v3803 = vpop.f32.mrf.mxu0
        %3804 = vmatprep.mubr.bf16.mxu0 0
        %3805 = vmatmul.mubr.bf16.gmra.mxu0 %v3502
        %v3806 = vpop.f32.mrf.mxu0
        %v3807 = vadd.f32 %v3646, %v3806
        %v3808 = vpop.f32.mrf.mxu0
        %v3809 = vpop.f32.mrf.mxu0
        %v3810 = vadd.f32 %v3649, %v3809
        %v3811 = vpop.f32.mrf.mxu0
        %3812 = vmatprep.mubr.bf16.mxu0 0
        %3813 = vmatmul.mubr.bf16.gmra.mxu0 %v3505
        %v3814 = vpop.f32.mrf.mxu0
        %v3815 = vadd.f32 %v3654, %v3814
        %v3816 = vpop.f32.mrf.mxu0
        %v3817 = vpop.f32.mrf.mxu0
        %v3818 = vadd.f32 %v3657, %v3817
        %v3819 = vpop.f32.mrf.mxu0
        %3820 = vmatprep.mubr.bf16.mxu0 0
        %3821 = vmatmul.mubr.bf16.gmra.mxu0 %v1682
        %v3822 = vpop.f32.mrf.mxu0
        %v3823 = vadd.f32 %v3662, %v3822
        %v3824 = vpop.f32.mrf.mxu0
        %v3825 = vpop.f32.mrf.mxu0
        %v3826 = vadd.f32 %v3665, %v3825
        %v3827 = vpop.f32.mrf.mxu0
        %3828 = vdwg.mxu0
        %s3829 = scalar_lea.vmem %s3, 1
        %v3830 = vld [vmem:[%s3829] sm:$0x1]
        %vm3831 = vcmp.ge.f32.partialorder %v3703, 0.0
        %vm3832 = vcmp.ge.f32.partialorder %v3706, 0.0
        %vm3833 = vcmp.ge.f32.partialorder %v3711, 0.0
        %vm3834 = vcmp.ge.f32.partialorder %v3714, 0.0
        %vm3835 = vcmp.ge.f32.partialorder %v3719, 0.0
        %vm3836 = vcmp.ge.f32.partialorder %v3722, 0.0
        %vm3837 = vcmp.ge.f32.partialorder %v3727, 0.0
        %vm3838 = vcmp.ge.f32.partialorder %v3730, 0.0
        %vm3839 = vcmp.ge.f32.partialorder %v3735, 0.0
        %vm3840 = vcmp.ge.f32.partialorder %v3738, 0.0
        %vm3841 = vcmp.ge.f32.partialorder %v3743, 0.0
        %vm3842 = vcmp.ge.f32.partialorder %v3746, 0.0
        %vm3843 = vcmp.ge.f32.partialorder %v3751, 0.0
        %vm3844 = vcmp.ge.f32.partialorder %v3754, 0.0
        %vm3845 = vcmp.ge.f32.partialorder %v3759, 0.0
        %vm3846 = vcmp.ge.f32.partialorder %v3762, 0.0
        %vm3847 = vcmp.ge.f32.partialorder %v3767, 0.0
        %vm3848 = vcmp.ge.f32.partialorder %v3770, 0.0
        %vm3849 = vcmp.ge.f32.partialorder %v3775, 0.0
        %vm3850 = vcmp.ge.f32.partialorder %v3778, 0.0
        %vm3851 = vcmp.ge.f32.partialorder %v3783, 0.0
        %vm3852 = vcmp.ge.f32.partialorder %v3786, 0.0
        %vm3853 = vcmp.ge.f32.partialorder %v3791, 0.0
        %vm3854 = vcmp.ge.f32.partialorder %v3794, 0.0
        %vm3855 = vcmp.ge.f32.partialorder %v3799, 0.0
        %vm3856 = vcmp.ge.f32.partialorder %v3802, 0.0
        %vm3857 = vcmp.ge.f32.partialorder %v3807, 0.0
        %vm3858 = vcmp.ge.f32.partialorder %v3810, 0.0
        %vm3859 = vcmp.ge.f32.partialorder %v3815, 0.0
        %vm3860 = vcmp.ge.f32.partialorder %v3818, 0.0
        %vm3861 = vcmp.ge.f32.partialorder %v3823, 0.0
        %vm3862 = vcmp.ge.f32.partialorder %v3826, 0.0
        %v3864 = vlaneseq
        %v3865 = vshrl.u32 %v3864, 7
        %v3866 = vsub.s32 0, %v3865
        %v3867 = vrot.slane %v3830, %v3866
        %v3869 = vmul.f32 %v3867, %v3703
        %v3870 = vmul.f32 %v3867, %v3706
        %v3871 = vmul.f32 %v3867, %v3711
        %v3872 = vmul.f32 %v3867, %v3714
        %v3873 = vmul.f32 %v3867, %v3719
        %v3874 = vmul.f32 %v3867, %v3722
        %v3875 = vmul.f32 %v3867, %v3727
        %v3876 = vmul.f32 %v3867, %v3730
        %v3877 = vmul.f32 %v3867, %v3735
        %v3878 = vmul.f32 %v3867, %v3738
        %v3879 = vmul.f32 %v3867, %v3743
        %v3880 = vmul.f32 %v3867, %v3746
        %v3881 = vmul.f32 %v3867, %v3751
        %v3882 = vmul.f32 %v3867, %v3754
        %v3883 = vmul.f32 %v3867, %v3759
        %v3884 = vmul.f32 %v3867, %v3762
        %v3885 = vmul.f32 %v3867, %v3767
        %v3886 = vmul.f32 %v3867, %v3770
        %v3887 = vmul.f32 %v3867, %v3775
        %v3888 = vmul.f32 %v3867, %v3778
        %v3889 = vmul.f32 %v3867, %v3783
        %v3890 = vmul.f32 %v3867, %v3786
        %v3891 = vmul.f32 %v3867, %v3791
        %v3892 = vmul.f32 %v3867, %v3794
        %v3893 = vmul.f32 %v3867, %v3799
        %v3894 = vmul.f32 %v3867, %v3802
        %v3895 = vmul.f32 %v3867, %v3807
        %v3896 = vmul.f32 %v3867, %v3810
        %v3897 = vmul.f32 %v3867, %v3815
        %v3898 = vmul.f32 %v3867, %v3818
        %v3899 = vmul.f32 %v3867, %v3823
        %v3900 = vmul.f32 %v3867, %v3826
        %v3901 = vsel %vm3831, %v3703, %v3869
        %v3902 = vsel %vm3832, %v3706, %v3870
        %v3903 = vsel %vm3833, %v3711, %v3871
        %v3904 = vsel %vm3834, %v3714, %v3872
        %v3905 = vsel %vm3835, %v3719, %v3873
        %v3906 = vsel %vm3836, %v3722, %v3874
        %v3907 = vsel %vm3837, %v3727, %v3875
        %v3908 = vsel %vm3838, %v3730, %v3876
        %v3909 = vsel %vm3839, %v3735, %v3877
        %v3910 = vsel %vm3840, %v3738, %v3878
        %v3911 = vsel %vm3841, %v3743, %v3879
        %v3912 = vsel %vm3842, %v3746, %v3880
        %v3913 = vsel %vm3843, %v3751, %v3881
        %v3914 = vsel %vm3844, %v3754, %v3882
        %v3915 = vsel %vm3845, %v3759, %v3883
        %v3916 = vsel %vm3846, %v3762, %v3884
        %v3917 = vsel %vm3847, %v3767, %v3885
        %v3918 = vsel %vm3848, %v3770, %v3886
        %v3919 = vsel %vm3849, %v3775, %v3887
        %v3920 = vsel %vm3850, %v3778, %v3888
        %v3921 = vsel %vm3851, %v3783, %v3889
        %v3922 = vsel %vm3852, %v3786, %v3890
        %v3923 = vsel %vm3853, %v3791, %v3891
        %v3924 = vsel %vm3854, %v3794, %v3892
        %v3925 = vsel %vm3855, %v3799, %v3893
        %v3926 = vsel %vm3856, %v3802, %v3894
        %v3927 = vsel %vm3857, %v3807, %v3895
        %v3928 = vsel %vm3858, %v3810, %v3896
        %v3929 = vsel %vm3859, %v3815, %v3897
        %v3930 = vsel %vm3860, %v3818, %v3898
        %v3931 = vsel %vm3861, %v3823, %v3899
        %v3932 = vsel %vm3862, %v3826, %v3900
        %s3933 = scalar_lea.vmem %s1, 288
        %v3934 = vld [vmem:[%s3933] sm:$0xf]
        %v3935 = vld [vmem:[%s3933 + $0x4] sm:$0xf]
        %v3936 = vld [vmem:[%s3933 + $0x8] sm:$0xf]
        %v3937 = vld [vmem:[%s3933 + $0xc] sm:$0xf]
        %v3938 = vld [vmem:[%s3933 + $0x10] sm:$0xf]
        %v3939 = vld [vmem:[%s3933 + $0x14] sm:$0xf]
        %v3940 = vld [vmem:[%s3933 + $0x18] sm:$0xf]
        %v3941 = vld [vmem:[%s3933 + $0x1c] sm:$0xf]
        %v3942 = vld [vmem:[%s3933 + $0x20] sm:$0xf]
        %v3943 = vld [vmem:[%s3933 + $0x24] sm:$0xf]
        %v3944 = vld [vmem:[%s3933 + $0x28] sm:$0xf]
        %v3945 = vld [vmem:[%s3933 + $0x2c] sm:$0xf]
        %v3946 = vld [vmem:[%s3933 + $0x30] sm:$0xf]
        %v3947 = vld [vmem:[%s3933 + $0x34] sm:$0xf]
        %v3948 = vld [vmem:[%s3933 + $0x38] sm:$0xf]
        %v3949 = vld [vmem:[%s3933 + $0x3c] sm:$0xf]
        %v3950 = vld [vmem:[%s3933 + $0x40] sm:$0xf]
        %v3951 = vld [vmem:[%s3933 + $0x44] sm:$0xf]
        %v3952 = vld [vmem:[%s3933 + $0x48] sm:$0xf]
        %v3953 = vld [vmem:[%s3933 + $0x4c] sm:$0xf]
        %v3954 = vld [vmem:[%s3933 + $0x50] sm:$0xf]
        %v3955 = vld [vmem:[%s3933 + $0x54] sm:$0xf]
        %v3956 = vld [vmem:[%s3933 + $0x58] sm:$0xf]
        %v3957 = vld [vmem:[%s3933 + $0x5c] sm:$0xf]
        %v3958 = vld [vmem:[%s3933 + $0x60] sm:$0xf]
        %v3959 = vld [vmem:[%s3933 + $0x64] sm:$0xf]
        %v3960 = vld [vmem:[%s3933 + $0x68] sm:$0xf]
        %v3961 = vld [vmem:[%s3933 + $0x6c] sm:$0xf]
        %v3962 = vld [vmem:[%s3933 + $0x70] sm:$0xf]
        %v3963 = vld [vmem:[%s3933 + $0x74] sm:$0xf]
        %v3964 = vld [vmem:[%s3933 + $0x78] sm:$0xf]
        %v3965 = vld [vmem:[%s3933 + $0x7c] sm:$0xf]
        %v3966 = vld [vmem:[%s3933 + $0x80] sm:$0xf]
        %v3967 = vld [vmem:[%s3933 + $0x84] sm:$0xf]
        %v3968 = vld [vmem:[%s3933 + $0x88] sm:$0xf]
        %v3969 = vld [vmem:[%s3933 + $0x8c] sm:$0xf]
        %s3970 = scalar_lea.vmem %s2, 2
        %v3971 = vld [vmem:[%s3970] sm:$0x1]
        %v4004 = vrot.slane %v3901, 7
        %v4005 = vrot.slane %v3902, 7
        %v4006 = vsel %vm299, %v4004, %v4005
        %v4007 = vrot.slane %v3903, 7
        %v4008 = vrot.slane %v3904, 7
        %v4009 = vsel %vm299, %v4007, %v4008
        %v4010 = vrot.slane %v3905, 7
        %v4011 = vrot.slane %v3906, 7
        %v4012 = vsel %vm299, %v4010, %v4011
        %v4013 = vrot.slane %v3907, 7
        %v4014 = vrot.slane %v3908, 7
        %v4015 = vsel %vm299, %v4013, %v4014
        %v4016 = vrot.slane %v3909, 7
        %v4017 = vrot.slane %v3910, 7
        %v4018 = vsel %vm299, %v4016, %v4017
        %v4019 = vrot.slane %v3911, 7
        %v4020 = vrot.slane %v3912, 7
        %v4021 = vsel %vm299, %v4019, %v4020
        %v4022 = vrot.slane %v3913, 7
        %v4023 = vrot.slane %v3914, 7
        %v4024 = vsel %vm299, %v4022, %v4023
        %v4025 = vrot.slane %v3915, 7
        %v4026 = vrot.slane %v3916, 7
        %v4027 = vsel %vm299, %v4025, %v4026
        %v4028 = vrot.slane %v3917, 7
        %v4029 = vrot.slane %v3918, 7
        %v4030 = vsel %vm299, %v4028, %v4029
        %v4031 = vrot.slane %v3919, 7
        %v4032 = vrot.slane %v3920, 7
        %v4033 = vsel %vm299, %v4031, %v4032
        %v4034 = vrot.slane %v3921, 7
        %v4035 = vrot.slane %v3922, 7
        %v4036 = vsel %vm299, %v4034, %v4035
        %v4037 = vrot.slane %v3923, 7
        %v4038 = vrot.slane %v3924, 7
        %v4039 = vsel %vm299, %v4037, %v4038
        %v4040 = vrot.slane %v3925, 7
        %v4041 = vrot.slane %v3926, 7
        %v4042 = vsel %vm299, %v4040, %v4041
        %v4043 = vrot.slane %v3927, 7
        %v4044 = vrot.slane %v3928, 7
        %v4045 = vsel %vm299, %v4043, %v4044
        %v4046 = vrot.slane %v3929, 7
        %v4047 = vrot.slane %v3930, 7
        %v4048 = vsel %vm299, %v4046, %v4047
        %v4049 = vrot.slane %v3931, 7
        %v4050 = vrot.slane %v3932, 7
        %v4051 = vsel %vm299, %v4049, %v4050
        %v4099 = vsel %vm299, 0.0, %v4004
        %v4100 = vsel %vm299, 0.0, %v4007
        %v4101 = vsel %vm299, 0.0, %v4010
        %v4102 = vsel %vm299, 0.0, %v4013
        %v4103 = vsel %vm299, 0.0, %v4016
        %v4104 = vsel %vm299, 0.0, %v4019
        %v4105 = vsel %vm299, 0.0, %v4022
        %v4106 = vsel %vm299, 0.0, %v4025
        %v4107 = vsel %vm299, 0.0, %v4028
        %v4108 = vsel %vm299, 0.0, %v4031
        %v4109 = vsel %vm299, 0.0, %v4034
        %v4110 = vsel %vm299, 0.0, %v4037
        %v4111 = vsel %vm299, 0.0, %v4040
        %v4112 = vsel %vm299, 0.0, %v4043
        %v4113 = vsel %vm299, 0.0, %v4046
        %v4114 = vsel %vm299, 0.0, %v4049
        %v4115 = vsel %vm299, %v4005, 0.0
        %v4116 = vsel %vm299, %v4008, 0.0
        %v4117 = vsel %vm299, %v4011, 0.0
        %v4118 = vsel %vm299, %v4014, 0.0
        %v4119 = vsel %vm299, %v4017, 0.0
        %v4120 = vsel %vm299, %v4020, 0.0
        %v4121 = vsel %vm299, %v4023, 0.0
        %v4122 = vsel %vm299, %v4026, 0.0
        %v4123 = vsel %vm299, %v4029, 0.0
        %v4124 = vsel %vm299, %v4032, 0.0
        %v4125 = vsel %vm299, %v4035, 0.0
        %v4126 = vsel %vm299, %v4038, 0.0
        %v4127 = vsel %vm299, %v4041, 0.0
        %v4128 = vsel %vm299, %v4044, 0.0
        %v4129 = vsel %vm299, %v4047, 0.0
        %v4130 = vsel %vm299, %v4050, 0.0
        %v4161 = vrot.slane %v4099, 1
        %v4162 = vrot.slane %v4006, 1
        %v4163 = vsel %vm465, %v4161, %v4162
        %v4164 = vrot.slane %v4115, 1
        %v4165 = vsel %vm465, %v4162, %v4164
        %v4166 = vrot.slane %v4100, 1
        %v4167 = vrot.slane %v4009, 1
        %v4168 = vsel %vm465, %v4166, %v4167
        %v4169 = vrot.slane %v4116, 1
        %v4170 = vsel %vm465, %v4167, %v4169
        %v4171 = vrot.slane %v4101, 1
        %v4172 = vrot.slane %v4012, 1
        %v4173 = vsel %vm465, %v4171, %v4172
        %v4174 = vrot.slane %v4117, 1
        %v4175 = vsel %vm465, %v4172, %v4174
        %v4176 = vrot.slane %v4102, 1
        %v4177 = vrot.slane %v4015, 1
        %v4178 = vsel %vm465, %v4176, %v4177
        %v4179 = vrot.slane %v4118, 1
        %v4180 = vsel %vm465, %v4177, %v4179
        %v4181 = vrot.slane %v4103, 1
        %v4182 = vrot.slane %v4018, 1
        %v4183 = vsel %vm465, %v4181, %v4182
        %v4184 = vrot.slane %v4119, 1
        %v4185 = vsel %vm465, %v4182, %v4184
        %v4186 = vrot.slane %v4104, 1
        %v4187 = vrot.slane %v4021, 1
        %v4188 = vsel %vm465, %v4186, %v4187
        %v4189 = vrot.slane %v4120, 1
        %v4190 = vsel %vm465, %v4187, %v4189
        %v4191 = vrot.slane %v4105, 1
        %v4192 = vrot.slane %v4024, 1
        %v4193 = vsel %vm465, %v4191, %v4192
        %v4194 = vrot.slane %v4121, 1
        %v4195 = vsel %vm465, %v4192, %v4194
        %v4196 = vrot.slane %v4106, 1
        %v4197 = vrot.slane %v4027, 1
        %v4198 = vsel %vm465, %v4196, %v4197
        %v4199 = vrot.slane %v4122, 1
        %v4200 = vsel %vm465, %v4197, %v4199
        %v4201 = vrot.slane %v4107, 1
        %v4202 = vrot.slane %v4030, 1
        %v4203 = vsel %vm465, %v4201, %v4202
        %v4204 = vrot.slane %v4123, 1
        %v4205 = vsel %vm465, %v4202, %v4204
        %v4206 = vrot.slane %v4108, 1
        %v4207 = vrot.slane %v4033, 1
        %v4208 = vsel %vm465, %v4206, %v4207
        %v4209 = vrot.slane %v4124, 1
        %v4210 = vsel %vm465, %v4207, %v4209
        %v4211 = vrot.slane %v4109, 1
        %v4212 = vrot.slane %v4036, 1
        %v4213 = vsel %vm465, %v4211, %v4212
        %v4214 = vrot.slane %v4125, 1
        %v4215 = vsel %vm465, %v4212, %v4214
        %v4216 = vrot.slane %v4110, 1
        %v4217 = vrot.slane %v4039, 1
        %v4218 = vsel %vm465, %v4216, %v4217
        %v4219 = vrot.slane %v4126, 1
        %v4220 = vsel %vm465, %v4217, %v4219
        %v4221 = vrot.slane %v4111, 1
        %v4222 = vrot.slane %v4042, 1
        %v4223 = vsel %vm465, %v4221, %v4222
        %v4224 = vrot.slane %v4127, 1
        %v4225 = vsel %vm465, %v4222, %v4224
        %v4226 = vrot.slane %v4112, 1
        %v4227 = vrot.slane %v4045, 1
        %v4228 = vsel %vm465, %v4226, %v4227
        %v4229 = vrot.slane %v4128, 1
        %v4230 = vsel %vm465, %v4227, %v4229
        %v4231 = vrot.slane %v4113, 1
        %v4232 = vrot.slane %v4048, 1
        %v4233 = vsel %vm465, %v4231, %v4232
        %v4234 = vrot.slane %v4129, 1
        %v4235 = vsel %vm465, %v4232, %v4234
        %v4236 = vrot.slane %v4099, 2
        %v4237 = vrot.slane %v4006, 2
        %v4238 = vsel %vm546, %v4236, %v4237
        %v4239 = vrot.slane %v4115, 2
        %v4240 = vsel %vm546, %v4237, %v4239
        %v4241 = vrot.slane %v4100, 2
        %v4242 = vrot.slane %v4009, 2
        %v4243 = vsel %vm546, %v4241, %v4242
        %v4244 = vrot.slane %v4116, 2
        %v4245 = vsel %vm546, %v4242, %v4244
        %v4246 = vrot.slane %v4101, 2
        %v4247 = vrot.slane %v4012, 2
        %v4248 = vsel %vm546, %v4246, %v4247
        %v4249 = vrot.slane %v4117, 2
        %v4250 = vsel %vm546, %v4247, %v4249
        %v4251 = vrot.slane %v4102, 2
        %v4252 = vrot.slane %v4015, 2
        %v4253 = vsel %vm546, %v4251, %v4252
        %v4254 = vrot.slane %v4118, 2
        %v4255 = vsel %vm546, %v4252, %v4254
        %v4256 = vrot.slane %v4103, 2
        %v4257 = vrot.slane %v4018, 2
        %v4258 = vsel %vm546, %v4256, %v4257
        %v4259 = vrot.slane %v4119, 2
        %v4260 = vsel %vm546, %v4257, %v4259
        %v4261 = vrot.slane %v4104, 2
        %v4262 = vrot.slane %v4021, 2
        %v4263 = vsel %vm546, %v4261, %v4262
        %v4264 = vrot.slane %v4120, 2
        %v4265 = vsel %vm546, %v4262, %v4264
        %v4266 = vrot.slane %v4105, 2
        %v4267 = vrot.slane %v4024, 2
        %v4268 = vsel %vm546, %v4266, %v4267
        %v4269 = vrot.slane %v4121, 2
        %v4270 = vsel %vm546, %v4267, %v4269
        %v4271 = vrot.slane %v4106, 2
        %v4272 = vrot.slane %v4027, 2
        %v4273 = vsel %vm546, %v4271, %v4272
        %v4274 = vrot.slane %v4122, 2
        %v4275 = vsel %vm546, %v4272, %v4274
        %v4276 = vrot.slane %v4107, 2
        %v4277 = vrot.slane %v4030, 2
        %v4278 = vsel %vm546, %v4276, %v4277
        %v4279 = vrot.slane %v4123, 2
        %v4280 = vsel %vm546, %v4277, %v4279
        %v4281 = vrot.slane %v4108, 2
        %v4282 = vrot.slane %v4033, 2
        %v4283 = vsel %vm546, %v4281, %v4282
        %v4284 = vrot.slane %v4124, 2
        %v4285 = vsel %vm546, %v4282, %v4284
        %v4286 = vrot.slane %v4109, 2
        %v4287 = vrot.slane %v4036, 2
        %v4288 = vsel %vm546, %v4286, %v4287
        %v4289 = vrot.slane %v4125, 2
        %v4290 = vsel %vm546, %v4287, %v4289
        %v4291 = vrot.slane %v4110, 2
        %v4292 = vrot.slane %v4039, 2
        %v4293 = vsel %vm546, %v4291, %v4292
        %v4294 = vrot.slane %v4126, 2
        %v4295 = vsel %vm546, %v4292, %v4294
        %v4296 = vrot.slane %v4111, 2
        %v4297 = vrot.slane %v4042, 2
        %v4298 = vsel %vm546, %v4296, %v4297
        %v4299 = vrot.slane %v4127, 2
        %v4300 = vsel %vm546, %v4297, %v4299
        %v4301 = vrot.slane %v4112, 2
        %v4302 = vrot.slane %v4045, 2
        %v4303 = vsel %vm546, %v4301, %v4302
        %v4304 = vrot.slane %v4128, 2
        %v4305 = vsel %vm546, %v4302, %v4304
        %v4306 = vrot.slane %v4113, 2
        %v4307 = vrot.slane %v4048, 2
        %v4308 = vsel %vm546, %v4306, %v4307
        %v4309 = vrot.slane %v4129, 2
        %v4310 = vsel %vm546, %v4307, %v4309
        %v4313 = vrot.slane %v4114, 1
        %v4314 = vrot.slane %v4051, 1
        %v4315 = vsel %vm465, %v4313, %v4314
        %v4316 = vrot.slane %v4130, 1
        %v4317 = vsel %vm465, %v4314, %v4316
        %v4350 = vrot.slane %v4114, 2
        %v4351 = vrot.slane %v4051, 2
        %v4352 = vsel %vm546, %v4350, %v4351
        %v4353 = vrot.slane %v4130, 2
        %v4354 = vsel %vm546, %v4351, %v4353
        %4385 = vrot.lane.b32.xlu0 %v4163, 32
        %v4386 = vpop.permute.xlu0 %4385
        %4387 = vrot.lane.b32.xlu0 %v4165, 32
        %v4388 = vpop.permute.xlu0 %4387
        %4389 = vrot.lane.b32.xlu0 %v4168, 32
        %v4390 = vpop.permute.xlu0 %4389
        %4391 = vrot.lane.b32.xlu0 %v4170, 32
        %v4392 = vpop.permute.xlu0 %4391
        %4393 = vrot.lane.b32.xlu0 %v4173, 32
        %v4394 = vpop.permute.xlu0 %4393
        %4395 = vrot.lane.b32.xlu0 %v4175, 32
        %v4396 = vpop.permute.xlu0 %4395
        %4397 = vrot.lane.b32.xlu0 %v4178, 32
        %v4398 = vpop.permute.xlu0 %4397
        %4399 = vrot.lane.b32.xlu0 %v4180, 32
        %v4400 = vpop.permute.xlu0 %4399
        %4401 = vrot.lane.b32.xlu0 %v4183, 32
        %v4402 = vpop.permute.xlu0 %4401
        %4403 = vrot.lane.b32.xlu0 %v4185, 32
        %v4404 = vpop.permute.xlu0 %4403
        %4405 = vrot.lane.b32.xlu0 %v4188, 32
        %v4406 = vpop.permute.xlu0 %4405
        %4407 = vrot.lane.b32.xlu0 %v4190, 32
        %v4408 = vpop.permute.xlu0 %4407
        %4409 = vrot.lane.b32.xlu0 %v4193, 32
        %v4410 = vpop.permute.xlu0 %4409
        %4411 = vrot.lane.b32.xlu0 %v4195, 32
        %v4412 = vpop.permute.xlu0 %4411
        %4413 = vrot.lane.b32.xlu0 %v4198, 32
        %v4414 = vpop.permute.xlu0 %4413
        %4415 = vrot.lane.b32.xlu0 %v4200, 32
        %v4416 = vpop.permute.xlu0 %4415
        %4417 = vrot.lane.b32.xlu0 %v4203, 32
        %v4418 = vpop.permute.xlu0 %4417
        %4419 = vrot.lane.b32.xlu0 %v4205, 32
        %v4420 = vpop.permute.xlu0 %4419
        %4421 = vrot.lane.b32.xlu0 %v4208, 32
        %v4422 = vpop.permute.xlu0 %4421
        %4423 = vrot.lane.b32.xlu0 %v4210, 32
        %v4424 = vpop.permute.xlu0 %4423
        %4425 = vrot.lane.b32.xlu0 %v4213, 32
        %v4426 = vpop.permute.xlu0 %4425
        %4427 = vrot.lane.b32.xlu0 %v4215, 32
        %v4428 = vpop.permute.xlu0 %4427
        %4429 = vrot.lane.b32.xlu0 %v4218, 32
        %v4430 = vpop.permute.xlu0 %4429
        %4431 = vrot.lane.b32.xlu0 %v4220, 32
        %v4432 = vpop.permute.xlu0 %4431
        %4433 = vrot.lane.b32.xlu0 %v4223, 32
        %v4434 = vpop.permute.xlu0 %4433
        %4435 = vrot.lane.b32.xlu0 %v4225, 32
        %v4436 = vpop.permute.xlu0 %4435
        %4437 = vrot.lane.b32.xlu0 %v4228, 32
        %v4438 = vpop.permute.xlu0 %4437
        %4439 = vrot.lane.b32.xlu0 %v4230, 32
        %v4440 = vpop.permute.xlu0 %4439
        %4441 = vrot.lane.b32.xlu0 %v4233, 32
        %v4442 = vpop.permute.xlu0 %4441
        %4443 = vrot.lane.b32.xlu0 %v4235, 32
        %v4444 = vpop.permute.xlu0 %4443
        %4475 = vrot.lane.b32.xlu0 %v4238, 64
        %v4476 = vpop.permute.xlu0 %4475
        %4477 = vrot.lane.b32.xlu0 %v4240, 64
        %v4478 = vpop.permute.xlu0 %4477
        %4479 = vrot.lane.b32.xlu0 %v4243, 64
        %v4480 = vpop.permute.xlu0 %4479
        %4481 = vrot.lane.b32.xlu0 %v4245, 64
        %v4482 = vpop.permute.xlu0 %4481
        %4483 = vrot.lane.b32.xlu0 %v4248, 64
        %v4484 = vpop.permute.xlu0 %4483
        %4485 = vrot.lane.b32.xlu0 %v4250, 64
        %v4486 = vpop.permute.xlu0 %4485
        %4487 = vrot.lane.b32.xlu0 %v4253, 64
        %v4488 = vpop.permute.xlu0 %4487
        %4489 = vrot.lane.b32.xlu0 %v4255, 64
        %v4490 = vpop.permute.xlu0 %4489
        %4491 = vrot.lane.b32.xlu0 %v4258, 64
        %v4492 = vpop.permute.xlu0 %4491
        %4493 = vrot.lane.b32.xlu0 %v4260, 64
        %v4494 = vpop.permute.xlu0 %4493
        %4495 = vrot.lane.b32.xlu0 %v4263, 64
        %v4496 = vpop.permute.xlu0 %4495
        %4497 = vrot.lane.b32.xlu0 %v4265, 64
        %v4498 = vpop.permute.xlu0 %4497
        %4499 = vrot.lane.b32.xlu0 %v4268, 64
        %v4500 = vpop.permute.xlu0 %4499
        %4501 = vrot.lane.b32.xlu0 %v4270, 64
        %v4502 = vpop.permute.xlu0 %4501
        %4503 = vrot.lane.b32.xlu0 %v4273, 64
        %v4504 = vpop.permute.xlu0 %4503
        %4505 = vrot.lane.b32.xlu0 %v4275, 64
        %v4506 = vpop.permute.xlu0 %4505
        %4507 = vrot.lane.b32.xlu0 %v4278, 64
        %v4508 = vpop.permute.xlu0 %4507
        %4509 = vrot.lane.b32.xlu0 %v4280, 64
        %v4510 = vpop.permute.xlu0 %4509
        %4511 = vrot.lane.b32.xlu0 %v4283, 64
        %v4512 = vpop.permute.xlu0 %4511
        %4513 = vrot.lane.b32.xlu0 %v4285, 64
        %v4514 = vpop.permute.xlu0 %4513
        %4515 = vrot.lane.b32.xlu0 %v4288, 64
        %v4516 = vpop.permute.xlu0 %4515
        %4517 = vrot.lane.b32.xlu0 %v4290, 64
        %v4518 = vpop.permute.xlu0 %4517
        %4519 = vrot.lane.b32.xlu0 %v4293, 64
        %v4520 = vpop.permute.xlu0 %4519
        %4521 = vrot.lane.b32.xlu0 %v4295, 64
        %v4522 = vpop.permute.xlu0 %4521
        %4523 = vrot.lane.b32.xlu0 %v4298, 64
        %v4524 = vpop.permute.xlu0 %4523
        %4525 = vrot.lane.b32.xlu0 %v4300, 64
        %v4526 = vpop.permute.xlu0 %4525
        %4527 = vrot.lane.b32.xlu0 %v4303, 64
        %v4528 = vpop.permute.xlu0 %4527
        %4529 = vrot.lane.b32.xlu0 %v4305, 64
        %v4530 = vpop.permute.xlu0 %4529
        %4531 = vrot.lane.b32.xlu0 %v4308, 64
        %v4532 = vpop.permute.xlu0 %4531
        %4533 = vrot.lane.b32.xlu0 %v4310, 64
        %v4534 = vpop.permute.xlu0 %4533
        %4565 = vrot.lane.b32.xlu0 %v4099, 96
        %v4566 = vpop.permute.xlu0 %4565
        %4567 = vrot.lane.b32.xlu0 %v4006, 96
        %v4568 = vpop.permute.xlu0 %4567
        %4569 = vrot.lane.b32.xlu0 %v4100, 96
        %v4570 = vpop.permute.xlu0 %4569
        %4571 = vrot.lane.b32.xlu0 %v4009, 96
        %v4572 = vpop.permute.xlu0 %4571
        %4573 = vrot.lane.b32.xlu0 %v4101, 96
        %v4574 = vpop.permute.xlu0 %4573
        %4575 = vrot.lane.b32.xlu0 %v4012, 96
        %v4576 = vpop.permute.xlu0 %4575
        %4577 = vrot.lane.b32.xlu0 %v4102, 96
        %v4578 = vpop.permute.xlu0 %4577
        %4579 = vrot.lane.b32.xlu0 %v4015, 96
        %v4580 = vpop.permute.xlu0 %4579
        %4581 = vrot.lane.b32.xlu0 %v4103, 96
        %v4582 = vpop.permute.xlu0 %4581
        %4583 = vrot.lane.b32.xlu0 %v4018, 96
        %v4584 = vpop.permute.xlu0 %4583
        %4585 = vrot.lane.b32.xlu0 %v4104, 96
        %v4586 = vpop.permute.xlu0 %4585
        %4587 = vrot.lane.b32.xlu0 %v4021, 96
        %v4588 = vpop.permute.xlu0 %4587
        %4589 = vrot.lane.b32.xlu0 %v4105, 96
        %v4590 = vpop.permute.xlu0 %4589
        %4591 = vrot.lane.b32.xlu0 %v4024, 96
        %v4592 = vpop.permute.xlu0 %4591
        %4593 = vrot.lane.b32.xlu0 %v4106, 96
        %v4594 = vpop.permute.xlu0 %4593
        %4595 = vrot.lane.b32.xlu0 %v4027, 96
        %v4596 = vpop.permute.xlu0 %4595
        %4597 = vrot.lane.b32.xlu0 %v4107, 96
        %v4598 = vpop.permute.xlu0 %4597
        %4599 = vrot.lane.b32.xlu0 %v4030, 96
        %v4600 = vpop.permute.xlu0 %4599
        %4601 = vrot.lane.b32.xlu0 %v4108, 96
        %v4602 = vpop.permute.xlu0 %4601
        %4603 = vrot.lane.b32.xlu0 %v4033, 96
        %v4604 = vpop.permute.xlu0 %4603
        %4605 = vrot.lane.b32.xlu0 %v4109, 96
        %v4606 = vpop.permute.xlu0 %4605
        %4607 = vrot.lane.b32.xlu0 %v4036, 96
        %v4608 = vpop.permute.xlu0 %4607
        %4609 = vrot.lane.b32.xlu0 %v4110, 96
        %v4610 = vpop.permute.xlu0 %4609
        %4611 = vrot.lane.b32.xlu0 %v4039, 96
        %v4612 = vpop.permute.xlu0 %4611
        %4613 = vrot.lane.b32.xlu0 %v4111, 96
        %v4614 = vpop.permute.xlu0 %4613
        %4615 = vrot.lane.b32.xlu0 %v4042, 96
        %v4616 = vpop.permute.xlu0 %4615
        %4617 = vrot.lane.b32.xlu0 %v4112, 96
        %v4618 = vpop.permute.xlu0 %4617
        %4619 = vrot.lane.b32.xlu0 %v4045, 96
        %v4620 = vpop.permute.xlu0 %4619
        %4621 = vrot.lane.b32.xlu0 %v4113, 96
        %v4622 = vpop.permute.xlu0 %4621
        %4623 = vrot.lane.b32.xlu0 %v4048, 96
        %v4624 = vpop.permute.xlu0 %4623
        %4625 = vrot.lane.b32.xlu0 %v4114, 96
        %v4626 = vpop.permute.xlu0 %4625
        %4627 = vrot.lane.b32.xlu0 %v4051, 96
        %v4628 = vpop.permute.xlu0 %4627
        %4661 = vrot.lane.b32.xlu0 %v4238, 32
        %v4662 = vpop.permute.xlu0 %4661
        %4663 = vrot.lane.b32.xlu0 %v4240, 32
        %v4664 = vpop.permute.xlu0 %4663
        %4665 = vrot.lane.b32.xlu0 %v4243, 32
        %v4666 = vpop.permute.xlu0 %4665
        %4667 = vrot.lane.b32.xlu0 %v4245, 32
        %v4668 = vpop.permute.xlu0 %4667
        %4669 = vrot.lane.b32.xlu0 %v4248, 32
        %v4670 = vpop.permute.xlu0 %4669
        %4671 = vrot.lane.b32.xlu0 %v4250, 32
        %v4672 = vpop.permute.xlu0 %4671
        %4673 = vrot.lane.b32.xlu0 %v4253, 32
        %v4674 = vpop.permute.xlu0 %4673
        %4675 = vrot.lane.b32.xlu0 %v4255, 32
        %v4676 = vpop.permute.xlu0 %4675
        %4677 = vrot.lane.b32.xlu0 %v4258, 32
        %v4678 = vpop.permute.xlu0 %4677
        %4679 = vrot.lane.b32.xlu0 %v4260, 32
        %v4680 = vpop.permute.xlu0 %4679
        %4681 = vrot.lane.b32.xlu0 %v4263, 32
        %v4682 = vpop.permute.xlu0 %4681
        %4683 = vrot.lane.b32.xlu0 %v4265, 32
        %v4684 = vpop.permute.xlu0 %4683
        %4685 = vrot.lane.b32.xlu0 %v4268, 32
        %v4686 = vpop.permute.xlu0 %4685
        %4687 = vrot.lane.b32.xlu0 %v4270, 32
        %v4688 = vpop.permute.xlu0 %4687
        %4689 = vrot.lane.b32.xlu0 %v4273, 32
        %v4690 = vpop.permute.xlu0 %4689
        %4691 = vrot.lane.b32.xlu0 %v4275, 32
        %v4692 = vpop.permute.xlu0 %4691
        %4693 = vrot.lane.b32.xlu0 %v4278, 32
        %v4694 = vpop.permute.xlu0 %4693
        %4695 = vrot.lane.b32.xlu0 %v4280, 32
        %v4696 = vpop.permute.xlu0 %4695
        %4697 = vrot.lane.b32.xlu0 %v4283, 32
        %v4698 = vpop.permute.xlu0 %4697
        %4699 = vrot.lane.b32.xlu0 %v4285, 32
        %v4700 = vpop.permute.xlu0 %4699
        %4701 = vrot.lane.b32.xlu0 %v4288, 32
        %v4702 = vpop.permute.xlu0 %4701
        %4703 = vrot.lane.b32.xlu0 %v4290, 32
        %v4704 = vpop.permute.xlu0 %4703
        %4705 = vrot.lane.b32.xlu0 %v4293, 32
        %v4706 = vpop.permute.xlu0 %4705
        %4707 = vrot.lane.b32.xlu0 %v4295, 32
        %v4708 = vpop.permute.xlu0 %4707
        %4709 = vrot.lane.b32.xlu0 %v4298, 32
        %v4710 = vpop.permute.xlu0 %4709
        %4711 = vrot.lane.b32.xlu0 %v4300, 32
        %v4712 = vpop.permute.xlu0 %4711
        %4713 = vrot.lane.b32.xlu0 %v4303, 32
        %v4714 = vpop.permute.xlu0 %4713
        %4715 = vrot.lane.b32.xlu0 %v4305, 32
        %v4716 = vpop.permute.xlu0 %4715
        %4717 = vrot.lane.b32.xlu0 %v4308, 32
        %v4718 = vpop.permute.xlu0 %4717
        %4719 = vrot.lane.b32.xlu0 %v4310, 32
        %v4720 = vpop.permute.xlu0 %4719
        %4721 = vrot.lane.b32.xlu0 %v4352, 32
        %v4722 = vpop.permute.xlu0 %4721
        %4723 = vrot.lane.b32.xlu0 %v4354, 32
        %v4724 = vpop.permute.xlu0 %4723
        %4757 = vrot.lane.b32.xlu0 %v4100, 64
        %v4758 = vpop.permute.xlu0 %4757
        %4759 = vrot.lane.b32.xlu0 %v4009, 64
        %v4760 = vpop.permute.xlu0 %4759
        %4761 = vrot.lane.b32.xlu0 %v4101, 64
        %v4762 = vpop.permute.xlu0 %4761
        %4763 = vrot.lane.b32.xlu0 %v4012, 64
        %v4764 = vpop.permute.xlu0 %4763
        %4765 = vrot.lane.b32.xlu0 %v4102, 64
        %v4766 = vpop.permute.xlu0 %4765
        %4767 = vrot.lane.b32.xlu0 %v4015, 64
        %v4768 = vpop.permute.xlu0 %4767
        %4769 = vrot.lane.b32.xlu0 %v4103, 64
        %v4770 = vpop.permute.xlu0 %4769
        %4771 = vrot.lane.b32.xlu0 %v4018, 64
        %v4772 = vpop.permute.xlu0 %4771
        %4773 = vrot.lane.b32.xlu0 %v4104, 64
        %v4774 = vpop.permute.xlu0 %4773
        %4775 = vrot.lane.b32.xlu0 %v4021, 64
        %v4776 = vpop.permute.xlu0 %4775
        %4777 = vrot.lane.b32.xlu0 %v4105, 64
        %v4778 = vpop.permute.xlu0 %4777
        %4779 = vrot.lane.b32.xlu0 %v4024, 64
        %v4780 = vpop.permute.xlu0 %4779
        %4781 = vrot.lane.b32.xlu0 %v4106, 64
        %v4782 = vpop.permute.xlu0 %4781
        %4783 = vrot.lane.b32.xlu0 %v4027, 64
        %v4784 = vpop.permute.xlu0 %4783
        %4785 = vrot.lane.b32.xlu0 %v4107, 64
        %v4786 = vpop.permute.xlu0 %4785
        %4787 = vrot.lane.b32.xlu0 %v4030, 64
        %v4788 = vpop.permute.xlu0 %4787
        %4789 = vrot.lane.b32.xlu0 %v4108, 64
        %v4790 = vpop.permute.xlu0 %4789
        %4791 = vrot.lane.b32.xlu0 %v4033, 64
        %v4792 = vpop.permute.xlu0 %4791
        %4793 = vrot.lane.b32.xlu0 %v4109, 64
        %v4794 = vpop.permute.xlu0 %4793
        %4795 = vrot.lane.b32.xlu0 %v4036, 64
        %v4796 = vpop.permute.xlu0 %4795
        %4797 = vrot.lane.b32.xlu0 %v4110, 64
        %v4798 = vpop.permute.xlu0 %4797
        %4799 = vrot.lane.b32.xlu0 %v4039, 64
        %v4800 = vpop.permute.xlu0 %4799
        %4801 = vrot.lane.b32.xlu0 %v4111, 64
        %v4802 = vpop.permute.xlu0 %4801
        %4803 = vrot.lane.b32.xlu0 %v4042, 64
        %v4804 = vpop.permute.xlu0 %4803
        %4805 = vrot.lane.b32.xlu0 %v4112, 64
        %v4806 = vpop.permute.xlu0 %4805
        %4807 = vrot.lane.b32.xlu0 %v4045, 64
        %v4808 = vpop.permute.xlu0 %4807
        %4809 = vrot.lane.b32.xlu0 %v4113, 64
        %v4810 = vpop.permute.xlu0 %4809
        %4811 = vrot.lane.b32.xlu0 %v4048, 64
        %v4812 = vpop.permute.xlu0 %4811
        %4813 = vrot.lane.b32.xlu0 %v4114, 64
        %v4814 = vpop.permute.xlu0 %4813
        %4815 = vrot.lane.b32.xlu0 %v4051, 64
        %v4816 = vpop.permute.xlu0 %4815
        %4847 = vrot.lane.b32.xlu0 %v4168, 96
        %v4848 = vpop.permute.xlu0 %4847
        %4849 = vrot.lane.b32.xlu0 %v4170, 96
        %v4850 = vpop.permute.xlu0 %4849
        %4851 = vrot.lane.b32.xlu0 %v4173, 96
        %v4852 = vpop.permute.xlu0 %4851
        %4853 = vrot.lane.b32.xlu0 %v4175, 96
        %v4854 = vpop.permute.xlu0 %4853
        %4855 = vrot.lane.b32.xlu0 %v4178, 96
        %v4856 = vpop.permute.xlu0 %4855
        %4857 = vrot.lane.b32.xlu0 %v4180, 96
        %v4858 = vpop.permute.xlu0 %4857
        %4859 = vrot.lane.b32.xlu0 %v4183, 96
        %v4860 = vpop.permute.xlu0 %4859
        %4861 = vrot.lane.b32.xlu0 %v4185, 96
        %v4862 = vpop.permute.xlu0 %4861
        %4863 = vrot.lane.b32.xlu0 %v4188, 96
        %v4864 = vpop.permute.xlu0 %4863
        %4865 = vrot.lane.b32.xlu0 %v4190, 96
        %v4866 = vpop.permute.xlu0 %4865
        %4867 = vrot.lane.b32.xlu0 %v4193, 96
        %v4868 = vpop.permute.xlu0 %4867
        %4869 = vrot.lane.b32.xlu0 %v4195, 96
        %v4870 = vpop.permute.xlu0 %4869
        %4871 = vrot.lane.b32.xlu0 %v4198, 96
        %v4872 = vpop.permute.xlu0 %4871
        %4873 = vrot.lane.b32.xlu0 %v4200, 96
        %v4874 = vpop.permute.xlu0 %4873
        %4875 = vrot.lane.b32.xlu0 %v4203, 96
        %v4876 = vpop.permute.xlu0 %4875
        %4877 = vrot.lane.b32.xlu0 %v4205, 96
        %v4878 = vpop.permute.xlu0 %4877
        %4879 = vrot.lane.b32.xlu0 %v4208, 96
        %v4880 = vpop.permute.xlu0 %4879
        %4881 = vrot.lane.b32.xlu0 %v4210, 96
        %v4882 = vpop.permute.xlu0 %4881
        %4883 = vrot.lane.b32.xlu0 %v4213, 96
        %v4884 = vpop.permute.xlu0 %4883
        %4885 = vrot.lane.b32.xlu0 %v4215, 96
        %v4886 = vpop.permute.xlu0 %4885
        %4887 = vrot.lane.b32.xlu0 %v4218, 96
        %v4888 = vpop.permute.xlu0 %4887
        %4889 = vrot.lane.b32.xlu0 %v4220, 96
        %v4890 = vpop.permute.xlu0 %4889
        %4891 = vrot.lane.b32.xlu0 %v4223, 96
        %v4892 = vpop.permute.xlu0 %4891
        %4893 = vrot.lane.b32.xlu0 %v4225, 96
        %v4894 = vpop.permute.xlu0 %4893
        %4895 = vrot.lane.b32.xlu0 %v4228, 96
        %v4896 = vpop.permute.xlu0 %4895
        %4897 = vrot.lane.b32.xlu0 %v4230, 96
        %v4898 = vpop.permute.xlu0 %4897
        %4899 = vrot.lane.b32.xlu0 %v4233, 96
        %v4900 = vpop.permute.xlu0 %4899
        %4901 = vrot.lane.b32.xlu0 %v4235, 96
        %v4902 = vpop.permute.xlu0 %4901
        %4903 = vrot.lane.b32.xlu0 %v4315, 96
        %v4904 = vpop.permute.xlu0 %4903
        %4905 = vrot.lane.b32.xlu0 %v4317, 96
        %v4906 = vpop.permute.xlu0 %4905
        %v4937 = vsel %vm1279, %v4099, %v4386
        %v4938 = vsel %vm1279, %v4006, %v4388
        %v4939 = vsel %vm1279, %v4100, %v4390
        %v4940 = vsel %vm1279, %v4009, %v4392
        %v4941 = vsel %vm1279, %v4101, %v4394
        %v4942 = vsel %vm1279, %v4012, %v4396
        %v4943 = vsel %vm1279, %v4102, %v4398
        %v4944 = vsel %vm1279, %v4015, %v4400
        %v4945 = vsel %vm1279, %v4103, %v4402
        %v4946 = vsel %vm1279, %v4018, %v4404
        %v4947 = vsel %vm1279, %v4104, %v4406
        %v4948 = vsel %vm1279, %v4021, %v4408
        %v4949 = vsel %vm1279, %v4105, %v4410
        %v4950 = vsel %vm1279, %v4024, %v4412
        %v4951 = vsel %vm1279, %v4106, %v4414
        %v4952 = vsel %vm1279, %v4027, %v4416
        %v4953 = vsel %vm1279, %v4107, %v4418
        %v4954 = vsel %vm1279, %v4030, %v4420
        %v4955 = vsel %vm1279, %v4108, %v4422
        %v4956 = vsel %vm1279, %v4033, %v4424
        %v4957 = vsel %vm1279, %v4109, %v4426
        %v4958 = vsel %vm1279, %v4036, %v4428
        %v4959 = vsel %vm1279, %v4110, %v4430
        %v4960 = vsel %vm1279, %v4039, %v4432
        %v4961 = vsel %vm1279, %v4111, %v4434
        %v4962 = vsel %vm1279, %v4042, %v4436
        %v4963 = vsel %vm1279, %v4112, %v4438
        %v4964 = vsel %vm1279, %v4045, %v4440
        %v4965 = vsel %vm1279, %v4113, %v4442
        %v4966 = vsel %vm1279, %v4048, %v4444
        %v4967 = vsel %vm1312, %v4937, %v4476
        %v4968 = vsel %vm1312, %v4938, %v4478
        %v4969 = vsel %vm1312, %v4939, %v4480
        %v4970 = vsel %vm1312, %v4940, %v4482
        %v4971 = vsel %vm1312, %v4941, %v4484
        %v4972 = vsel %vm1312, %v4942, %v4486
        %v4973 = vsel %vm1312, %v4943, %v4488
        %v4974 = vsel %vm1312, %v4944, %v4490
        %v4975 = vsel %vm1312, %v4945, %v4492
        %v4976 = vsel %vm1312, %v4946, %v4494
        %v4977 = vsel %vm1312, %v4947, %v4496
        %v4978 = vsel %vm1312, %v4948, %v4498
        %v4979 = vsel %vm1312, %v4949, %v4500
        %v4980 = vsel %vm1312, %v4950, %v4502
        %v4981 = vsel %vm1312, %v4951, %v4504
        %v4982 = vsel %vm1312, %v4952, %v4506
        %v4983 = vsel %vm1312, %v4953, %v4508
        %v4984 = vsel %vm1312, %v4954, %v4510
        %v4985 = vsel %vm1312, %v4955, %v4512
        %v4986 = vsel %vm1312, %v4956, %v4514
        %v4987 = vsel %vm1312, %v4957, %v4516
        %v4988 = vsel %vm1312, %v4958, %v4518
        %v4989 = vsel %vm1312, %v4959, %v4520
        %v4990 = vsel %vm1312, %v4960, %v4522
        %v4991 = vsel %vm1312, %v4961, %v4524
        %v4992 = vsel %vm1312, %v4962, %v4526
        %v4993 = vsel %vm1312, %v4963, %v4528
        %v4994 = vsel %vm1312, %v4964, %v4530
        %v4995 = vsel %vm1312, %v4965, %v4532
        %v4996 = vsel %vm1312, %v4966, %v4534
        %v4997 = vsel %vm1345, %v1313, %v4566
        %v4998 = vsel %vm1345, %v1314, %v4568
        %v4999 = vsel %vm1345, %v4967, %v4570
        %v5000 = vsel %vm1345, %v4968, %v4572
        %v5001 = vsel %vm1345, %v4969, %v4574
        %v5002 = vsel %vm1345, %v4970, %v4576
        %v5003 = vsel %vm1345, %v4971, %v4578
        %v5004 = vsel %vm1345, %v4972, %v4580
        %v5005 = vsel %vm1345, %v4973, %v4582
        %v5006 = vsel %vm1345, %v4974, %v4584
        %v5007 = vsel %vm1345, %v4975, %v4586
        %v5008 = vsel %vm1345, %v4976, %v4588
        %v5009 = vsel %vm1345, %v4977, %v4590
        %v5010 = vsel %vm1345, %v4978, %v4592
        %v5011 = vsel %vm1345, %v4979, %v4594
        %v5012 = vsel %vm1345, %v4980, %v4596
        %v5013 = vsel %vm1345, %v4981, %v4598
        %v5014 = vsel %vm1345, %v4982, %v4600
        %v5015 = vsel %vm1345, %v4983, %v4602
        %v5016 = vsel %vm1345, %v4984, %v4604
        %v5017 = vsel %vm1345, %v4985, %v4606
        %v5018 = vsel %vm1345, %v4986, %v4608
        %v5019 = vsel %vm1345, %v4987, %v4610
        %v5020 = vsel %vm1345, %v4988, %v4612
        %v5021 = vsel %vm1345, %v4989, %v4614
        %v5022 = vsel %vm1345, %v4990, %v4616
        %v5023 = vsel %vm1345, %v4991, %v4618
        %v5024 = vsel %vm1345, %v4992, %v4620
        %v5025 = vsel %vm1345, %v4993, %v4622
        %v5026 = vsel %vm1345, %v4994, %v4624
        %v5027 = vsel %vm1345, %v4995, %v4626
        %v5028 = vsel %vm1345, %v4996, %v4628
        %v5029 = vsel %vm1279, %v4163, %v4662
        %v5030 = vsel %vm1279, %v4165, %v4664
        %v5031 = vsel %vm1279, %v4168, %v4666
        %v5032 = vsel %vm1279, %v4170, %v4668
        %v5033 = vsel %vm1279, %v4173, %v4670
        %v5034 = vsel %vm1279, %v4175, %v4672
        %v5035 = vsel %vm1279, %v4178, %v4674
        %v5036 = vsel %vm1279, %v4180, %v4676
        %v5037 = vsel %vm1279, %v4183, %v4678
        %v5038 = vsel %vm1279, %v4185, %v4680
        %v5039 = vsel %vm1279, %v4188, %v4682
        %v5040 = vsel %vm1279, %v4190, %v4684
        %v5041 = vsel %vm1279, %v4193, %v4686
        %v5042 = vsel %vm1279, %v4195, %v4688
        %v5043 = vsel %vm1279, %v4198, %v4690
        %v5044 = vsel %vm1279, %v4200, %v4692
        %v5045 = vsel %vm1279, %v4203, %v4694
        %v5046 = vsel %vm1279, %v4205, %v4696
        %v5047 = vsel %vm1279, %v4208, %v4698
        %v5048 = vsel %vm1279, %v4210, %v4700
        %v5049 = vsel %vm1279, %v4213, %v4702
        %v5050 = vsel %vm1279, %v4215, %v4704
        %v5051 = vsel %vm1279, %v4218, %v4706
        %v5052 = vsel %vm1279, %v4220, %v4708
        %v5053 = vsel %vm1279, %v4223, %v4710
        %v5054 = vsel %vm1279, %v4225, %v4712
        %v5055 = vsel %vm1279, %v4228, %v4714
        %v5056 = vsel %vm1279, %v4230, %v4716
        %v5057 = vsel %vm1279, %v4233, %v4718
        %v5058 = vsel %vm1279, %v4235, %v4720
        %v5059 = vsel %vm1279, %v4315, %v4722
        %v5060 = vsel %vm1279, %v4317, %v4724
        %v5061 = vsel %vm1312, %v5029, %v4758
        %v5062 = vsel %vm1312, %v5030, %v4760
        %v5063 = vsel %vm1312, %v5031, %v4762
        %v5064 = vsel %vm1312, %v5032, %v4764
        %v5065 = vsel %vm1312, %v5033, %v4766
        %v5066 = vsel %vm1312, %v5034, %v4768
        %v5067 = vsel %vm1312, %v5035, %v4770
        %v5068 = vsel %vm1312, %v5036, %v4772
        %v5069 = vsel %vm1312, %v5037, %v4774
        %v5070 = vsel %vm1312, %v5038, %v4776
        %v5071 = vsel %vm1312, %v5039, %v4778
        %v5072 = vsel %vm1312, %v5040, %v4780
        %v5073 = vsel %vm1312, %v5041, %v4782
        %v5074 = vsel %vm1312, %v5042, %v4784
        %v5075 = vsel %vm1312, %v5043, %v4786
        %v5076 = vsel %vm1312, %v5044, %v4788
        %v5077 = vsel %vm1312, %v5045, %v4790
        %v5078 = vsel %vm1312, %v5046, %v4792
        %v5079 = vsel %vm1312, %v5047, %v4794
        %v5080 = vsel %vm1312, %v5048, %v4796
        %v5081 = vsel %vm1312, %v5049, %v4798
        %v5082 = vsel %vm1312, %v5050, %v4800
        %v5083 = vsel %vm1312, %v5051, %v4802
        %v5084 = vsel %vm1312, %v5052, %v4804
        %v5085 = vsel %vm1312, %v5053, %v4806
        %v5086 = vsel %vm1312, %v5054, %v4808
        %v5087 = vsel %vm1312, %v5055, %v4810
        %v5088 = vsel %vm1312, %v5056, %v4812
        %v5089 = vsel %vm1312, %v5057, %v4814
        %v5090 = vsel %vm1312, %v5058, %v4816
        %v5091 = vsel %vm1312, %v5059, %v1148
        %v5092 = vsel %vm1312, %v5060, %v1150
        %v5093 = vsel %vm1345, %v5061, %v4848
        %v5094 = vsel %vm1345, %v5062, %v4850
        %v5095 = vsel %vm1345, %v5063, %v4852
        %v5096 = vsel %vm1345, %v5064, %v4854
        %v5097 = vsel %vm1345, %v5065, %v4856
        %v5098 = vsel %vm1345, %v5066, %v4858
        %v5099 = vsel %vm1345, %v5067, %v4860
        %v5100 = vsel %vm1345, %v5068, %v4862
        %v5101 = vsel %vm1345, %v5069, %v4864
        %v5102 = vsel %vm1345, %v5070, %v4866
        %v5103 = vsel %vm1345, %v5071, %v4868
        %v5104 = vsel %vm1345, %v5072, %v4870
        %v5105 = vsel %vm1345, %v5073, %v4872
        %v5106 = vsel %vm1345, %v5074, %v4874
        %v5107 = vsel %vm1345, %v5075, %v4876
        %v5108 = vsel %vm1345, %v5076, %v4878
        %v5109 = vsel %vm1345, %v5077, %v4880
        %v5110 = vsel %vm1345, %v5078, %v4882
        %v5111 = vsel %vm1345, %v5079, %v4884
        %v5112 = vsel %vm1345, %v5080, %v4886
        %v5113 = vsel %vm1345, %v5081, %v4888
        %v5114 = vsel %vm1345, %v5082, %v4890
        %v5115 = vsel %vm1345, %v5083, %v4892
        %v5116 = vsel %vm1345, %v5084, %v4894
        %v5117 = vsel %vm1345, %v5085, %v4896
        %v5118 = vsel %vm1345, %v5086, %v4898
        %v5119 = vsel %vm1345, %v5087, %v4900
        %v5120 = vsel %vm1345, %v5088, %v4902
        %v5121 = vsel %vm1345, %v5089, %v4904
        %v5122 = vsel %vm1345, %v5090, %v4906
        %v5123 = vsel %vm1345, %v5091, %v1244
        %v5124 = vsel %vm1345, %v5092, %v1246
        %v5125 = vpack.c.bf16 %v4998, %v4997
        %v5126 = vpack.c.bf16 %v5094, %v5093
        %v5127 = vpack.c.bf16 %v4245, %v4243
        %v5128 = vpack.c.bf16 %v5000, %v4999
        %v5129 = vpack.c.bf16 %v5096, %v5095
        %v5130 = vpack.c.bf16 %v4250, %v4248
        %v5131 = vpack.c.bf16 %v5002, %v5001
        %v5132 = vpack.c.bf16 %v5098, %v5097
        %v5133 = vpack.c.bf16 %v4255, %v4253
        %v5134 = vpack.c.bf16 %v5004, %v5003
        %v5135 = vpack.c.bf16 %v5100, %v5099
        %v5136 = vpack.c.bf16 %v4260, %v4258
        %v5137 = vpack.c.bf16 %v5006, %v5005
        %v5138 = vpack.c.bf16 %v5102, %v5101
        %v5139 = vpack.c.bf16 %v4265, %v4263
        %v5140 = vpack.c.bf16 %v5008, %v5007
        %v5141 = vpack.c.bf16 %v5104, %v5103
        %v5142 = vpack.c.bf16 %v4270, %v4268
        %v5143 = vpack.c.bf16 %v5010, %v5009
        %v5144 = vpack.c.bf16 %v5106, %v5105
        %v5145 = vpack.c.bf16 %v4275, %v4273
        %v5146 = vpack.c.bf16 %v5012, %v5011
        %v5147 = vpack.c.bf16 %v5108, %v5107
        %v5148 = vpack.c.bf16 %v4280, %v4278
        %v5149 = vpack.c.bf16 %v5014, %v5013
        %v5150 = vpack.c.bf16 %v5110, %v5109
        %v5151 = vpack.c.bf16 %v4285, %v4283
        %v5152 = vpack.c.bf16 %v5016, %v5015
        %v5153 = vpack.c.bf16 %v5112, %v5111
        %v5154 = vpack.c.bf16 %v4290, %v4288
        %v5155 = vpack.c.bf16 %v5018, %v5017
        %v5156 = vpack.c.bf16 %v5114, %v5113
        %v5157 = vpack.c.bf16 %v4295, %v4293
        %v5158 = vpack.c.bf16 %v5020, %v5019
        %v5159 = vpack.c.bf16 %v5116, %v5115
        %v5160 = vpack.c.bf16 %v4300, %v4298
        %v5161 = vpack.c.bf16 %v5022, %v5021
        %v5162 = vpack.c.bf16 %v5118, %v5117
        %v5163 = vpack.c.bf16 %v4305, %v4303
        %v5164 = vpack.c.bf16 %v5024, %v5023
        %v5165 = vpack.c.bf16 %v5120, %v5119
        %v5166 = vpack.c.bf16 %v4310, %v4308
        %v5167 = vpack.c.bf16 %v5026, %v5025
        %v5168 = vpack.c.bf16 %v5122, %v5121
        %v5169 = vpack.c.bf16 %v4354, %v4352
        %v5170 = vpack.c.bf16 %v5028, %v5027
        %v5171 = vpack.c.bf16 %v5124, %v5123
        %v5173 = vlaneseq
        %v5174 = vshrl.u32 %v5173, 7
        %v5175 = vsub.s32 0, %v5174
        %v5176 = vrot.slane %v3971, %v5175
        %v5214 = vunpack.c.l.b16 %v3934
        %v5215 = vunpack.c.l.b16 %v3935
        %v5216 = vunpack.c.l.b16 %v3936
        %v5217 = vunpack.c.l.b16 %v3937
        %v5218 = vunpack.c.l.b16 %v3938
        %v5219 = vunpack.c.l.b16 %v3939
        %v5220 = vunpack.c.l.b16 %v3940
        %v5221 = vunpack.c.l.b16 %v3941
        %v5222 = vunpack.c.l.b16 %v3942
        %v5223 = vunpack.c.l.b16 %v3943
        %v5224 = vunpack.c.l.b16 %v3944
        %v5225 = vunpack.c.l.b16 %v3945
        %v5226 = vunpack.c.l.b16 %v3946
        %v5227 = vunpack.c.l.b16 %v3947
        %v5228 = vunpack.c.l.b16 %v3948
        %v5229 = vunpack.c.l.b16 %v3949
        %v5230 = vunpack.c.l.b16 %v3950
        %v5231 = vunpack.c.l.b16 %v3951
        %v5232 = vunpack.c.l.b16 %v3952
        %v5233 = vunpack.c.l.b16 %v3953
        %v5234 = vunpack.c.l.b16 %v3954
        %v5235 = vunpack.c.l.b16 %v3955
        %v5236 = vunpack.c.l.b16 %v3956
        %v5237 = vunpack.c.l.b16 %v3957
        %v5238 = vunpack.c.l.b16 %v3958
        %v5239 = vunpack.c.l.b16 %v3959
        %v5240 = vunpack.c.l.b16 %v3960
        %v5241 = vunpack.c.l.b16 %v3961
        %v5242 = vunpack.c.l.b16 %v3962
        %v5243 = vunpack.c.l.b16 %v3963
        %v5244 = vunpack.c.l.b16 %v3964
        %v5245 = vunpack.c.l.b16 %v3965
        %v5246 = vunpack.c.l.b16 %v3966
        %v5247 = vunpack.c.l.b16 %v3967
        %v5248 = vunpack.c.l.b16 %v3968
        %v5249 = vunpack.c.l.b16 %v3969
        %v5250 = vpack.c.b16 %v5215, %v5214
        %v5251 = vpack.c.b16 %v5217, %v5216
        %v5252 = vpack.c.b16 %v5219, %v5218
        %v5253 = vpack.c.b16 %v5221, %v5220
        %v5254 = vpack.c.b16 %v5223, %v5222
        %v5255 = vpack.c.b16 %v5225, %v5224
        %v5256 = vpack.c.b16 %v5227, %v5226
        %v5257 = vpack.c.b16 %v5229, %v5228
        %v5258 = vpack.c.b16 %v5231, %v5230
        %v5259 = vpack.c.b16 %v5233, %v5232
        %v5260 = vpack.c.b16 %v5235, %v5234
        %v5261 = vpack.c.b16 %v5237, %v5236
        %v5262 = vpack.c.b16 %v5239, %v5238
        %v5263 = vpack.c.b16 %v5241, %v5240
        %v5264 = vpack.c.b16 %v5243, %v5242
        %v5265 = vpack.c.b16 %v5245, %v5244
        %v5266 = vpack.c.b16 %v5247, %v5246
        %v5267 = vpack.c.b16 %v5249, %v5248
        %v5287 = vsel %vm1279, %v5127, 0
        %v5290 = vsel %vm1279, %v5130, 0
        %v5293 = vsel %vm1279, %v5133, 0
        %v5296 = vsel %vm1279, %v5136, 0
        %v5299 = vsel %vm1279, %v5139, 0
        %v5302 = vsel %vm1279, %v5142, 0
        %v5305 = vsel %vm1279, %v5145, 0
        %v5308 = vsel %vm1279, %v5148, 0
        %v5311 = vsel %vm1279, %v5151, 0
        %v5314 = vsel %vm1279, %v5154, 0
        %v5317 = vsel %vm1279, %v5157, 0
        %v5320 = vsel %vm1279, %v5160, 0
        %v5323 = vsel %vm1279, %v5163, 0
        %v5326 = vsel %vm1279, %v5166, 0
        %v5329 = vsel %vm1279, %v5169, 0
        %5331 = vmatprep.subr.bf16.mxu0 0
        %5332 = vmatpush1.bf16.msra.mxu0 %v5257
        %5333 = vmatprep.subr.bf16.mxu0 0
        %5334 = vmatpush1.bf16.msra.mxu0 %v5256
        %5335 = vmatprep.subr.bf16.mxu0 0
        %5336 = vmatpush1.bf16.msra.mxu0 %v5255
        %5337 = vmatprep.subr.bf16.mxu0 0
        %5338 = vmatpush1.bf16.msra.mxu0 %v5254
        %5339 = vmatprep.subr.bf16.mxu0 0
        %5340 = vmatpush1.bf16.msra.mxu0 %v5253
        %5341 = vmatprep.subr.bf16.mxu0 0
        %5342 = vmatpush1.bf16.msra.mxu0 %v5252
        %5343 = vmatprep.subr.bf16.mxu0 0
        %5344 = vmatpush1.bf16.msra.mxu0 %v5251
        %5345 = vmatprep.subr.bf16.mxu0 0
        %5346 = vmatpush1.bf16.msra.mxu0 %v5250
        %5347 = vmatprep.subr.bf16.mxu0 0
        %5348 = vmatpush2.bf16.msra.mxu0 %v5265
        %5349 = vmatprep.subr.bf16.mxu0 0
        %5350 = vmatpush2.bf16.msra.mxu0 %v5264
        %5351 = vmatprep.subr.bf16.mxu0 0
        %5352 = vmatpush2.bf16.msra.mxu0 %v5263
        %5353 = vmatprep.subr.bf16.mxu0 0
        %5354 = vmatpush2.bf16.msra.mxu0 %v5262
        %5355 = vmatprep.subr.bf16.mxu0 0
        %5356 = vmatpush2.bf16.msra.mxu0 %v5261
        %5357 = vmatprep.subr.bf16.mxu0 0
        %5358 = vmatpush2.bf16.msra.mxu0 %v5260
        %5359 = vmatprep.subr.bf16.mxu0 0
        %5360 = vmatpush2.bf16.msra.mxu0 %v5259
        %5361 = vmatprep.subr.bf16.mxu0 0
        %5362 = vmatpush2.bf16.msra.mxu0 %v5258
        %5363 = vmatprep.mubr.bf16.mxu0 %v5126
        %5364 = vmatmul.mubr.bf16.gmra.mxu0 %v5125
        %v5365 = vpop.f32.mrf.mxu0
        %v5366 = vadd.f32 %v5176, %v5365
        %v5367 = vpop.f32.mrf.mxu0
        %v5368 = vpop.f32.mrf.mxu0
        %v5369 = vadd.f32 %v5176, %v5368
        %v5370 = vpop.f32.mrf.mxu0
        %5371 = vmatprep.mubr.bf16.mxu0 %v5129
        %5372 = vmatmul.mubr.bf16.gmra.mxu0 %v5128
        %v5373 = vpop.f32.mrf.mxu0
        %v5374 = vadd.f32 %v5176, %v5373
        %v5375 = vpop.f32.mrf.mxu0
        %v5376 = vpop.f32.mrf.mxu0
        %v5377 = vadd.f32 %v5176, %v5376
        %v5378 = vpop.f32.mrf.mxu0
        %5379 = vmatprep.mubr.bf16.mxu0 %v5132
        %5380 = vmatmul.mubr.bf16.gmra.mxu0 %v5131
        %v5381 = vpop.f32.mrf.mxu0
        %v5382 = vadd.f32 %v5176, %v5381
        %v5383 = vpop.f32.mrf.mxu0
        %v5384 = vpop.f32.mrf.mxu0
        %v5385 = vadd.f32 %v5176, %v5384
        %v5386 = vpop.f32.mrf.mxu0
        %5387 = vmatprep.mubr.bf16.mxu0 %v5135
        %5388 = vmatmul.mubr.bf16.gmra.mxu0 %v5134
        %v5389 = vpop.f32.mrf.mxu0
        %v5390 = vadd.f32 %v5176, %v5389
        %v5391 = vpop.f32.mrf.mxu0
        %v5392 = vpop.f32.mrf.mxu0
        %v5393 = vadd.f32 %v5176, %v5392
        %v5394 = vpop.f32.mrf.mxu0
        %5395 = vmatprep.mubr.bf16.mxu0 %v5138
        %5396 = vmatmul.mubr.bf16.gmra.mxu0 %v5137
        %v5397 = vpop.f32.mrf.mxu0
        %v5398 = vadd.f32 %v5176, %v5397
        %v5399 = vpop.f32.mrf.mxu0
        %v5400 = vpop.f32.mrf.mxu0
        %v5401 = vadd.f32 %v5176, %v5400
        %v5402 = vpop.f32.mrf.mxu0
        %5403 = vmatprep.mubr.bf16.mxu0 %v5141
        %5404 = vmatmul.mubr.bf16.gmra.mxu0 %v5140
        %v5405 = vpop.f32.mrf.mxu0
        %v5406 = vadd.f32 %v5176, %v5405
        %v5407 = vpop.f32.mrf.mxu0
        %v5408 = vpop.f32.mrf.mxu0
        %v5409 = vadd.f32 %v5176, %v5408
        %v5410 = vpop.f32.mrf.mxu0
        %5411 = vmatprep.mubr.bf16.mxu0 %v5144
        %5412 = vmatmul.mubr.bf16.gmra.mxu0 %v5143
        %v5413 = vpop.f32.mrf.mxu0
        %v5414 = vadd.f32 %v5176, %v5413
        %v5415 = vpop.f32.mrf.mxu0
        %v5416 = vpop.f32.mrf.mxu0
        %v5417 = vadd.f32 %v5176, %v5416
        %v5418 = vpop.f32.mrf.mxu0
        %5419 = vmatprep.mubr.bf16.mxu0 %v5147
        %5420 = vmatmul.mubr.bf16.gmra.mxu0 %v5146
        %v5421 = vpop.f32.mrf.mxu0
        %v5422 = vadd.f32 %v5176, %v5421
        %v5423 = vpop.f32.mrf.mxu0
        %v5424 = vpop.f32.mrf.mxu0
        %v5425 = vadd.f32 %v5176, %v5424
        %v5426 = vpop.f32.mrf.mxu0
        %5427 = vmatprep.mubr.bf16.mxu0 %v5150
        %5428 = vmatmul.mubr.bf16.gmra.mxu0 %v5149
        %v5429 = vpop.f32.mrf.mxu0
        %v5430 = vadd.f32 %v5176, %v5429
        %v5431 = vpop.f32.mrf.mxu0
        %v5432 = vpop.f32.mrf.mxu0
        %v5433 = vadd.f32 %v5176, %v5432
        %v5434 = vpop.f32.mrf.mxu0
        %5435 = vmatprep.mubr.bf16.mxu0 %v5153
        %5436 = vmatmul.mubr.bf16.gmra.mxu0 %v5152
        %v5437 = vpop.f32.mrf.mxu0
        %v5438 = vadd.f32 %v5176, %v5437
        %v5439 = vpop.f32.mrf.mxu0
        %v5440 = vpop.f32.mrf.mxu0
        %v5441 = vadd.f32 %v5176, %v5440
        %v5442 = vpop.f32.mrf.mxu0
        %5443 = vmatprep.mubr.bf16.mxu0 %v5156
        %5444 = vmatmul.mubr.bf16.gmra.mxu0 %v5155
        %v5445 = vpop.f32.mrf.mxu0
        %v5446 = vadd.f32 %v5176, %v5445
        %v5447 = vpop.f32.mrf.mxu0
        %v5448 = vpop.f32.mrf.mxu0
        %v5449 = vadd.f32 %v5176, %v5448
        %v5450 = vpop.f32.mrf.mxu0
        %5451 = vmatprep.mubr.bf16.mxu0 %v5159
        %5452 = vmatmul.mubr.bf16.gmra.mxu0 %v5158
        %v5453 = vpop.f32.mrf.mxu0
        %v5454 = vadd.f32 %v5176, %v5453
        %v5455 = vpop.f32.mrf.mxu0
        %v5456 = vpop.f32.mrf.mxu0
        %v5457 = vadd.f32 %v5176, %v5456
        %v5458 = vpop.f32.mrf.mxu0
        %5459 = vmatprep.mubr.bf16.mxu0 %v5162
        %5460 = vmatmul.mubr.bf16.gmra.mxu0 %v5161
        %v5461 = vpop.f32.mrf.mxu0
        %v5462 = vadd.f32 %v5176, %v5461
        %v5463 = vpop.f32.mrf.mxu0
        %v5464 = vpop.f32.mrf.mxu0
        %v5465 = vadd.f32 %v5176, %v5464
        %v5466 = vpop.f32.mrf.mxu0
        %5467 = vmatprep.mubr.bf16.mxu0 %v5165
        %5468 = vmatmul.mubr.bf16.gmra.mxu0 %v5164
        %v5469 = vpop.f32.mrf.mxu0
        %v5470 = vadd.f32 %v5176, %v5469
        %v5471 = vpop.f32.mrf.mxu0
        %v5472 = vpop.f32.mrf.mxu0
        %v5473 = vadd.f32 %v5176, %v5472
        %v5474 = vpop.f32.mrf.mxu0
        %5475 = vmatprep.mubr.bf16.mxu0 %v5168
        %5476 = vmatmul.mubr.bf16.gmra.mxu0 %v5167
        %v5477 = vpop.f32.mrf.mxu0
        %v5478 = vadd.f32 %v5176, %v5477
        %v5479 = vpop.f32.mrf.mxu0
        %v5480 = vpop.f32.mrf.mxu0
        %v5481 = vadd.f32 %v5176, %v5480
        %v5482 = vpop.f32.mrf.mxu0
        %5483 = vmatprep.mubr.bf16.mxu0 %v5171
        %5484 = vmatmul.mubr.bf16.gmra.mxu0 %v5170
        %v5485 = vpop.f32.mrf.mxu0
        %v5486 = vadd.f32 %v5176, %v5485
        %v5487 = vpop.f32.mrf.mxu0
        %v5488 = vpop.f32.mrf.mxu0
        %v5489 = vadd.f32 %v5176, %v5488
        %v5490 = vpop.f32.mrf.mxu0
        %5491 = vdwg.mxu0
        %5492 = vmatprep.subr.bf16.mxu0 0
        %5493 = vmatpush1.bf16.msra.mxu0 0
        %5494 = vmatprep.subr.bf16.mxu0 0
        %5495 = vmatpush1.bf16.msra.mxu0 0
        %5496 = vmatprep.subr.bf16.mxu0 0
        %5497 = vmatpush1.bf16.msra.mxu0 0
        %5498 = vmatprep.subr.bf16.mxu0 0
        %5499 = vmatpush1.bf16.msra.mxu0 0
        %5500 = vmatprep.subr.bf16.mxu0 0
        %5501 = vmatpush1.bf16.msra.mxu0 0
        %5502 = vmatprep.subr.bf16.mxu0 0
        %5503 = vmatpush1.bf16.msra.mxu0 0
        %5504 = vmatprep.subr.bf16.mxu0 0
        %5505 = vmatpush1.bf16.msra.mxu0 %v5267
        %5506 = vmatprep.subr.bf16.mxu0 0
        %5507 = vmatpush1.bf16.msra.mxu0 %v5266
        %5508 = vmatprep.subr.bf16.mxu0 0
        %5509 = vmatpush2.bf16.msra.mxu0 0
        %5510 = vmatprep.subr.bf16.mxu0 0
        %5511 = vmatpush2.bf16.msra.mxu0 0
        %5512 = vmatprep.subr.bf16.mxu0 0
        %5513 = vmatpush2.bf16.msra.mxu0 0
        %5514 = vmatprep.subr.bf16.mxu0 0
        %5515 = vmatpush2.bf16.msra.mxu0 0
        %5516 = vmatprep.subr.bf16.mxu0 0
        %5517 = vmatpush2.bf16.msra.mxu0 0
        %5518 = vmatprep.subr.bf16.mxu0 0
        %5519 = vmatpush2.bf16.msra.mxu0 0
        %5520 = vmatprep.subr.bf16.mxu0 0
        %5521 = vmatpush2.bf16.msra.mxu0 0
        %5522 = vmatprep.subr.bf16.mxu0 0
        %5523 = vmatpush2.bf16.msra.mxu0 0
        %5524 = vmatprep.mubr.bf16.mxu0 0
        %5525 = vmatmul.mubr.bf16.gmra.mxu0 %v5287
        %v5526 = vpop.f32.mrf.mxu0
        %v5527 = vadd.f32 %v5366, %v5526
        %v5528 = vpop.f32.mrf.mxu0
        %v5529 = vpop.f32.mrf.mxu0
        %v5530 = vadd.f32 %v5369, %v5529
        %v5531 = vpop.f32.mrf.mxu0
        %5532 = vmatprep.mubr.bf16.mxu0 0
        %5533 = vmatmul.mubr.bf16.gmra.mxu0 %v5290
        %v5534 = vpop.f32.mrf.mxu0
        %v5535 = vadd.f32 %v5374, %v5534
        %v5536 = vpop.f32.mrf.mxu0
        %v5537 = vpop.f32.mrf.mxu0
        %v5538 = vadd.f32 %v5377, %v5537
        %v5539 = vpop.f32.mrf.mxu0
        %5540 = vmatprep.mubr.bf16.mxu0 0
        %5541 = vmatmul.mubr.bf16.gmra.mxu0 %v5293
        %v5542 = vpop.f32.mrf.mxu0
        %v5543 = vadd.f32 %v5382, %v5542
        %v5544 = vpop.f32.mrf.mxu0
        %v5545 = vpop.f32.mrf.mxu0
        %v5546 = vadd.f32 %v5385, %v5545
        %v5547 = vpop.f32.mrf.mxu0
        %5548 = vmatprep.mubr.bf16.mxu0 0
        %5549 = vmatmul.mubr.bf16.gmra.mxu0 %v5296
        %v5550 = vpop.f32.mrf.mxu0
        %v5551 = vadd.f32 %v5390, %v5550
        %v5552 = vpop.f32.mrf.mxu0
        %v5553 = vpop.f32.mrf.mxu0
        %v5554 = vadd.f32 %v5393, %v5553
        %v5555 = vpop.f32.mrf.mxu0
        %5556 = vmatprep.mubr.bf16.mxu0 0
        %5557 = vmatmul.mubr.bf16.gmra.mxu0 %v5299
        %v5558 = vpop.f32.mrf.mxu0
        %v5559 = vadd.f32 %v5398, %v5558
        %v5560 = vpop.f32.mrf.mxu0
        %v5561 = vpop.f32.mrf.mxu0
        %v5562 = vadd.f32 %v5401, %v5561
        %v5563 = vpop.f32.mrf.mxu0
        %5564 = vmatprep.mubr.bf16.mxu0 0
        %5565 = vmatmul.mubr.bf16.gmra.mxu0 %v5302
        %v5566 = vpop.f32.mrf.mxu0
        %v5567 = vadd.f32 %v5406, %v5566
        %v5568 = vpop.f32.mrf.mxu0
        %v5569 = vpop.f32.mrf.mxu0
        %v5570 = vadd.f32 %v5409, %v5569
        %v5571 = vpop.f32.mrf.mxu0
        %5572 = vmatprep.mubr.bf16.mxu0 0
        %5573 = vmatmul.mubr.bf16.gmra.mxu0 %v5305
        %v5574 = vpop.f32.mrf.mxu0
        %v5575 = vadd.f32 %v5414, %v5574
        %v5576 = vpop.f32.mrf.mxu0
        %v5577 = vpop.f32.mrf.mxu0
        %v5578 = vadd.f32 %v5417, %v5577
        %v5579 = vpop.f32.mrf.mxu0
        %5580 = vmatprep.mubr.bf16.mxu0 0
        %5581 = vmatmul.mubr.bf16.gmra.mxu0 %v5308
        %v5582 = vpop.f32.mrf.mxu0
        %v5583 = vadd.f32 %v5422, %v5582
        %v5584 = vpop.f32.mrf.mxu0
        %v5585 = vpop.f32.mrf.mxu0
        %v5586 = vadd.f32 %v5425, %v5585
        %v5587 = vpop.f32.mrf.mxu0
        %5588 = vmatprep.mubr.bf16.mxu0 0
        %5589 = vmatmul.mubr.bf16.gmra.mxu0 %v5311
        %v5590 = vpop.f32.mrf.mxu0
        %v5591 = vadd.f32 %v5430, %v5590
        %v5592 = vpop.f32.mrf.mxu0
        %v5593 = vpop.f32.mrf.mxu0
        %v5594 = vadd.f32 %v5433, %v5593
        %v5595 = vpop.f32.mrf.mxu0
        %5596 = vmatprep.mubr.bf16.mxu0 0
        %5597 = vmatmul.mubr.bf16.gmra.mxu0 %v5314
        %v5598 = vpop.f32.mrf.mxu0
        %v5599 = vadd.f32 %v5438, %v5598
        %v5600 = vpop.f32.mrf.mxu0
        %v5601 = vpop.f32.mrf.mxu0
        %v5602 = vadd.f32 %v5441, %v5601
        %v5603 = vpop.f32.mrf.mxu0
        %5604 = vmatprep.mubr.bf16.mxu0 0
        %5605 = vmatmul.mubr.bf16.gmra.mxu0 %v5317
        %v5606 = vpop.f32.mrf.mxu0
        %v5607 = vadd.f32 %v5446, %v5606
        %v5608 = vpop.f32.mrf.mxu0
        %v5609 = vpop.f32.mrf.mxu0
        %v5610 = vadd.f32 %v5449, %v5609
        %v5611 = vpop.f32.mrf.mxu0
        %5612 = vmatprep.mubr.bf16.mxu0 0
        %5613 = vmatmul.mubr.bf16.gmra.mxu0 %v5320
        %v5614 = vpop.f32.mrf.mxu0
        %v5615 = vadd.f32 %v5454, %v5614
        %v5616 = vpop.f32.mrf.mxu0
        %v5617 = vpop.f32.mrf.mxu0
        %v5618 = vadd.f32 %v5457, %v5617
        %v5619 = vpop.f32.mrf.mxu0
        %5620 = vmatprep.mubr.bf16.mxu0 0
        %5621 = vmatmul.mubr.bf16.gmra.mxu0 %v5323
        %v5622 = vpop.f32.mrf.mxu0
        %v5623 = vadd.f32 %v5462, %v5622
        %v5624 = vpop.f32.mrf.mxu0
        %v5625 = vpop.f32.mrf.mxu0
        %v5626 = vadd.f32 %v5465, %v5625
        %v5627 = vpop.f32.mrf.mxu0
        %5628 = vmatprep.mubr.bf16.mxu0 0
        %5629 = vmatmul.mubr.bf16.gmra.mxu0 %v5326
        %v5630 = vpop.f32.mrf.mxu0
        %v5631 = vadd.f32 %v5470, %v5630
        %v5632 = vpop.f32.mrf.mxu0
        %v5633 = vpop.f32.mrf.mxu0
        %v5634 = vadd.f32 %v5473, %v5633
        %v5635 = vpop.f32.mrf.mxu0
        %5636 = vmatprep.mubr.bf16.mxu0 0
        %5637 = vmatmul.mubr.bf16.gmra.mxu0 %v5329
        %v5638 = vpop.f32.mrf.mxu0
        %v5639 = vadd.f32 %v5478, %v5638
        %v5640 = vpop.f32.mrf.mxu0
        %v5641 = vpop.f32.mrf.mxu0
        %v5642 = vadd.f32 %v5481, %v5641
        %v5643 = vpop.f32.mrf.mxu0
        %5644 = vmatprep.mubr.bf16.mxu0 0
        %5645 = vmatmul.mubr.bf16.gmra.mxu0 %v1682
        %v5646 = vpop.f32.mrf.mxu0
        %v5647 = vadd.f32 %v5486, %v5646
        %v5648 = vpop.f32.mrf.mxu0
        %v5649 = vpop.f32.mrf.mxu0
        %v5650 = vadd.f32 %v5489, %v5649
        %v5651 = vpop.f32.mrf.mxu0
        %5652 = vdwg.mxu0
        %v5653 = vadd.f32 %v5527, %v197
        %v5654 = vadd.f32 %v5530, %v198
        %v5655 = vadd.f32 %v5535, %v199
        %v5656 = vadd.f32 %v5538, %v200
        %v5657 = vadd.f32 %v5543, %v201
        %v5658 = vadd.f32 %v5546, %v202
        %v5659 = vadd.f32 %v5551, %v203
        %v5660 = vadd.f32 %v5554, %v204
        %v5661 = vadd.f32 %v5559, %v205
        %v5662 = vadd.f32 %v5562, %v206
        %v5663 = vadd.f32 %v5567, %v207
        %v5664 = vadd.f32 %v5570, %v208
        %v5665 = vadd.f32 %v5575, %v209
        %v5666 = vadd.f32 %v5578, %v210
        %v5667 = vadd.f32 %v5583, %v211
        %v5668 = vadd.f32 %v5586, %v212
        %v5669 = vadd.f32 %v5591, %v213
        %v5670 = vadd.f32 %v5594, %v214
        %v5671 = vadd.f32 %v5599, %v215
        %v5672 = vadd.f32 %v5602, %v216
        %v5673 = vadd.f32 %v5607, %v217
        %v5674 = vadd.f32 %v5610, %v218
        %v5675 = vadd.f32 %v5615, %v219
        %v5676 = vadd.f32 %v5618, %v220
        %v5677 = vadd.f32 %v5623, %v221
        %v5678 = vadd.f32 %v5626, %v222
        %v5679 = vadd.f32 %v5631, %v223
        %v5680 = vadd.f32 %v5634, %v224
        %v5681 = vadd.f32 %v5639, %v225
        %v5682 = vadd.f32 %v5642, %v226
        %v5683 = vadd.f32 %v5647, %v227
        %v5684 = vadd.f32 %v5650, %v228
        %s5685 = scalar_lea.vmem %s3, 2
        %v5686 = vld [vmem:[%s5685] sm:$0x1]
        %vm5687 = vcmp.ge.f32.partialorder %v5653, 0.0
        %vm5688 = vcmp.ge.f32.partialorder %v5654, 0.0
        %vm5689 = vcmp.ge.f32.partialorder %v5655, 0.0
        %vm5690 = vcmp.ge.f32.partialorder %v5656, 0.0
        %vm5691 = vcmp.ge.f32.partialorder %v5657, 0.0
        %vm5692 = vcmp.ge.f32.partialorder %v5658, 0.0
        %vm5693 = vcmp.ge.f32.partialorder %v5659, 0.0
        %vm5694 = vcmp.ge.f32.partialorder %v5660, 0.0
        %vm5695 = vcmp.ge.f32.partialorder %v5661, 0.0
        %vm5696 = vcmp.ge.f32.partialorder %v5662, 0.0
        %vm5697 = vcmp.ge.f32.partialorder %v5663, 0.0
        %vm5698 = vcmp.ge.f32.partialorder %v5664, 0.0
        %vm5699 = vcmp.ge.f32.partialorder %v5665, 0.0
        %vm5700 = vcmp.ge.f32.partialorder %v5666, 0.0
        %vm5701 = vcmp.ge.f32.partialorder %v5667, 0.0
        %vm5702 = vcmp.ge.f32.partialorder %v5668, 0.0
        %vm5703 = vcmp.ge.f32.partialorder %v5669, 0.0
        %vm5704 = vcmp.ge.f32.partialorder %v5670, 0.0
        %vm5705 = vcmp.ge.f32.partialorder %v5671, 0.0
        %vm5706 = vcmp.ge.f32.partialorder %v5672, 0.0
        %vm5707 = vcmp.ge.f32.partialorder %v5673, 0.0
        %vm5708 = vcmp.ge.f32.partialorder %v5674, 0.0
        %vm5709 = vcmp.ge.f32.partialorder %v5675, 0.0
        %vm5710 = vcmp.ge.f32.partialorder %v5676, 0.0
        %vm5711 = vcmp.ge.f32.partialorder %v5677, 0.0
        %vm5712 = vcmp.ge.f32.partialorder %v5678, 0.0
        %vm5713 = vcmp.ge.f32.partialorder %v5679, 0.0
        %vm5714 = vcmp.ge.f32.partialorder %v5680, 0.0
        %vm5715 = vcmp.ge.f32.partialorder %v5681, 0.0
        %vm5716 = vcmp.ge.f32.partialorder %v5682, 0.0
        %vm5717 = vcmp.ge.f32.partialorder %v5683, 0.0
        %vm5718 = vcmp.ge.f32.partialorder %v5684, 0.0
        %v5720 = vlaneseq
        %v5721 = vshrl.u32 %v5720, 7
        %v5722 = vsub.s32 0, %v5721
        %v5723 = vrot.slane %v5686, %v5722
        %v5725 = vmul.f32 %v5723, %v5653
        %v5726 = vmul.f32 %v5723, %v5654
        %v5727 = vmul.f32 %v5723, %v5655
        %v5728 = vmul.f32 %v5723, %v5656
        %v5729 = vmul.f32 %v5723, %v5657
        %v5730 = vmul.f32 %v5723, %v5658
        %v5731 = vmul.f32 %v5723, %v5659
        %v5732 = vmul.f32 %v5723, %v5660
        %v5733 = vmul.f32 %v5723, %v5661
        %v5734 = vmul.f32 %v5723, %v5662
        %v5735 = vmul.f32 %v5723, %v5663
        %v5736 = vmul.f32 %v5723, %v5664
        %v5737 = vmul.f32 %v5723, %v5665
        %v5738 = vmul.f32 %v5723, %v5666
        %v5739 = vmul.f32 %v5723, %v5667
        %v5740 = vmul.f32 %v5723, %v5668
        %v5741 = vmul.f32 %v5723, %v5669
        %v5742 = vmul.f32 %v5723, %v5670
        %v5743 = vmul.f32 %v5723, %v5671
        %v5744 = vmul.f32 %v5723, %v5672
        %v5745 = vmul.f32 %v5723, %v5673
        %v5746 = vmul.f32 %v5723, %v5674
        %v5747 = vmul.f32 %v5723, %v5675
        %v5748 = vmul.f32 %v5723, %v5676
        %v5749 = vmul.f32 %v5723, %v5677
        %v5750 = vmul.f32 %v5723, %v5678
        %v5751 = vmul.f32 %v5723, %v5679
        %v5752 = vmul.f32 %v5723, %v5680
        %v5753 = vmul.f32 %v5723, %v5681
        %v5754 = vmul.f32 %v5723, %v5682
        %v5755 = vmul.f32 %v5723, %v5683
        %v5756 = vmul.f32 %v5723, %v5684
        %v5757 = vsel %vm5687, %v5653, %v5725
        %v5758 = vsel %vm5688, %v5654, %v5726
        %v5759 = vsel %vm5689, %v5655, %v5727
        %v5760 = vsel %vm5690, %v5656, %v5728
        %v5761 = vsel %vm5691, %v5657, %v5729
        %v5762 = vsel %vm5692, %v5658, %v5730
        %v5763 = vsel %vm5693, %v5659, %v5731
        %v5764 = vsel %vm5694, %v5660, %v5732
        %v5765 = vsel %vm5695, %v5661, %v5733
        %v5766 = vsel %vm5696, %v5662, %v5734
        %v5767 = vsel %vm5697, %v5663, %v5735
        %v5768 = vsel %vm5698, %v5664, %v5736
        %v5769 = vsel %vm5699, %v5665, %v5737
        %v5770 = vsel %vm5700, %v5666, %v5738
        %v5771 = vsel %vm5701, %v5667, %v5739
        %v5772 = vsel %vm5702, %v5668, %v5740
        %v5773 = vsel %vm5703, %v5669, %v5741
        %v5774 = vsel %vm5704, %v5670, %v5742
        %v5775 = vsel %vm5705, %v5671, %v5743
        %v5776 = vsel %vm5706, %v5672, %v5744
        %v5777 = vsel %vm5707, %v5673, %v5745
        %v5778 = vsel %vm5708, %v5674, %v5746
        %v5779 = vsel %vm5709, %v5675, %v5747
        %v5780 = vsel %vm5710, %v5676, %v5748
        %v5781 = vsel %vm5711, %v5677, %v5749
        %v5782 = vsel %vm5712, %v5678, %v5750
        %v5783 = vsel %vm5713, %v5679, %v5751
        %v5784 = vsel %vm5714, %v5680, %v5752
        %v5785 = vsel %vm5715, %v5681, %v5753
        %v5786 = vsel %vm5716, %v5682, %v5754
        %v5787 = vsel %vm5717, %v5683, %v5755
        %v5788 = vsel %vm5718, %v5684, %v5756
        %5789 = vst.msk [vmem:[%s190] sm:$0xff] %vm1279, %v5757
        %5790 = vst.msk [vmem:[%s190 + $0x8] sm:$0xff] %vm1279, %v5758
        %5791 = vst.msk [vmem:[%s190 + $0x10] sm:$0xff] %vm1279, %v5759
        %5792 = vst.msk [vmem:[%s190 + $0x18] sm:$0xff] %vm1279, %v5760
        %5793 = vst.msk [vmem:[%s190 + $0x20] sm:$0xff] %vm1279, %v5761
        %5794 = vst.msk [vmem:[%s190 + $0x28] sm:$0xff] %vm1279, %v5762
        %5795 = vst.msk [vmem:[%s190 + $0x30] sm:$0xff] %vm1279, %v5763
        %5796 = vst.msk [vmem:[%s190 + $0x38] sm:$0xff] %vm1279, %v5764
        %5797 = vst.msk [vmem:[%s190 + $0x40] sm:$0xff] %vm1279, %v5765
        %5798 = vst.msk [vmem:[%s190 + $0x48] sm:$0xff] %vm1279, %v5766
        %5799 = vst.msk [vmem:[%s190 + $0x50] sm:$0xff] %vm1279, %v5767
        %5800 = vst.msk [vmem:[%s190 + $0x58] sm:$0xff] %vm1279, %v5768
        %5801 = vst.msk [vmem:[%s190 + $0x60] sm:$0xff] %vm1279, %v5769
        %5802 = vst.msk [vmem:[%s190 + $0x68] sm:$0xff] %vm1279, %v5770
        %5803 = vst.msk [vmem:[%s190 + $0x70] sm:$0xff] %vm1279, %v5771
        %5804 = vst.msk [vmem:[%s190 + $0x78] sm:$0xff] %vm1279, %v5772
        %5805 = vst.msk [vmem:[%s190 + $0x80] sm:$0xff] %vm1279, %v5773
        %5806 = vst.msk [vmem:[%s190 + $0x88] sm:$0xff] %vm1279, %v5774
        %5807 = vst.msk [vmem:[%s190 + $0x90] sm:$0xff] %vm1279, %v5775
        %5808 = vst.msk [vmem:[%s190 + $0x98] sm:$0xff] %vm1279, %v5776
        %5809 = vst.msk [vmem:[%s190 + $0xa0] sm:$0xff] %vm1279, %v5777
        %5810 = vst.msk [vmem:[%s190 + $0xa8] sm:$0xff] %vm1279, %v5778
        %5811 = vst.msk [vmem:[%s190 + $0xb0] sm:$0xff] %vm1279, %v5779
        %5812 = vst.msk [vmem:[%s190 + $0xb8] sm:$0xff] %vm1279, %v5780
        %5813 = vst.msk [vmem:[%s190 + $0xc0] sm:$0xff] %vm1279, %v5781
        %5814 = vst.msk [vmem:[%s190 + $0xc8] sm:$0xff] %vm1279, %v5782
        %5815 = vst.msk [vmem:[%s190 + $0xd0] sm:$0xff] %vm1279, %v5783
        %5816 = vst.msk [vmem:[%s190 + $0xd8] sm:$0xff] %vm1279, %v5784
        %5817 = vst.msk [vmem:[%s190 + $0xe0] sm:$0xff] %vm1279, %v5785
        %5818 = vst.msk [vmem:[%s190 + $0xe8] sm:$0xff] %vm1279, %v5786
        %5819 = vst.msk [vmem:[%s190 + $0xf0] sm:$0xff] %vm1279, %v5787
        %5820 = vst.msk [vmem:[%s190 + $0xf8] sm:$0xff] %vm1279, %v5788
        %s5821 = sand.u32 %s115, 1
        %s5822 = scalar_lea.sflag [#allocation3], %s5821
        %s5823 = sand.u32 %s115, 1
        %s5824 = smul.addr %s5823, 256
        %s5825 = scalar_lea.vmem [#allocation2], %s5824
        // Predicated region
        $region37: #{resblock_forward.1} parent=35 // pred_check
          %p5826 = pneg %p125
        $region38: #{resblock_forward.1} parent=35 // pred_check_branch
          %5828 = sbr.rel (%p5826) target = $region40
        $region39: #{resblock_forward.1} parent=35 // pred_region
          %s5830 = ssub.s32 4096, 4096
          %5831 = vsyncadd %s5822, %s5830
          %s5832 = smul.addr %s18, 32
          %s5833 = smul.addr %s5832, 128
          %s5834 = scalar_lea.hbm %s4, %s5833
          %s5835 = sshll.u32 %s5825, 4
          %s5836 = int_to_ptr.vmem [resolvable:$true] %s5835
          %5841 = dma.vmem_to_hbm [thread:$0]  %s5836, 4096, %s5834, %s5822, 128, 128, 8
        $region40: #{resblock_forward.1} parent=35 // pred_fallthru
          _
      $region36: #{resblock_forward.1} parent=5 // pred_fallthru
        _
      %p5842 = scmp.le.s32.totalorder 2, %s13
      // Predicated region
      $region41: #{resblock_forward.1} parent=5 // pred_check
        %p5843 = pneg %p5842
      $region42: #{resblock_forward.1} parent=5 // pred_check_branch
        %5845 = sbr.rel (%p5843) target = $region44
      $region43: #{resblock_forward.1} parent=5 // pred_region
        %s5846 = ssub.s32 %s13, 2
        // Predicated region
        $region45: #{resblock_forward.1} parent=43 // pred_check
          %p5847 = pneg %p131
        $region46: #{resblock_forward.1} parent=43 // pred_check_branch
          %5849 = sbr.rel (%p5847) target = $region48
        $region47: #{resblock_forward.1} parent=43 // pred_region
          %s5850 = sand.u32 %s116, 1
          %s5851 = scalar_lea.sflag [#allocation3], %s5850
          %s5852 = sand.u32 %s116, 1
          %s5853 = smul.addr %s5852, 256
          %s5854 = scalar_lea.vmem [#allocation2], %s5853
          %5855 = dma.done %s5851, 4096
        $region48: #{resblock_forward.1} parent=43 // pred_fallthru
          _
      $region44: #{resblock_forward.1} parent=5 // pred_fallthru
        _
    $region6: #{resblock_forward.1} parent=1 // loop_footer
      %s17 = sadd.s32 1, %s13
    $region7: #{resblock_forward.1} parent=1 // loop_footer_branch
      %12 = sbr.rel target = $region3
    $region8: #{resblock_forward.1} parent=1 // loop_exit
      _
    %5856 = vsyncpa [#allocation3], 1
    %s5857 = scalar_lea.sflag [#allocation3], 1
    %5858 = vsyncpa %s5857, 1

</llo_original>
